<compile_context>
chip_gen: v7x
topology: tpu7x:2x2x1
jax: 0.10.0
libtpu: 0.0.40
codegen_flags: <defaults>
</compile_context>

<pallas_src>
import jax
import jax.numpy as jnp
from jax.experimental import pallas as pl
from jax.experimental.pallas import tpu as pltpu

_BN_EPS = 1e-5
_C0, _C1, _C2, _C3 = 3, 8, 16, 32
_C0P = 8                       # conv1 input channels padded to 8 sublanes
_NCLASS = 10
_H, _W = 26, 26


# ------------------------------- dimensions -------------------------------- #

def _dims(tn):
    h1, w1 = _H, _W                       # 26 x 26
    h2, w2 = (h1 - 2) // 2, (w1 - 2) // 2  # 12 x 12
    h3, w3 = (h2 - 2) // 2, (w2 - 2) // 2  # 5 x 5
    return dict(
        h1=h1, w1=w1, h2=h2, w2=w2, h3=h3, w3=w3,
        sc1=tn * h1 * w1 - 2 * w1 - 2,
        sc2=tn * h2 * w2 - 2 * w2 - 2,
        sc3=tn * h3 * w3 - 2 * w3 - 2,
        sfc=(tn - 1) * h3 * w3 + 1,
    )


# --------------------------- host-built constants -------------------------- #

def _valid_mask(tn, hmap, wmap):
    """(1, Sc) f32 mask of columns that are real conv outputs (no junk)."""
    sc = tn * hmap * wmap - 2 * wmap - 2
    m = jnp.arange(sc, dtype=jnp.int32)
    r = m % (hmap * wmap)
    y = r // wmap
    x = r % wmap
    ok = (y < hmap - 2) & (x < wmap - 2)
    return ok.astype(jnp.float32).reshape(1, sc)


def _pool_sel(tn, hmap, wmap):
    """Block-diagonal stride-2 selection matrix for the fused 2x2 max-pool."""
    hp, wp = (hmap - 2) // 2, (wmap - 2) // 2
    rows = tn * hmap * wmap - 3 * wmap - 3      # number of hmx columns
    cols = tn * hp * wp
    dst = jnp.arange(cols, dtype=jnp.int32)
    b = dst // (hp * wp)
    r = dst % (hp * wp)
    yp = r // wp
    xp = r % wp
    src = b * hmap * wmap + 2 * yp * wmap + 2 * xp
    sel = jnp.arange(rows, dtype=jnp.int32)[:, None] == src[None, :]
    return sel.astype(jnp.bfloat16)


def _out_sel(tn, area):
    """(sfc, tn) selection matrix picking each image's base column."""
    sfc = (tn - 1) * area + 1
    sel = (jnp.arange(sfc, dtype=jnp.int32)[:, None]
           == (jnp.arange(tn, dtype=jnp.int32) * area)[None, :])
    return sel.astype(jnp.bfloat16)


def _pick_tile(n):
    if n <= 4:
        return n
    for t in (4, 3, 2):
        if n % t == 0:
            return t
    return 1


# --------------------------------- kernel ---------------------------------- #

def _make_kernel(tn):
    d = _dims(tn)
    w1m, w2m, w3m = d["w1"], d["w2"], d["w3"]
    sc1, sc2, sc3, sfc = d["sc1"], d["sc2"], d["sc3"], d["sfc"]
    nv1 = tn * (d["h1"] - 2) * (d["w1"] - 2)
    nv2 = tn * (d["h2"] - 2) * (d["w2"] - 2)
    nv3 = tn * (d["h3"] - 2) * (d["w3"] - 2)

    def bn_relu(acc, gb, mask, n_valid):
        # Single-pass batch statistics restricted to valid columns (f32).
        inv = 1.0 / float(n_valid)
        am = acc * mask
        mean = jnp.sum(am, axis=1, keepdims=True) * inv
        ex2 = jnp.sum(am * acc, axis=1, keepdims=True) * inv
        var = jnp.maximum(ex2 - mean * mean, 0.0)
        scale = gb[:, 0:1] * jax.lax.rsqrt(var + _BN_EPS)
        return jnp.maximum((acc - mean) * scale + gb[:, 1:2], 0.0)

    def pool(y, sel, wmap):
        # 2x2/2 max-pool: vertical/horizontal pair maxes (VPU, f32) + one
        # stride-2 block-diagonal selection matmul (MXU, bf16).
        sc = y.shape[1]
        v = jnp.maximum(y[:, :sc - wmap], y[:, wmap:])
        hmx = jnp.maximum(v[:, :-1], v[:, 1:])
        p = jnp.dot(hmx.astype(jnp.bfloat16), sel,
                    preferred_element_type=jnp.float32)
        return p.astype(jnp.bfloat16)

    def kernel(a1_ref, w1s_ref, gb1_ref, m1_ref, sel1_ref,
               w2s_ref, gb2_ref, m2_ref, sel2_ref,
               w3s_ref, gb3_ref, m3_ref,
               wfc_ref, bfc_ref, selo_ref,
               out_ref, st1_ref, st2_ref, st3_ref, stfc_ref):

        def stack(read, dst_ref, cin, wmap, sc):
            # K-stack 9 shifted slices into a (9*cin, sc) bf16 MXU operand.
            for k in range(9):
                sh = (k // 3) * wmap + (k % 3)
                dst_ref[k * cin:(k + 1) * cin, :] = read(sh, sc)

        # ---- conv1 + BN + ReLU + maxpool --------------------------------- #
        stack(lambda sh, sc: a1_ref[:, sh:sh + sc], st1_ref, _C0P, w1m, sc1)
        acc1 = jnp.dot(w1s_ref[...], st1_ref[...],
                       preferred_element_type=jnp.float32)
        y1 = bn_relu(acc1, gb1_ref[...], m1_ref[...], nv1)
        p1 = pool(y1, sel1_ref[...], w1m)                 # (8, tn*144) bf16

        # ---- conv2 + BN + ReLU + maxpool --------------------------------- #
        stack(lambda sh, sc: p1[:, sh:sh + sc], st2_ref, _C1, w2m, sc2)
        acc2 = jnp.dot(w2s_ref[...], st2_ref[...],
                       preferred_element_type=jnp.float32)
        y2 = bn_relu(acc2, gb2_ref[...], m2_ref[...], nv2)
        p2 = pool(y2, sel2_ref[...], w2m)                 # (16, tn*25) bf16

        # ---- conv3 + BN + ReLU ------------------------------------------- #
        stack(lambda sh, sc: p2[:, sh:sh + sc], st3_ref, _C2, w3m, sc3)
        acc3 = jnp.dot(w3s_ref[...], st3_ref[...],
                       preferred_element_type=jnp.float32)
        y3 = bn_relu(acc3, gb3_ref[...], m3_ref[...], nv3).astype(jnp.bfloat16)

        # ---- Linear(288, 10) as a 3x3 contraction + batch-column select --- #
        stack(lambda sh, sc: y3[:, sh:sh + sc], stfc_ref, _C3, w3m, sfc)
        f = jnp.dot(stfc_ref[...], selo_ref[...],
                    preferred_element_type=jnp.float32).astype(jnp.bfloat16)
        z = jnp.dot(wfc_ref[...], f, preferred_element_type=jnp.float32)
        out_ref[...] = z + bfc_ref[...]                   # single dense store

    return kernel, d


# -------------------------------- wrapper ----------------------------------- #

def net_forward(x_nchw, params):
    nb, c0, h, w = x_nchw.shape
    assert (c0, h, w) == (_C0, _H, _W), "Linear(288) requires 3x26x26 inputs"

    tn = _pick_tile(nb)
    g = nb // tn
    kernel, d = _make_kernel(tn)
    sc1, sc2, sc3, sfc = d["sc1"], d["sc2"], d["sc3"], d["sfc"]
    s1_cols = tn * _H * _W

    (cw1, _b1, g1, be1) = params["conv1"]
    (cw2, _b2, g2, be2) = params["conv2"]
    (cw3, _b3, g3, be3) = params["conv3"]
    wfc, bfc = params["fc"]
    # Conv biases are intentionally unused: a per-channel constant cancels
    # exactly under batch-statistic BatchNorm.

    # Lane-dense per-tile input (G, C0_pad, tn*H*W) in bf16.
    # TODO(synk): this host relayout materializes an extra copy of x in HBM;
    # folding it into the kernel needs an in-kernel transpose/reshape across
    # the tiled dims, which is left out for lowering robustness.
    a1 = x_nchw.reshape(g, tn, _C0, _H, _W)
    a1 = jnp.transpose(a1, (0, 2, 1, 3, 4)).reshape(g, _C0, s1_cols)
    a1 = jnp.pad(a1, ((0, 0), (0, _C0P - _C0), (0, 0))).astype(jnp.bfloat16)

    def conv_w(wt, cin_pad=None):          # (Cout,Cin,3,3) -> (Cout, 9*Cin) bf16
        co, ci = wt.shape[0], wt.shape[1]
        wk = jnp.transpose(wt, (0, 2, 3, 1))          # (co, ky, kx, ci)
        if cin_pad is not None and cin_pad > ci:
            wk = jnp.pad(wk, ((0, 0), (0, 0), (0, 0), (0, cin_pad - ci)))
            ci = cin_pad
        return wk.reshape(co, 9 * ci).astype(jnp.bfloat16)

    def gb(gamma, beta):                   # (Cout, 2): col 0 = gamma, 1 = beta
        return jnp.stack([gamma, beta], axis=1).astype(jnp.float32)

    # FC weight: torch flatten order (c, y, x) -> stacked order (k=y*3+x, c).
    wfc_s = jnp.transpose(wfc.reshape(_NCLASS, _C3, 3, 3), (0, 2, 3, 1))
    wfc_s = wfc_s.reshape(_NCLASS, 9 * _C3).astype(jnp.bfloat16)

    inputs = (
        a1,
        conv_w(cw1, _C0P), gb(g1, be1), _valid_mask(tn, _H, _W), _pool_sel(tn, _H, _W),
        conv_w(cw2),       gb(g2, be2), _valid_mask(tn, 12, 12), _pool_sel(tn, 12, 12),
        conv_w(cw3),       gb(g3, be3), _valid_mask(tn, 5, 5),
        wfc_s, bfc.reshape(_NCLASS, 1).astype(jnp.float32), _out_sel(tn, 25),
    )

    def const_spec(arr):                   # full block, constant index map
        nd = arr.ndim
        return pl.BlockSpec(arr.shape, lambda i, _nd=nd: (0,) * _nd)

    in_specs = [pl.BlockSpec((None, _C0P, s1_cols), lambda i: (i, 0, 0))]
    in_specs += [const_spec(a) for a in inputs[1:]]

    z = pl.pallas_call(
        kernel,
        out_shape=jax.ShapeDtypeStruct((g, _NCLASS, tn), jnp.float32),
        grid=(g,),
        in_specs=in_specs,
        out_specs=pl.BlockSpec((None, _NCLASS, tn), lambda i: (i, 0, 0)),
        scratch_shapes=[
            pltpu.VMEM((9 * _C0P, sc1), jnp.bfloat16),   # conv1 K-stack staging
            pltpu.VMEM((9 * _C1, sc2), jnp.bfloat16),    # conv2 K-stack staging
            pltpu.VMEM((9 * _C2, sc3), jnp.bfloat16),    # conv3 K-stack staging
            pltpu.VMEM((9 * _C3, sfc), jnp.bfloat16),    # FC K-stack staging
        ],
        compiler_params=pltpu.CompilerParams(
            dimension_semantics=("parallel",)),
    )(*inputs)

    return jnp.transpose(z, (0, 2, 1)).reshape(nb, _NCLASS)


# ------------------------- deterministic parameters ------------------------ #

def init_params(key):
    def conv_block(k, cin, cout):
        ks = jax.random.split(k, 4)
        wt = 0.1 * jax.random.normal(ks[0], (cout, cin, 3, 3), jnp.float32)
        b = 0.1 * jax.random.normal(ks[1], (cout,), jnp.float32)
        gamma = 1.0 + 0.1 * jax.random.normal(ks[2], (cout,), jnp.float32)
        beta = 0.1 * jax.random.normal(ks[3], (cout,), jnp.float32)
        return (wt, b, gamma, beta)

    k = jax.random.split(key, 5)
    return {
        "conv1": conv_block(k[0], _C0, _C1),
        "conv2": conv_block(k[1], _C1, _C2),
        "conv3": conv_block(k[2], _C2, _C3),
        "fc": (0.05 * jax.random.normal(k[3], (_NCLASS, 288), jnp.float32),
               0.05 * jax.random.normal(k[4], (_NCLASS,), jnp.float32)),
    }


if __name__ == "__main__":
    key = jax.random.PRNGKey(0)
    kx, kp = jax.random.split(key)
    # Smallest input consistent with Linear(288, 10): (N=2, C=3, H=26, W=26).
    x = jax.random.normal(kx, (2, 3, 26, 26), jnp.float32)
    params = init_params(kp)

    fwd = jax.jit(lambda xx: net_forward(xx, params))
    out = jax.block_until_ready(fwd(x))

    assert out.shape == (2, 10), out.shape
    assert bool(jnp.all(jnp.isfinite(out)))
    print("KERNEL_OK")
</pallas_src>

<mosaic_0001>
module attributes {stable_mosaic.version = 11 : i64} {
  func.func @kernel(%arg0: i32, %arg1: memref<1x8x1352xbf16, #tpu.memory_space<vmem>>, %arg2: memref<8x72xbf16, #tpu.memory_space<vmem>>, %arg3: memref<8x2xf32, #tpu.memory_space<vmem>>, %arg4: memref<1x1298xf32, #tpu.memory_space<vmem>>, %arg5: memref<1271x288xbf16, #tpu.memory_space<vmem>>, %arg6: memref<16x72xbf16, #tpu.memory_space<vmem>>, %arg7: memref<16x2xf32, #tpu.memory_space<vmem>>, %arg8: memref<1x262xf32, #tpu.memory_space<vmem>>, %arg9: memref<249x50xbf16, #tpu.memory_space<vmem>>, %arg10: memref<32x144xbf16, #tpu.memory_space<vmem>>, %arg11: memref<32x2xf32, #tpu.memory_space<vmem>>, %arg12: memref<1x38xf32, #tpu.memory_space<vmem>>, %arg13: memref<10x288xbf16, #tpu.memory_space<vmem>>, %arg14: memref<10x1xf32, #tpu.memory_space<vmem>>, %arg15: memref<26x2xbf16, #tpu.memory_space<vmem>>, %arg16: memref<1x10x2xf32, #tpu.memory_space<vmem>>, %arg17: memref<72x1298xbf16, #tpu.memory_space<vmem>>, %arg18: memref<72x262xbf16, #tpu.memory_space<vmem>>, %arg19: memref<144x38xbf16, #tpu.memory_space<vmem>>, %arg20: memref<288x26xbf16, #tpu.memory_space<vmem>>) attributes {dimension_semantics = [#tpu.dimension_semantics<parallel>], iteration_bounds = array<i64: 1>, scalar_prefetch = 0 : i64, scratch_operands = 4 : i64, tpu.core_type = #tpu.core_type<tc>, window_params = [{transform_indices = @transform_0, window_bounds = array<i64: 1, 8, 1352>}, {pipeline_mode = #tpu.pipeline_mode<synchronous>, transform_indices = @transform_1, window_bounds = array<i64: 8, 72>}, {pipeline_mode = #tpu.pipeline_mode<synchronous>, transform_indices = @transform_2, window_bounds = array<i64: 8, 2>}, {pipeline_mode = #tpu.pipeline_mode<synchronous>, transform_indices = @transform_3, window_bounds = array<i64: 1, 1298>}, {pipeline_mode = #tpu.pipeline_mode<synchronous>, transform_indices = @transform_4, window_bounds = array<i64: 1271, 288>}, {pipeline_mode = #tpu.pipeline_mode<synchronous>, transform_indices = @transform_5, window_bounds = array<i64: 16, 72>}, {pipeline_mode = #tpu.pipeline_mode<synchronous>, transform_indices = @transform_6, window_bounds = array<i64: 16, 2>}, {pipeline_mode = #tpu.pipeline_mode<synchronous>, transform_indices = @transform_7, window_bounds = array<i64: 1, 262>}, {pipeline_mode = #tpu.pipeline_mode<synchronous>, transform_indices = @transform_8, window_bounds = array<i64: 249, 50>}, {pipeline_mode = #tpu.pipeline_mode<synchronous>, transform_indices = @transform_9, window_bounds = array<i64: 32, 144>}, {pipeline_mode = #tpu.pipeline_mode<synchronous>, transform_indices = @transform_10, window_bounds = array<i64: 32, 2>}, {pipeline_mode = #tpu.pipeline_mode<synchronous>, transform_indices = @transform_11, window_bounds = array<i64: 1, 38>}, {pipeline_mode = #tpu.pipeline_mode<synchronous>, transform_indices = @transform_12, window_bounds = array<i64: 10, 288>}, {pipeline_mode = #tpu.pipeline_mode<synchronous>, transform_indices = @transform_13, window_bounds = array<i64: 10, 1>}, {pipeline_mode = #tpu.pipeline_mode<synchronous>, transform_indices = @transform_14, window_bounds = array<i64: 26, 2>}, {transform_indices = @transform_15, window_bounds = array<i64: 1, 10, 2>}]} {
    %c0 = arith.constant 0 : index
    %c0_0 = arith.constant 0 : index
    %c0_1 = arith.constant 0 : index
    %0 = vector.load %arg1[%c0, %c0_0, %c0_1] : memref<1x8x1352xbf16, #tpu.memory_space<vmem>>, vector<1x8x1298xbf16>
    %1 = vector.shape_cast %0 : vector<1x8x1298xbf16> to vector<8x1298xbf16>
    %c0_2 = arith.constant 0 : index
    %c0_3 = arith.constant 0 : index
    %2 = vector.load %arg17[%c0_2, %c0_3] : memref<72x1298xbf16, #tpu.memory_space<vmem>>, vector<8x1298xbf16>
    tpu.vector_store %arg17[%c0_2, %c0_3], %1 {strides = array<i32>} : memref<72x1298xbf16, #tpu.memory_space<vmem>>, vector<8x1298xbf16>,
    %c0_4 = arith.constant 0 : index
    %c0_5 = arith.constant 0 : index
    %c1 = arith.constant 1 : index
    %3 = vector.load %arg1[%c0_4, %c0_5, %c1] : memref<1x8x1352xbf16, #tpu.memory_space<vmem>>, vector<1x8x1298xbf16>
    %4 = vector.shape_cast %3 : vector<1x8x1298xbf16> to vector<8x1298xbf16>
    %c8 = arith.constant 8 : index
    %c0_6 = arith.constant 0 : index
    %5 = vector.load %arg17[%c8, %c0_6] : memref<72x1298xbf16, #tpu.memory_space<vmem>>, vector<8x1298xbf16>
    tpu.vector_store %arg17[%c8, %c0_6], %4 {strides = array<i32>} : memref<72x1298xbf16, #tpu.memory_space<vmem>>, vector<8x1298xbf16>,
    %c0_7 = arith.constant 0 : index
    %c0_8 = arith.constant 0 : index
    %c2 = arith.constant 2 : index
    %6 = vector.load %arg1[%c0_7, %c0_8, %c2] : memref<1x8x1352xbf16, #tpu.memory_space<vmem>>, vector<1x8x1298xbf16>
    %7 = vector.shape_cast %6 : vector<1x8x1298xbf16> to vector<8x1298xbf16>
    %c16 = arith.constant 16 : index
    %c0_9 = arith.constant 0 : index
    %8 = vector.load %arg17[%c16, %c0_9] : memref<72x1298xbf16, #tpu.memory_space<vmem>>, vector<8x1298xbf16>
    tpu.vector_store %arg17[%c16, %c0_9], %7 {strides = array<i32>} : memref<72x1298xbf16, #tpu.memory_space<vmem>>, vector<8x1298xbf16>,
    %c0_10 = arith.constant 0 : index
    %c0_11 = arith.constant 0 : index
    %c26 = arith.constant 26 : index
    %9 = vector.load %arg1[%c0_10, %c0_11, %c26] : memref<1x8x1352xbf16, #tpu.memory_space<vmem>>, vector<1x8x1298xbf16>
    %10 = vector.shape_cast %9 : vector<1x8x1298xbf16> to vector<8x1298xbf16>
    %c24 = arith.constant 24 : index
    %c0_12 = arith.constant 0 : index
    %11 = vector.load %arg17[%c24, %c0_12] : memref<72x1298xbf16, #tpu.memory_space<vmem>>, vector<8x1298xbf16>
    tpu.vector_store %arg17[%c24, %c0_12], %10 {strides = array<i32>} : memref<72x1298xbf16, #tpu.memory_space<vmem>>, vector<8x1298xbf16>,
    %c0_13 = arith.constant 0 : index
    %c0_14 = arith.constant 0 : index
    %c27 = arith.constant 27 : index
    %12 = vector.load %arg1[%c0_13, %c0_14, %c27] : memref<1x8x1352xbf16, #tpu.memory_space<vmem>>, vector<1x8x1298xbf16>
    %13 = vector.shape_cast %12 : vector<1x8x1298xbf16> to vector<8x1298xbf16>
    %c32 = arith.constant 32 : index
    %c0_15 = arith.constant 0 : index
    %14 = vector.load %arg17[%c32, %c0_15] : memref<72x1298xbf16, #tpu.memory_space<vmem>>, vector<8x1298xbf16>
    tpu.vector_store %arg17[%c32, %c0_15], %13 {strides = array<i32>} : memref<72x1298xbf16, #tpu.memory_space<vmem>>, vector<8x1298xbf16>,
    %c0_16 = arith.constant 0 : index
    %c0_17 = arith.constant 0 : index
    %c28 = arith.constant 28 : index
    %15 = vector.load %arg1[%c0_16, %c0_17, %c28] : memref<1x8x1352xbf16, #tpu.memory_space<vmem>>, vector<1x8x1298xbf16>
    %16 = vector.shape_cast %15 : vector<1x8x1298xbf16> to vector<8x1298xbf16>
    %c40 = arith.constant 40 : index
    %c0_18 = arith.constant 0 : index
    %17 = vector.load %arg17[%c40, %c0_18] : memref<72x1298xbf16, #tpu.memory_space<vmem>>, vector<8x1298xbf16>
    tpu.vector_store %arg17[%c40, %c0_18], %16 {strides = array<i32>} : memref<72x1298xbf16, #tpu.memory_space<vmem>>, vector<8x1298xbf16>,
    %c0_19 = arith.constant 0 : index
    %c0_20 = arith.constant 0 : index
    %c52 = arith.constant 52 : index
    %18 = vector.load %arg1[%c0_19, %c0_20, %c52] : memref<1x8x1352xbf16, #tpu.memory_space<vmem>>, vector<1x8x1298xbf16>
    %19 = vector.shape_cast %18 : vector<1x8x1298xbf16> to vector<8x1298xbf16>
    %c48 = arith.constant 48 : index
    %c0_21 = arith.constant 0 : index
    %20 = vector.load %arg17[%c48, %c0_21] : memref<72x1298xbf16, #tpu.memory_space<vmem>>, vector<8x1298xbf16>
    tpu.vector_store %arg17[%c48, %c0_21], %19 {strides = array<i32>} : memref<72x1298xbf16, #tpu.memory_space<vmem>>, vector<8x1298xbf16>,
    %c0_22 = arith.constant 0 : index
    %c0_23 = arith.constant 0 : index
    %c53 = arith.constant 53 : index
    %21 = vector.load %arg1[%c0_22, %c0_23, %c53] : memref<1x8x1352xbf16, #tpu.memory_space<vmem>>, vector<1x8x1298xbf16>
    %22 = vector.shape_cast %21 : vector<1x8x1298xbf16> to vector<8x1298xbf16>
    %c56 = arith.constant 56 : index
    %c0_24 = arith.constant 0 : index
    %23 = vector.load %arg17[%c56, %c0_24] : memref<72x1298xbf16, #tpu.memory_space<vmem>>, vector<8x1298xbf16>
    tpu.vector_store %arg17[%c56, %c0_24], %22 {strides = array<i32>} : memref<72x1298xbf16, #tpu.memory_space<vmem>>, vector<8x1298xbf16>,
    %c0_25 = arith.constant 0 : index
    %c0_26 = arith.constant 0 : index
    %c54 = arith.constant 54 : index
    %24 = vector.load %arg1[%c0_25, %c0_26, %c54] : memref<1x8x1352xbf16, #tpu.memory_space<vmem>>, vector<1x8x1298xbf16>
    %25 = vector.shape_cast %24 : vector<1x8x1298xbf16> to vector<8x1298xbf16>
    %c64 = arith.constant 64 : index
    %c0_27 = arith.constant 0 : index
    %26 = vector.load %arg17[%c64, %c0_27] : memref<72x1298xbf16, #tpu.memory_space<vmem>>, vector<8x1298xbf16>
    tpu.vector_store %arg17[%c64, %c0_27], %25 {strides = array<i32>} : memref<72x1298xbf16, #tpu.memory_space<vmem>>, vector<8x1298xbf16>,
    %c0_28 = arith.constant 0 : index
    %c0_29 = arith.constant 0 : index
    %27 = vector.load %arg2[%c0_28, %c0_29] : memref<8x72xbf16, #tpu.memory_space<vmem>>, vector<8x72xbf16>
    %c0_30 = arith.constant 0 : index
    %c0_31 = arith.constant 0 : index
    %28 = vector.load %arg17[%c0_30, %c0_31] : memref<72x1298xbf16, #tpu.memory_space<vmem>>, vector<72x1298xbf16>
    %cst = arith.constant dense<0.000000e+00> : vector<8x1298xf32>
    %29 = tpu.matmul %27, %28, %cst {dimension_numbers = #tpu.dot_dimension_numbers<[1], [0], [0], [1], [0, 0, 1, 1], [], []>} : vector<8x72xbf16>, vector<72x1298xbf16>, vector<8x1298xf32> -> vector<8x1298xf32>
    %c0_32 = arith.constant 0 : index
    %c0_33 = arith.constant 0 : index
    %30 = vector.load %arg3[%c0_32, %c0_33] : memref<8x2xf32, #tpu.memory_space<vmem>>, vector<8x2xf32>
    %c0_34 = arith.constant 0 : index
    %c0_35 = arith.constant 0 : index
    %31 = vector.load %arg4[%c0_34, %c0_35] : memref<1x1298xf32, #tpu.memory_space<vmem>>, vector<1x1298xf32>
    %32 = vector.broadcast %31 : vector<1x1298xf32> to vector<8x1298xf32>
    %33 = arith.mulf %29, %32 : vector<8x1298xf32>
    %cst_36 = arith.constant dense<0.000000e+00> : vector<8xf32>
    %34 = vector.multi_reduction <add>, %33, %cst_36 [1] : vector<8x1298xf32> to vector<8xf32>
    %35 = vector.shape_cast %34 : vector<8xf32> to vector<8x1xf32>
    %cst_37 = arith.constant 8.68055562E-4 : f32
    %36 = vector.broadcast %cst_37 : f32 to vector<8x1xf32>
    %37 = arith.mulf %35, %36 : vector<8x1xf32>
    %38 = arith.mulf %33, %29 : vector<8x1298xf32>
    %cst_38 = arith.constant dense<0.000000e+00> : vector<8xf32>
    %39 = vector.multi_reduction <add>, %38, %cst_38 [1] : vector<8x1298xf32> to vector<8xf32>
    %40 = vector.shape_cast %39 : vector<8xf32> to vector<8x1xf32>
    %cst_39 = arith.constant 8.68055562E-4 : f32
    %41 = vector.broadcast %cst_39 : f32 to vector<8x1xf32>
    %42 = arith.mulf %40, %41 : vector<8x1xf32>
    %43 = arith.mulf %37, %37 : vector<8x1xf32>
    %44 = arith.subf %42, %43 : vector<8x1xf32>
    %cst_40 = arith.constant 0.000000e+00 : f32
    %45 = vector.broadcast %cst_40 : f32 to vector<8x1xf32>
    %46 = arith.maximumf %44, %45 : vector<8x1xf32>
    %47 = vector.extract_strided_slice %30 {offsets = [0, 0], sizes = [8, 1], strides = [1, 1]} : vector<8x2xf32> to vector<8x1xf32>
    %cst_41 = arith.constant 9.99999974E-6 : f32
    %48 = vector.broadcast %cst_41 : f32 to vector<8x1xf32>
    %49 = arith.addf %46, %48 : vector<8x1xf32>
    %50 = math.rsqrt %49 : vector<8x1xf32>
    %51 = arith.mulf %47, %50 : vector<8x1xf32>
    %52 = vector.broadcast %37 : vector<8x1xf32> to vector<8x1298xf32>
    %53 = arith.subf %29, %52 : vector<8x1298xf32>
    %54 = vector.broadcast %51 : vector<8x1xf32> to vector<8x1298xf32>
    %55 = arith.mulf %53, %54 : vector<8x1298xf32>
    %56 = vector.extract_strided_slice %30 {offsets = [0, 1], sizes = [8, 1], strides = [1, 1]} : vector<8x2xf32> to vector<8x1xf32>
    %57 = vector.broadcast %56 : vector<8x1xf32> to vector<8x1298xf32>
    %58 = arith.addf %55, %57 : vector<8x1298xf32>
    %cst_42 = arith.constant 0.000000e+00 : f32
    %59 = vector.broadcast %cst_42 : f32 to vector<8x1298xf32>
    %60 = arith.maximumf %58, %59 : vector<8x1298xf32>
    %c0_43 = arith.constant 0 : index
    %c0_44 = arith.constant 0 : index
    %61 = vector.load %arg5[%c0_43, %c0_44] : memref<1271x288xbf16, #tpu.memory_space<vmem>>, vector<1271x288xbf16>
    %62 = vector.extract_strided_slice %60 {offsets = [0, 0], sizes = [8, 1272], strides = [1, 1]} : vector<8x1298xf32> to vector<8x1272xf32>
    %63 = vector.extract_strided_slice %60 {offsets = [0, 26], sizes = [8, 1272], strides = [1, 1]} : vector<8x1298xf32> to vector<8x1272xf32>
    %64 = arith.maximumf %62, %63 : vector<8x1272xf32>
    %65 = vector.extract_strided_slice %64 {offsets = [0, 0], sizes = [8, 1271], strides = [1, 1]} : vector<8x1272xf32> to vector<8x1271xf32>
    %66 = vector.extract_strided_slice %64 {offsets = [0, 1], sizes = [8, 1271], strides = [1, 1]} : vector<8x1272xf32> to vector<8x1271xf32>
    %67 = arith.maximumf %65, %66 : vector<8x1271xf32>
    %68 = arith.truncf %67 : vector<8x1271xf32> to vector<8x1271xbf16>
    %cst_45 = arith.constant dense<0.000000e+00> : vector<8x288xf32>
    %69 = tpu.matmul %68, %61, %cst_45 {dimension_numbers = #tpu.dot_dimension_numbers<[1], [0], [0], [1], [0, 0, 1, 1], [], []>} : vector<8x1271xbf16>, vector<1271x288xbf16>, vector<8x288xf32> -> vector<8x288xf32>
    %70 = arith.truncf %69 : vector<8x288xf32> to vector<8x288xbf16>
    %71 = vector.extract_strided_slice %70 {offsets = [0, 0], sizes = [8, 262], strides = [1, 1]} : vector<8x288xbf16> to vector<8x262xbf16>
    %c0_46 = arith.constant 0 : index
    %c0_47 = arith.constant 0 : index
    %72 = vector.load %arg18[%c0_46, %c0_47] : memref<72x262xbf16, #tpu.memory_space<vmem>>, vector<8x262xbf16>
    tpu.vector_store %arg18[%c0_46, %c0_47], %71 {strides = array<i32>} : memref<72x262xbf16, #tpu.memory_space<vmem>>, vector<8x262xbf16>,
    %73 = vector.extract_strided_slice %70 {offsets = [0, 1], sizes = [8, 262], strides = [1, 1]} : vector<8x288xbf16> to vector<8x262xbf16>
    %c8_48 = arith.constant 8 : index
    %c0_49 = arith.constant 0 : index
    %74 = vector.load %arg18[%c8_48, %c0_49] : memref<72x262xbf16, #tpu.memory_space<vmem>>, vector<8x262xbf16>
    tpu.vector_store %arg18[%c8_48, %c0_49], %73 {strides = array<i32>} : memref<72x262xbf16, #tpu.memory_space<vmem>>, vector<8x262xbf16>,
    %75 = vector.extract_strided_slice %70 {offsets = [0, 2], sizes = [8, 262], strides = [1, 1]} : vector<8x288xbf16> to vector<8x262xbf16>
    %c16_50 = arith.constant 16 : index
    %c0_51 = arith.constant 0 : index
    %76 = vector.load %arg18[%c16_50, %c0_51] : memref<72x262xbf16, #tpu.memory_space<vmem>>, vector<8x262xbf16>
    tpu.vector_store %arg18[%c16_50, %c0_51], %75 {strides = array<i32>} : memref<72x262xbf16, #tpu.memory_space<vmem>>, vector<8x262xbf16>,
    %77 = vector.extract_strided_slice %70 {offsets = [0, 12], sizes = [8, 262], strides = [1, 1]} : vector<8x288xbf16> to vector<8x262xbf16>
    %c24_52 = arith.constant 24 : index
    %c0_53 = arith.constant 0 : index
    %78 = vector.load %arg18[%c24_52, %c0_53] : memref<72x262xbf16, #tpu.memory_space<vmem>>, vector<8x262xbf16>
    tpu.vector_store %arg18[%c24_52, %c0_53], %77 {strides = array<i32>} : memref<72x262xbf16, #tpu.memory_space<vmem>>, vector<8x262xbf16>,
    %79 = vector.extract_strided_slice %70 {offsets = [0, 13], sizes = [8, 262], strides = [1, 1]} : vector<8x288xbf16> to vector<8x262xbf16>
    %c32_54 = arith.constant 32 : index
    %c0_55 = arith.constant 0 : index
    %80 = vector.load %arg18[%c32_54, %c0_55] : memref<72x262xbf16, #tpu.memory_space<vmem>>, vector<8x262xbf16>
    tpu.vector_store %arg18[%c32_54, %c0_55], %79 {strides = array<i32>} : memref<72x262xbf16, #tpu.memory_space<vmem>>, vector<8x262xbf16>,
    %81 = vector.extract_strided_slice %70 {offsets = [0, 14], sizes = [8, 262], strides = [1, 1]} : vector<8x288xbf16> to vector<8x262xbf16>
    %c40_56 = arith.constant 40 : index
    %c0_57 = arith.constant 0 : index
    %82 = vector.load %arg18[%c40_56, %c0_57] : memref<72x262xbf16, #tpu.memory_space<vmem>>, vector<8x262xbf16>
    tpu.vector_store %arg18[%c40_56, %c0_57], %81 {strides = array<i32>} : memref<72x262xbf16, #tpu.memory_space<vmem>>, vector<8x262xbf16>,
    %83 = vector.extract_strided_slice %70 {offsets = [0, 24], sizes = [8, 262], strides = [1, 1]} : vector<8x288xbf16> to vector<8x262xbf16>
    %c48_58 = arith.constant 48 : index
    %c0_59 = arith.constant 0 : index
    %84 = vector.load %arg18[%c48_58, %c0_59] : memref<72x262xbf16, #tpu.memory_space<vmem>>, vector<8x262xbf16>
    tpu.vector_store %arg18[%c48_58, %c0_59], %83 {strides = array<i32>} : memref<72x262xbf16, #tpu.memory_space<vmem>>, vector<8x262xbf16>,
    %85 = vector.extract_strided_slice %70 {offsets = [0, 25], sizes = [8, 262], strides = [1, 1]} : vector<8x288xbf16> to vector<8x262xbf16>
    %c56_60 = arith.constant 56 : index
    %c0_61 = arith.constant 0 : index
    %86 = vector.load %arg18[%c56_60, %c0_61] : memref<72x262xbf16, #tpu.memory_space<vmem>>, vector<8x262xbf16>
    tpu.vector_store %arg18[%c56_60, %c0_61], %85 {strides = array<i32>} : memref<72x262xbf16, #tpu.memory_space<vmem>>, vector<8x262xbf16>,
    %87 = vector.extract_strided_slice %70 {offsets = [0, 26], sizes = [8, 262], strides = [1, 1]} : vector<8x288xbf16> to vector<8x262xbf16>
    %c64_62 = arith.constant 64 : index
    %c0_63 = arith.constant 0 : index
    %88 = vector.load %arg18[%c64_62, %c0_63] : memref<72x262xbf16, #tpu.memory_space<vmem>>, vector<8x262xbf16>
    tpu.vector_store %arg18[%c64_62, %c0_63], %87 {strides = array<i32>} : memref<72x262xbf16, #tpu.memory_space<vmem>>, vector<8x262xbf16>,
    %c0_64 = arith.constant 0 : index
    %c0_65 = arith.constant 0 : index
    %89 = vector.load %arg6[%c0_64, %c0_65] : memref<16x72xbf16, #tpu.memory_space<vmem>>, vector<16x72xbf16>
    %c0_66 = arith.constant 0 : index
    %c0_67 = arith.constant 0 : index
    %90 = vector.load %arg18[%c0_66, %c0_67] : memref<72x262xbf16, #tpu.memory_space<vmem>>, vector<72x262xbf16>
    %cst_68 = arith.constant dense<0.000000e+00> : vector<16x262xf32>
    %91 = tpu.matmul %89, %90, %cst_68 {dimension_numbers = #tpu.dot_dimension_numbers<[1], [0], [0], [1], [0, 0, 1, 1], [], []>} : vector<16x72xbf16>, vector<72x262xbf16>, vector<16x262xf32> -> vector<16x262xf32>
    %c0_69 = arith.constant 0 : index
    %c0_70 = arith.constant 0 : index
    %92 = vector.load %arg7[%c0_69, %c0_70] : memref<16x2xf32, #tpu.memory_space<vmem>>, vector<16x2xf32>
    %c0_71 = arith.constant 0 : index
    %c0_72 = arith.constant 0 : index
    %93 = vector.load %arg8[%c0_71, %c0_72] : memref<1x262xf32, #tpu.memory_space<vmem>>, vector<1x262xf32>
    %94 = vector.broadcast %93 : vector<1x262xf32> to vector<16x262xf32>
    %95 = arith.mulf %91, %94 : vector<16x262xf32>
    %cst_73 = arith.constant dense<0.000000e+00> : vector<16xf32>
    %96 = vector.multi_reduction <add>, %95, %cst_73 [1] : vector<16x262xf32> to vector<16xf32>
    %97 = vector.shape_cast %96 : vector<16xf32> to vector<16x1xf32>
    %cst_74 = arith.constant 5.000000e-03 : f32
    %98 = vector.broadcast %cst_74 : f32 to vector<16x1xf32>
    %99 = arith.mulf %97, %98 : vector<16x1xf32>
    %100 = arith.mulf %95, %91 : vector<16x262xf32>
    %cst_75 = arith.constant dense<0.000000e+00> : vector<16xf32>
    %101 = vector.multi_reduction <add>, %100, %cst_75 [1] : vector<16x262xf32> to vector<16xf32>
    %102 = vector.shape_cast %101 : vector<16xf32> to vector<16x1xf32>
    %cst_76 = arith.constant 5.000000e-03 : f32
    %103 = vector.broadcast %cst_76 : f32 to vector<16x1xf32>
    %104 = arith.mulf %102, %103 : vector<16x1xf32>
    %105 = arith.mulf %99, %99 : vector<16x1xf32>
    %106 = arith.subf %104, %105 : vector<16x1xf32>
    %cst_77 = arith.constant 0.000000e+00 : f32
    %107 = vector.broadcast %cst_77 : f32 to vector<16x1xf32>
    %108 = arith.maximumf %106, %107 : vector<16x1xf32>
    %109 = vector.extract_strided_slice %92 {offsets = [0, 0], sizes = [16, 1], strides = [1, 1]} : vector<16x2xf32> to vector<16x1xf32>
    %cst_78 = arith.constant 9.99999974E-6 : f32
    %110 = vector.broadcast %cst_78 : f32 to vector<16x1xf32>
    %111 = arith.addf %108, %110 : vector<16x1xf32>
    %112 = math.rsqrt %111 : vector<16x1xf32>
    %113 = arith.mulf %109, %112 : vector<16x1xf32>
    %114 = vector.broadcast %99 : vector<16x1xf32> to vector<16x262xf32>
    %115 = arith.subf %91, %114 : vector<16x262xf32>
    %116 = vector.broadcast %113 : vector<16x1xf32> to vector<16x262xf32>
    %117 = arith.mulf %115, %116 : vector<16x262xf32>
    %118 = vector.extract_strided_slice %92 {offsets = [0, 1], sizes = [16, 1], strides = [1, 1]} : vector<16x2xf32> to vector<16x1xf32>
    %119 = vector.broadcast %118 : vector<16x1xf32> to vector<16x262xf32>
    %120 = arith.addf %117, %119 : vector<16x262xf32>
    %cst_79 = arith.constant 0.000000e+00 : f32
    %121 = vector.broadcast %cst_79 : f32 to vector<16x262xf32>
    %122 = arith.maximumf %120, %121 : vector<16x262xf32>
    %c0_80 = arith.constant 0 : index
    %c0_81 = arith.constant 0 : index
    %123 = vector.load %arg9[%c0_80, %c0_81] : memref<249x50xbf16, #tpu.memory_space<vmem>>, vector<249x50xbf16>
    %124 = vector.extract_strided_slice %122 {offsets = [0, 0], sizes = [16, 250], strides = [1, 1]} : vector<16x262xf32> to vector<16x250xf32>
    %125 = vector.extract_strided_slice %122 {offsets = [0, 12], sizes = [16, 250], strides = [1, 1]} : vector<16x262xf32> to vector<16x250xf32>
    %126 = arith.maximumf %124, %125 : vector<16x250xf32>
    %127 = vector.extract_strided_slice %126 {offsets = [0, 0], sizes = [16, 249], strides = [1, 1]} : vector<16x250xf32> to vector<16x249xf32>
    %128 = vector.extract_strided_slice %126 {offsets = [0, 1], sizes = [16, 249], strides = [1, 1]} : vector<16x250xf32> to vector<16x249xf32>
    %129 = arith.maximumf %127, %128 : vector<16x249xf32>
    %130 = arith.truncf %129 : vector<16x249xf32> to vector<16x249xbf16>
    %cst_82 = arith.constant dense<0.000000e+00> : vector<16x50xf32>
    %131 = tpu.matmul %130, %123, %cst_82 {dimension_numbers = #tpu.dot_dimension_numbers<[1], [0], [0], [1], [0, 0, 1, 1], [], []>} : vector<16x249xbf16>, vector<249x50xbf16>, vector<16x50xf32> -> vector<16x50xf32>
    %132 = arith.truncf %131 : vector<16x50xf32> to vector<16x50xbf16>
    %133 = vector.extract_strided_slice %132 {offsets = [0, 0], sizes = [16, 38], strides = [1, 1]} : vector<16x50xbf16> to vector<16x38xbf16>
    %c0_83 = arith.constant 0 : index
    %c0_84 = arith.constant 0 : index
    %134 = vector.load %arg19[%c0_83, %c0_84] : memref<144x38xbf16, #tpu.memory_space<vmem>>, vector<16x38xbf16>
    tpu.vector_store %arg19[%c0_83, %c0_84], %133 {strides = array<i32>} : memref<144x38xbf16, #tpu.memory_space<vmem>>, vector<16x38xbf16>,
    %135 = vector.extract_strided_slice %132 {offsets = [0, 1], sizes = [16, 38], strides = [1, 1]} : vector<16x50xbf16> to vector<16x38xbf16>
    %c16_85 = arith.constant 16 : index
    %c0_86 = arith.constant 0 : index
    %136 = vector.load %arg19[%c16_85, %c0_86] : memref<144x38xbf16, #tpu.memory_space<vmem>>, vector<16x38xbf16>
    tpu.vector_store %arg19[%c16_85, %c0_86], %135 {strides = array<i32>} : memref<144x38xbf16, #tpu.memory_space<vmem>>, vector<16x38xbf16>,
    %137 = vector.extract_strided_slice %132 {offsets = [0, 2], sizes = [16, 38], strides = [1, 1]} : vector<16x50xbf16> to vector<16x38xbf16>
    %c32_87 = arith.constant 32 : index
    %c0_88 = arith.constant 0 : index
    %138 = vector.load %arg19[%c32_87, %c0_88] : memref<144x38xbf16, #tpu.memory_space<vmem>>, vector<16x38xbf16>
    tpu.vector_store %arg19[%c32_87, %c0_88], %137 {strides = array<i32>} : memref<144x38xbf16, #tpu.memory_space<vmem>>, vector<16x38xbf16>,
    %139 = vector.extract_strided_slice %132 {offsets = [0, 5], sizes = [16, 38], strides = [1, 1]} : vector<16x50xbf16> to vector<16x38xbf16>
    %c48_89 = arith.constant 48 : index
    %c0_90 = arith.constant 0 : index
    %140 = vector.load %arg19[%c48_89, %c0_90] : memref<144x38xbf16, #tpu.memory_space<vmem>>, vector<16x38xbf16>
    tpu.vector_store %arg19[%c48_89, %c0_90], %139 {strides = array<i32>} : memref<144x38xbf16, #tpu.memory_space<vmem>>, vector<16x38xbf16>,
    %141 = vector.extract_strided_slice %132 {offsets = [0, 6], sizes = [16, 38], strides = [1, 1]} : vector<16x50xbf16> to vector<16x38xbf16>
    %c64_91 = arith.constant 64 : index
    %c0_92 = arith.constant 0 : index
    %142 = vector.load %arg19[%c64_91, %c0_92] : memref<144x38xbf16, #tpu.memory_space<vmem>>, vector<16x38xbf16>
    tpu.vector_store %arg19[%c64_91, %c0_92], %141 {strides = array<i32>} : memref<144x38xbf16, #tpu.memory_space<vmem>>, vector<16x38xbf16>,
    %143 = vector.extract_strided_slice %132 {offsets = [0, 7], sizes = [16, 38], strides = [1, 1]} : vector<16x50xbf16> to vector<16x38xbf16>
    %c80 = arith.constant 80 : index
    %c0_93 = arith.constant 0 : index
    %144 = vector.load %arg19[%c80, %c0_93] : memref<144x38xbf16, #tpu.memory_space<vmem>>, vector<16x38xbf16>
    tpu.vector_store %arg19[%c80, %c0_93], %143 {strides = array<i32>} : memref<144x38xbf16, #tpu.memory_space<vmem>>, vector<16x38xbf16>,
    %145 = vector.extract_strided_slice %132 {offsets = [0, 10], sizes = [16, 38], strides = [1, 1]} : vector<16x50xbf16> to vector<16x38xbf16>
    %c96 = arith.constant 96 : index
    %c0_94 = arith.constant 0 : index
    %146 = vector.load %arg19[%c96, %c0_94] : memref<144x38xbf16, #tpu.memory_space<vmem>>, vector<16x38xbf16>
    tpu.vector_store %arg19[%c96, %c0_94], %145 {strides = array<i32>} : memref<144x38xbf16, #tpu.memory_space<vmem>>, vector<16x38xbf16>,
    %147 = vector.extract_strided_slice %132 {offsets = [0, 11], sizes = [16, 38], strides = [1, 1]} : vector<16x50xbf16> to vector<16x38xbf16>
    %c112 = arith.constant 112 : index
    %c0_95 = arith.constant 0 : index
    %148 = vector.load %arg19[%c112, %c0_95] : memref<144x38xbf16, #tpu.memory_space<vmem>>, vector<16x38xbf16>
    tpu.vector_store %arg19[%c112, %c0_95], %147 {strides = array<i32>} : memref<144x38xbf16, #tpu.memory_space<vmem>>, vector<16x38xbf16>,
    %149 = vector.extract_strided_slice %132 {offsets = [0, 12], sizes = [16, 38], strides = [1, 1]} : vector<16x50xbf16> to vector<16x38xbf16>
    %c128 = arith.constant 128 : index
    %c0_96 = arith.constant 0 : index
    %150 = vector.load %arg19[%c128, %c0_96] : memref<144x38xbf16, #tpu.memory_space<vmem>>, vector<16x38xbf16>
    tpu.vector_store %arg19[%c128, %c0_96], %149 {strides = array<i32>} : memref<144x38xbf16, #tpu.memory_space<vmem>>, vector<16x38xbf16>,
    %c0_97 = arith.constant 0 : index
    %c0_98 = arith.constant 0 : index
    %151 = vector.load %arg10[%c0_97, %c0_98] : memref<32x144xbf16, #tpu.memory_space<vmem>>, vector<32x144xbf16>
    %c0_99 = arith.constant 0 : index
    %c0_100 = arith.constant 0 : index
    %152 = vector.load %arg19[%c0_99, %c0_100] : memref<144x38xbf16, #tpu.memory_space<vmem>>, vector<144x38xbf16>
    %cst_101 = arith.constant dense<0.000000e+00> : vector<32x38xf32>
    %153 = tpu.matmul %151, %152, %cst_101 {dimension_numbers = #tpu.dot_dimension_numbers<[1], [0], [0], [1], [0, 0, 1, 1], [], []>} : vector<32x144xbf16>, vector<144x38xbf16>, vector<32x38xf32> -> vector<32x38xf32>
    %c0_102 = arith.constant 0 : index
    %c0_103 = arith.constant 0 : index
    %154 = vector.load %arg11[%c0_102, %c0_103] : memref<32x2xf32, #tpu.memory_space<vmem>>, vector<32x2xf32>
    %c0_104 = arith.constant 0 : index
    %c0_105 = arith.constant 0 : index
    %155 = vector.load %arg12[%c0_104, %c0_105] : memref<1x38xf32, #tpu.memory_space<vmem>>, vector<1x38xf32>
    %156 = vector.broadcast %155 : vector<1x38xf32> to vector<32x38xf32>
    %157 = arith.mulf %153, %156 : vector<32x38xf32>
    %cst_106 = arith.constant dense<0.000000e+00> : vector<32xf32>
    %158 = vector.multi_reduction <add>, %157, %cst_106 [1] : vector<32x38xf32> to vector<32xf32>
    %159 = vector.shape_cast %158 : vector<32xf32> to vector<32x1xf32>
    %cst_107 = arith.constant 0.055555556 : f32
    %160 = vector.broadcast %cst_107 : f32 to vector<32x1xf32>
    %161 = arith.mulf %159, %160 : vector<32x1xf32>
    %162 = arith.mulf %157, %153 : vector<32x38xf32>
    %cst_108 = arith.constant dense<0.000000e+00> : vector<32xf32>
    %163 = vector.multi_reduction <add>, %162, %cst_108 [1] : vector<32x38xf32> to vector<32xf32>
    %164 = vector.shape_cast %163 : vector<32xf32> to vector<32x1xf32>
    %cst_109 = arith.constant 0.055555556 : f32
    %165 = vector.broadcast %cst_109 : f32 to vector<32x1xf32>
    %166 = arith.mulf %164, %165 : vector<32x1xf32>
    %167 = arith.mulf %161, %161 : vector<32x1xf32>
    %168 = arith.subf %166, %167 : vector<32x1xf32>
    %cst_110 = arith.constant 0.000000e+00 : f32
    %169 = vector.broadcast %cst_110 : f32 to vector<32x1xf32>
    %170 = arith.maximumf %168, %169 : vector<32x1xf32>
    %171 = vector.extract_strided_slice %154 {offsets = [0, 0], sizes = [32, 1], strides = [1, 1]} : vector<32x2xf32> to vector<32x1xf32>
    %cst_111 = arith.constant 9.99999974E-6 : f32
    %172 = vector.broadcast %cst_111 : f32 to vector<32x1xf32>
    %173 = arith.addf %170, %172 : vector<32x1xf32>
    %174 = math.rsqrt %173 : vector<32x1xf32>
    %175 = arith.mulf %171, %174 : vector<32x1xf32>
    %176 = vector.broadcast %161 : vector<32x1xf32> to vector<32x38xf32>
    %177 = arith.subf %153, %176 : vector<32x38xf32>
    %178 = vector.broadcast %175 : vector<32x1xf32> to vector<32x38xf32>
    %179 = arith.mulf %177, %178 : vector<32x38xf32>
    %180 = vector.extract_strided_slice %154 {offsets = [0, 1], sizes = [32, 1], strides = [1, 1]} : vector<32x2xf32> to vector<32x1xf32>
    %181 = vector.broadcast %180 : vector<32x1xf32> to vector<32x38xf32>
    %182 = arith.addf %179, %181 : vector<32x38xf32>
    %cst_112 = arith.constant 0.000000e+00 : f32
    %183 = vector.broadcast %cst_112 : f32 to vector<32x38xf32>
    %184 = arith.maximumf %182, %183 : vector<32x38xf32>
    %185 = arith.truncf %184 : vector<32x38xf32> to vector<32x38xbf16>
    %186 = vector.extract_strided_slice %185 {offsets = [0, 0], sizes = [32, 26], strides = [1, 1]} : vector<32x38xbf16> to vector<32x26xbf16>
    %c0_113 = arith.constant 0 : index
    %c0_114 = arith.constant 0 : index
    %187 = vector.load %arg20[%c0_113, %c0_114] : memref<288x26xbf16, #tpu.memory_space<vmem>>, vector<32x26xbf16>
    tpu.vector_store %arg20[%c0_113, %c0_114], %186 {strides = array<i32>} : memref<288x26xbf16, #tpu.memory_space<vmem>>, vector<32x26xbf16>,
    %188 = vector.extract_strided_slice %185 {offsets = [0, 1], sizes = [32, 26], strides = [1, 1]} : vector<32x38xbf16> to vector<32x26xbf16>
    %c32_115 = arith.constant 32 : index
    %c0_116 = arith.constant 0 : index
    %189 = vector.load %arg20[%c32_115, %c0_116] : memref<288x26xbf16, #tpu.memory_space<vmem>>, vector<32x26xbf16>
    tpu.vector_store %arg20[%c32_115, %c0_116], %188 {strides = array<i32>} : memref<288x26xbf16, #tpu.memory_space<vmem>>, vector<32x26xbf16>,
    %190 = vector.extract_strided_slice %185 {offsets = [0, 2], sizes = [32, 26], strides = [1, 1]} : vector<32x38xbf16> to vector<32x26xbf16>
    %c64_117 = arith.constant 64 : index
    %c0_118 = arith.constant 0 : index
    %191 = vector.load %arg20[%c64_117, %c0_118] : memref<288x26xbf16, #tpu.memory_space<vmem>>, vector<32x26xbf16>
    tpu.vector_store %arg20[%c64_117, %c0_118], %190 {strides = array<i32>} : memref<288x26xbf16, #tpu.memory_space<vmem>>, vector<32x26xbf16>,
    %192 = vector.extract_strided_slice %185 {offsets = [0, 5], sizes = [32, 26], strides = [1, 1]} : vector<32x38xbf16> to vector<32x26xbf16>
    %c96_119 = arith.constant 96 : index
    %c0_120 = arith.constant 0 : index
    %193 = vector.load %arg20[%c96_119, %c0_120] : memref<288x26xbf16, #tpu.memory_space<vmem>>, vector<32x26xbf16>
    tpu.vector_store %arg20[%c96_119, %c0_120], %192 {strides = array<i32>} : memref<288x26xbf16, #tpu.memory_space<vmem>>, vector<32x26xbf16>,
    %194 = vector.extract_strided_slice %185 {offsets = [0, 6], sizes = [32, 26], strides = [1, 1]} : vector<32x38xbf16> to vector<32x26xbf16>
    %c128_121 = arith.constant 128 : index
    %c0_122 = arith.constant 0 : index
    %195 = vector.load %arg20[%c128_121, %c0_122] : memref<288x26xbf16, #tpu.memory_space<vmem>>, vector<32x26xbf16>
    tpu.vector_store %arg20[%c128_121, %c0_122], %194 {strides = array<i32>} : memref<288x26xbf16, #tpu.memory_space<vmem>>, vector<32x26xbf16>,
    %196 = vector.extract_strided_slice %185 {offsets = [0, 7], sizes = [32, 26], strides = [1, 1]} : vector<32x38xbf16> to vector<32x26xbf16>
    %c160 = arith.constant 160 : index
    %c0_123 = arith.constant 0 : index
    %197 = vector.load %arg20[%c160, %c0_123] : memref<288x26xbf16, #tpu.memory_space<vmem>>, vector<32x26xbf16>
    tpu.vector_store %arg20[%c160, %c0_123], %196 {strides = array<i32>} : memref<288x26xbf16, #tpu.memory_space<vmem>>, vector<32x26xbf16>,
    %198 = vector.extract_strided_slice %185 {offsets = [0, 10], sizes = [32, 26], strides = [1, 1]} : vector<32x38xbf16> to vector<32x26xbf16>
    %c192 = arith.constant 192 : index
    %c0_124 = arith.constant 0 : index
    %199 = vector.load %arg20[%c192, %c0_124] : memref<288x26xbf16, #tpu.memory_space<vmem>>, vector<32x26xbf16>
    tpu.vector_store %arg20[%c192, %c0_124], %198 {strides = array<i32>} : memref<288x26xbf16, #tpu.memory_space<vmem>>, vector<32x26xbf16>,
    %200 = vector.extract_strided_slice %185 {offsets = [0, 11], sizes = [32, 26], strides = [1, 1]} : vector<32x38xbf16> to vector<32x26xbf16>
    %c224 = arith.constant 224 : index
    %c0_125 = arith.constant 0 : index
    %201 = vector.load %arg20[%c224, %c0_125] : memref<288x26xbf16, #tpu.memory_space<vmem>>, vector<32x26xbf16>
    tpu.vector_store %arg20[%c224, %c0_125], %200 {strides = array<i32>} : memref<288x26xbf16, #tpu.memory_space<vmem>>, vector<32x26xbf16>,
    %202 = vector.extract_strided_slice %185 {offsets = [0, 12], sizes = [32, 26], strides = [1, 1]} : vector<32x38xbf16> to vector<32x26xbf16>
    %c256 = arith.constant 256 : index
    %c0_126 = arith.constant 0 : index
    %203 = vector.load %arg20[%c256, %c0_126] : memref<288x26xbf16, #tpu.memory_space<vmem>>, vector<32x26xbf16>
    tpu.vector_store %arg20[%c256, %c0_126], %202 {strides = array<i32>} : memref<288x26xbf16, #tpu.memory_space<vmem>>, vector<32x26xbf16>,
    %c0_127 = arith.constant 0 : index
    %c0_128 = arith.constant 0 : index
    %204 = vector.load %arg20[%c0_127, %c0_128] : memref<288x26xbf16, #tpu.memory_space<vmem>>, vector<288x26xbf16>
    %c0_129 = arith.constant 0 : index
    %c0_130 = arith.constant 0 : index
    %205 = vector.load %arg15[%c0_129, %c0_130] : memref<26x2xbf16, #tpu.memory_space<vmem>>, vector<26x2xbf16>
    %cst_131 = arith.constant dense<0.000000e+00> : vector<288x2xf32>
    %206 = tpu.matmul %204, %205, %cst_131 {dimension_numbers = #tpu.dot_dimension_numbers<[1], [0], [0], [1], [0, 0, 1, 1], [], []>} : vector<288x26xbf16>, vector<26x2xbf16>, vector<288x2xf32> -> vector<288x2xf32>
    %207 = arith.truncf %206 : vector<288x2xf32> to vector<288x2xbf16>
    %c0_132 = arith.constant 0 : index
    %c0_133 = arith.constant 0 : index
    %208 = vector.load %arg13[%c0_132, %c0_133] : memref<10x288xbf16, #tpu.memory_space<vmem>>, vector<10x288xbf16>
    %cst_134 = arith.constant dense<0.000000e+00> : vector<10x2xf32>
    %209 = tpu.matmul %208, %207, %cst_134 {dimension_numbers = #tpu.dot_dimension_numbers<[1], [0], [0], [1], [0, 0, 1, 1], [], []>} : vector<10x288xbf16>, vector<288x2xbf16>, vector<10x2xf32> -> vector<10x2xf32>
    %c0_135 = arith.constant 0 : index
    %c0_136 = arith.constant 0 : index
    %210 = vector.load %arg14[%c0_135, %c0_136] : memref<10x1xf32, #tpu.memory_space<vmem>>, vector<10x1xf32>
    %211 = vector.broadcast %210 : vector<10x1xf32> to vector<10x2xf32>
    %212 = arith.addf %209, %211 : vector<10x2xf32>
    %c0_137 = arith.constant 0 : index
    %c0_138 = arith.constant 0 : index
    %c0_139 = arith.constant 0 : index
    %213 = vector.load %arg16[%c0_137, %c0_138, %c0_139] : memref<1x10x2xf32, #tpu.memory_space<vmem>>, vector<1x10x2xf32>
    %214 = vector.shape_cast %213 : vector<1x10x2xf32> to vector<10x2xf32>
    %215 = vector.shape_cast %212 : vector<10x2xf32> to vector<1x10x2xf32>
    tpu.vector_store %arg16[%c0_137, %c0_138, %c0_139], %215 {strides = array<i32>} : memref<1x10x2xf32, #tpu.memory_space<vmem>>, vector<1x10x2xf32>,
    return
  }
  func.func @transform_0(%arg0: i32) -> (i32, i32, i32) {
    %c0_i32 = arith.constant 0 : i32
    %c0_i32_0 = arith.constant 0 : i32
    %c0_i32_1 = arith.constant 0 : i32
    return %arg0, %c0_i32, %c0_i32_0 : i32, i32, i32
  }
  func.func @transform_1(%arg0: i32) -> (i32, i32) {
    %c0_i32 = arith.constant 0 : i32
    %c0_i32_0 = arith.constant 0 : i32
    %c0_i32_1 = arith.constant 0 : i32
    return %c0_i32, %c0_i32_0 : i32, i32
  }
  func.func @transform_2(%arg0: i32) -> (i32, i32) {
    %c0_i32 = arith.constant 0 : i32
    %c0_i32_0 = arith.constant 0 : i32
    %c0_i32_1 = arith.constant 0 : i32
    return %c0_i32, %c0_i32_0 : i32, i32
  }
  func.func @transform_3(%arg0: i32) -> (i32, i32) {
    %c0_i32 = arith.constant 0 : i32
    %c0_i32_0 = arith.constant 0 : i32
    %c0_i32_1 = arith.constant 0 : i32
    return %c0_i32, %c0_i32_0 : i32, i32
  }
  func.func @transform_4(%arg0: i32) -> (i32, i32) {
    %c0_i32 = arith.constant 0 : i32
    %c0_i32_0 = arith.constant 0 : i32
    %c0_i32_1 = arith.constant 0 : i32
    return %c0_i32, %c0_i32_0 : i32, i32
  }
  func.func @transform_5(%arg0: i32) -> (i32, i32) {
    %c0_i32 = arith.constant 0 : i32
    %c0_i32_0 = arith.constant 0 : i32
    %c0_i32_1 = arith.constant 0 : i32
    return %c0_i32, %c0_i32_0 : i32, i32
  }
  func.func @transform_6(%arg0: i32) -> (i32, i32) {
    %c0_i32 = arith.constant 0 : i32
    %c0_i32_0 = arith.constant 0 : i32
    %c0_i32_1 = arith.constant 0 : i32
    return %c0_i32, %c0_i32_0 : i32, i32
  }
  func.func @transform_7(%arg0: i32) -> (i32, i32) {
    %c0_i32 = arith.constant 0 : i32
    %c0_i32_0 = arith.constant 0 : i32
    %c0_i32_1 = arith.constant 0 : i32
    return %c0_i32, %c0_i32_0 : i32, i32
  }
  func.func @transform_8(%arg0: i32) -> (i32, i32) {
    %c0_i32 = arith.constant 0 : i32
    %c0_i32_0 = arith.constant 0 : i32
    %c0_i32_1 = arith.constant 0 : i32
    return %c0_i32, %c0_i32_0 : i32, i32
  }
  func.func @transform_9(%arg0: i32) -> (i32, i32) {
    %c0_i32 = arith.constant 0 : i32
    %c0_i32_0 = arith.constant 0 : i32
    %c0_i32_1 = arith.constant 0 : i32
    return %c0_i32, %c0_i32_0 : i32, i32
  }
  func.func @transform_10(%arg0: i32) -> (i32, i32) {
    %c0_i32 = arith.constant 0 : i32
    %c0_i32_0 = arith.constant 0 : i32
    %c0_i32_1 = arith.constant 0 : i32
    return %c0_i32, %c0_i32_0 : i32, i32
  }
  func.func @transform_11(%arg0: i32) -> (i32, i32) {
    %c0_i32 = arith.constant 0 : i32
    %c0_i32_0 = arith.constant 0 : i32
    %c0_i32_1 = arith.constant 0 : i32
    return %c0_i32, %c0_i32_0 : i32, i32
  }
  func.func @transform_12(%arg0: i32) -> (i32, i32) {
    %c0_i32 = arith.constant 0 : i32
    %c0_i32_0 = arith.constant 0 : i32
    %c0_i32_1 = arith.constant 0 : i32
    return %c0_i32, %c0_i32_0 : i32, i32
  }
  func.func @transform_13(%arg0: i32) -> (i32, i32) {
    %c0_i32 = arith.constant 0 : i32
    %c0_i32_0 = arith.constant 0 : i32
    %c0_i32_1 = arith.constant 0 : i32
    return %c0_i32, %c0_i32_0 : i32, i32
  }
  func.func @transform_14(%arg0: i32) -> (i32, i32) {
    %c0_i32 = arith.constant 0 : i32
    %c0_i32_0 = arith.constant 0 : i32
    %c0_i32_1 = arith.constant 0 : i32
    return %c0_i32, %c0_i32_0 : i32, i32
  }
  func.func @transform_15(%arg0: i32) -> (i32, i32, i32) {
    %c0_i32 = arith.constant 0 : i32
    %c0_i32_0 = arith.constant 0 : i32
    %c0_i32_1 = arith.constant 0 : i32
    return %arg0, %c0_i32, %c0_i32_0 : i32, i32, i32
  }
}

</mosaic_0001>

<llo_original>
// kernel: _lambda_.1
$region0: #{_lambda_.1}
  #allocation0 [shape = 'u32[]', space=smem, size = 0x4, offset = 0x4, fixed_abs, tag = 'smem constant byte address 0x4 - core index']
  #allocation1 [shape = 'u32[144,128]{1,0:T(1,128)}', space=vmem, size = 0x12000, scoped, tag = 'internal scratch']
  #allocation2 [shape = 'bf16[72,1298]{1,0:T(8,128)(2,1)}', space=vmem, size = 0x31800, scoped, tag = 'scratch operand']
  #allocation3 [shape = 'bf16[72,262]{1,0:T(8,128)(2,1)}', space=vmem, size = 0xd800, scoped, tag = 'scratch operand']
  #allocation4 [shape = 'bf16[144,38]{1,0:T(16,128)(2,1)}', space=vmem, size = 0x9000, scoped, tag = 'scratch operand']
  #allocation5 [shape = 'bf16[288,26]{1,0:T(16,128)(2,1)}', space=vmem, size = 0x12000, scoped, tag = 'scratch operand']
  %s0 = inlined_call_operand.vmem [shape: bf16[1,8,1352], index: 0, kind: input, shape index: {}]
  %s1 = inlined_call_operand.vmem [shape: bf16[8,72], index: 1, kind: input, shape index: {}]
  %s2 = inlined_call_operand.vmem [shape: f32[8,2], index: 2, kind: input, shape index: {}]
  %s3 = inlined_call_operand.vmem [shape: f32[1,1298], index: 3, kind: input, shape index: {}]
  %s4 = inlined_call_operand.vmem [shape: bf16[1271,288], index: 4, kind: input, shape index: {}]
  %s5 = inlined_call_operand.vmem [shape: bf16[16,72], index: 5, kind: input, shape index: {}]
  %s6 = inlined_call_operand.vmem [shape: f32[16,2], index: 6, kind: input, shape index: {}]
  %s7 = inlined_call_operand.vmem [shape: f32[1,262], index: 7, kind: input, shape index: {}]
  %s8 = inlined_call_operand.vmem [shape: bf16[249,50], index: 8, kind: input, shape index: {}]
  %s9 = inlined_call_operand.vmem [shape: bf16[32,144], index: 9, kind: input, shape index: {}]
  %s10 = inlined_call_operand.vmem [shape: f32[32,2], index: 10, kind: input, shape index: {}]
  %s11 = inlined_call_operand.vmem [shape: f32[1,38], index: 11, kind: input, shape index: {}]
  %s12 = inlined_call_operand.vmem [shape: bf16[10,288], index: 12, kind: input, shape index: {}]
  %s13 = inlined_call_operand.vmem [shape: f32[10,1], index: 13, kind: input, shape index: {}]
  %s14 = inlined_call_operand.vmem [shape: bf16[26,2], index: 14, kind: input, shape index: {}]
  %s15 = inlined_call_operand.vmem [shape: f32[1,10,2], index: 15, kind: output, shape index: {}]
  %s16 = sld [smem:[#allocation0]]
  $region70: #{_lambda_.1} parent=0
    _
  %s18 = ssub.s32 1, %s16
  %s19 = scalar_select 0, %s18, %s16
  // Predicated region
  $region2: #{_lambda_.1} parent=0 // pred_check
    _
  $region3: #{_lambda_.1} parent=0 // pred_check_branch
    %21 = sbr.rel (0) target = $region5
  $region4: #{_lambda_.1} parent=0 // pred_region
    _
  $region5: #{_lambda_.1} parent=0 // pred_fallthru
    _
  // Predicated region
  $region6: #{_lambda_.1} parent=0 // pred_check
    _
  $region7: #{_lambda_.1} parent=0 // pred_check_branch
    %23 = sbr.rel (0) target = $region9
  $region8: #{_lambda_.1} parent=0 // pred_region
    _
  $region9: #{_lambda_.1} parent=0 // pred_fallthru
    _
  // Predicated region
  $region10: #{_lambda_.1} parent=0 // pred_check
    _
  $region11: #{_lambda_.1} parent=0 // pred_check_branch
    %25 = sbr.rel (0) target = $region13
  $region12: #{_lambda_.1} parent=0 // pred_region
    _
  $region13: #{_lambda_.1} parent=0 // pred_fallthru
    _
  // Predicated region
  $region14: #{_lambda_.1} parent=0 // pred_check
    _
  $region15: #{_lambda_.1} parent=0 // pred_check_branch
    %27 = sbr.rel (0) target = $region17
  $region16: #{_lambda_.1} parent=0 // pred_region
    _
  $region17: #{_lambda_.1} parent=0 // pred_fallthru
    _
  // Predicated region
  $region18: #{_lambda_.1} parent=0 // pred_check
    _
  $region19: #{_lambda_.1} parent=0 // pred_check_branch
    %29 = sbr.rel (0) target = $region21
  $region20: #{_lambda_.1} parent=0 // pred_region
    _
  $region21: #{_lambda_.1} parent=0 // pred_fallthru
    _
  // Predicated region
  $region22: #{_lambda_.1} parent=0 // pred_check
    _
  $region23: #{_lambda_.1} parent=0 // pred_check_branch
    %31 = sbr.rel (0) target = $region25
  $region24: #{_lambda_.1} parent=0 // pred_region
    _
  $region25: #{_lambda_.1} parent=0 // pred_fallthru
    _
  // Predicated region
  $region26: #{_lambda_.1} parent=0 // pred_check
    _
  $region27: #{_lambda_.1} parent=0 // pred_check_branch
    %33 = sbr.rel (0) target = $region29
  $region28: #{_lambda_.1} parent=0 // pred_region
    _
  $region29: #{_lambda_.1} parent=0 // pred_fallthru
    _
  // Predicated region
  $region30: #{_lambda_.1} parent=0 // pred_check
    _
  $region31: #{_lambda_.1} parent=0 // pred_check_branch
    %35 = sbr.rel (0) target = $region33
  $region32: #{_lambda_.1} parent=0 // pred_region
    _
  $region33: #{_lambda_.1} parent=0 // pred_fallthru
    _
  // Predicated region
  $region34: #{_lambda_.1} parent=0 // pred_check
    _
  $region35: #{_lambda_.1} parent=0 // pred_check_branch
    %37 = sbr.rel (0) target = $region37
  $region36: #{_lambda_.1} parent=0 // pred_region
    _
  $region37: #{_lambda_.1} parent=0 // pred_fallthru
    _
  // Predicated region
  $region38: #{_lambda_.1} parent=0 // pred_check
    _
  $region39: #{_lambda_.1} parent=0 // pred_check_branch
    %39 = sbr.rel (0) target = $region41
  $region40: #{_lambda_.1} parent=0 // pred_region
    _
  $region41: #{_lambda_.1} parent=0 // pred_fallthru
    _
  // Predicated region
  $region42: #{_lambda_.1} parent=0 // pred_check
    _
  $region43: #{_lambda_.1} parent=0 // pred_check_branch
    %41 = sbr.rel (0) target = $region45
  $region44: #{_lambda_.1} parent=0 // pred_region
    _
  $region45: #{_lambda_.1} parent=0 // pred_fallthru
    _
  // Predicated region
  $region46: #{_lambda_.1} parent=0 // pred_check
    _
  $region47: #{_lambda_.1} parent=0 // pred_check_branch
    %43 = sbr.rel (0) target = $region49
  $region48: #{_lambda_.1} parent=0 // pred_region
    _
  $region49: #{_lambda_.1} parent=0 // pred_fallthru
    _
  // Predicated region
  $region50: #{_lambda_.1} parent=0 // pred_check
    _
  $region51: #{_lambda_.1} parent=0 // pred_check_branch
    %45 = sbr.rel (0) target = $region53
  $region52: #{_lambda_.1} parent=0 // pred_region
    _
  $region53: #{_lambda_.1} parent=0 // pred_fallthru
    _
  // Predicated region
  $region54: #{_lambda_.1} parent=0 // pred_check
    _
  $region55: #{_lambda_.1} parent=0 // pred_check_branch
    %47 = sbr.rel (0) target = $region57
  $region56: #{_lambda_.1} parent=0 // pred_region
    _
  $region57: #{_lambda_.1} parent=0 // pred_fallthru
    _
  // Predicated region
  $region58: #{_lambda_.1} parent=0 // pred_check
    _
  $region59: #{_lambda_.1} parent=0 // pred_check_branch
    %49 = sbr.rel (0) target = $region61
  $region60: #{_lambda_.1} parent=0 // pred_region
    _
  $region61: #{_lambda_.1} parent=0 // pred_fallthru
    _
  %v51 = vld [vmem:[%s0] sm:$0xff]
  %v52 = vld [vmem:[%s0 + $0x8] sm:$0xff]
  %v53 = vld [vmem:[%s0 + $0x10] sm:$0xff]
  %v54 = vld [vmem:[%s0 + $0x18] sm:$0xff]
  %v55 = vld [vmem:[%s0 + $0x20] sm:$0xff]
  %v56 = vld [vmem:[%s0 + $0x28] sm:$0xf]
  %57 = vst [vmem:[#allocation2] sm:$0xff] %v51
  %58 = vst [vmem:[#allocation2 + $0x8] sm:$0xff] %v52
  %59 = vst [vmem:[#allocation2 + $0x10] sm:$0xff] %v53
  %60 = vst [vmem:[#allocation2 + $0x18] sm:$0xff] %v54
  %61 = vst [vmem:[#allocation2 + $0x20] sm:$0xff] %v55
  %vm62 = vcmask 142336
  %63 = vst.msk [vmem:[#allocation2 + $0x28] sm:$0xf] %vm62, %v56
  %v64 = vld [vmem:[%s0] sm:$0xff]
  %v65 = vld [vmem:[%s0 + $0x8] sm:$0xff]
  %v66 = vld [vmem:[%s0 + $0x10] sm:$0xff]
  %v67 = vld [vmem:[%s0 + $0x18] sm:$0xff]
  %v68 = vld [vmem:[%s0 + $0x20] sm:$0xff]
  %v69 = vld [vmem:[%s0 + $0x28] sm:$0xf]
  %76 = vrot.lane.b32.xlu0 %v64, 127
  %v77 = vpop.permute.xlu0 %76
  %78 = vrot.lane.b32.xlu0 %v65, 127
  %v79 = vpop.permute.xlu0 %78
  %80 = vrot.lane.b32.xlu0 %v66, 127
  %v81 = vpop.permute.xlu0 %80
  %82 = vrot.lane.b32.xlu0 %v67, 127
  %v83 = vpop.permute.xlu0 %82
  %84 = vrot.lane.b32.xlu0 %v68, 127
  %v85 = vpop.permute.xlu0 %84
  %86 = vrot.lane.b32.xlu0 %v69, 127
  %v87 = vpop.permute.xlu0 %86
  %v88 = vrot.slane %v77, 4
  %v89 = vrot.slane %v79, 4
  %v90 = vrot.slane %v81, 4
  %v91 = vrot.slane %v83, 4
  %v92 = vrot.slane %v85, 4
  %v93 = vrot.slane %v87, 4
  %vm94 = vcmask 1043456
  %v95 = vsel %vm94, %v88, %v89
  %vm96 = vcmask 1039360
  %v97 = vsel %vm96, %v77, %v95
  %v98 = vsel %vm94, %v89, %v90
  %v99 = vsel %vm96, %v79, %v98
  %v100 = vsel %vm94, %v90, %v91
  %v101 = vsel %vm96, %v81, %v100
  %v102 = vsel %vm94, %v91, %v92
  %v103 = vsel %vm96, %v83, %v102
  %v104 = vsel %vm94, %v92, %v93
  %v105 = vsel %vm96, %v85, %v104
  %112 = vst [vmem:[#allocation2 + $0x2c] sm:$0xff] %v97
  %113 = vst [vmem:[#allocation2 + $0x34] sm:$0xff] %v99
  %114 = vst [vmem:[#allocation2 + $0x3c] sm:$0xff] %v101
  %115 = vst [vmem:[#allocation2 + $0x44] sm:$0xff] %v103
  %116 = vst [vmem:[#allocation2 + $0x4c] sm:$0xff] %v105
  %117 = vst.msk [vmem:[#allocation2 + $0x54] sm:$0xf] %vm62, %v87
  %v118 = vld [vmem:[%s0] sm:$0xff]
  %v119 = vld [vmem:[%s0 + $0x8] sm:$0xff]
  %v120 = vld [vmem:[%s0 + $0x10] sm:$0xff]
  %v121 = vld [vmem:[%s0 + $0x18] sm:$0xff]
  %v122 = vld [vmem:[%s0 + $0x20] sm:$0xff]
  %v123 = vld [vmem:[%s0 + $0x28] sm:$0xf]
  %130 = vrot.lane.b32.xlu0 %v118, 126
  %v131 = vpop.permute.xlu0 %130
  %132 = vrot.lane.b32.xlu0 %v119, 126
  %v133 = vpop.permute.xlu0 %132
  %134 = vrot.lane.b32.xlu0 %v120, 126
  %v135 = vpop.permute.xlu0 %134
  %136 = vrot.lane.b32.xlu0 %v121, 126
  %v137 = vpop.permute.xlu0 %136
  %138 = vrot.lane.b32.xlu0 %v122, 126
  %v139 = vpop.permute.xlu0 %138
  %140 = vrot.lane.b32.xlu0 %v123, 126
  %v141 = vpop.permute.xlu0 %140
  %v142 = vrot.slane %v131, 4
  %v143 = vrot.slane %v133, 4
  %v144 = vrot.slane %v135, 4
  %v145 = vrot.slane %v137, 4
  %v146 = vrot.slane %v139, 4
  %v147 = vrot.slane %v141, 4
  %v148 = vsel %vm94, %v142, %v143
  %vm149 = vcmask 1031168
  %v150 = vsel %vm149, %v131, %v148
  %v151 = vsel %vm94, %v143, %v144
  %v152 = vsel %vm149, %v133, %v151
  %v153 = vsel %vm94, %v144, %v145
  %v154 = vsel %vm149, %v135, %v153
  %v155 = vsel %vm94, %v145, %v146
  %v156 = vsel %vm149, %v137, %v155
  %v157 = vsel %vm94, %v146, %v147
  %v158 = vsel %vm149, %v139, %v157
  %165 = vst [vmem:[#allocation2 + $0x58] sm:$0xff] %v150
  %166 = vst [vmem:[#allocation2 + $0x60] sm:$0xff] %v152
  %167 = vst [vmem:[#allocation2 + $0x68] sm:$0xff] %v154
  %168 = vst [vmem:[#allocation2 + $0x70] sm:$0xff] %v156
  %169 = vst [vmem:[#allocation2 + $0x78] sm:$0xff] %v158
  %170 = vst.msk [vmem:[#allocation2 + $0x80] sm:$0xf] %vm62, %v141
  %v171 = vld [vmem:[%s0] sm:$0xff]
  %v172 = vld [vmem:[%s0 + $0x8] sm:$0xff]
  %v173 = vld [vmem:[%s0 + $0x10] sm:$0xff]
  %v174 = vld [vmem:[%s0 + $0x18] sm:$0xff]
  %v175 = vld [vmem:[%s0 + $0x20] sm:$0xff]
  %v176 = vld [vmem:[%s0 + $0x28] sm:$0xf]
  %183 = vrot.lane.b32.xlu0 %v171, 102
  %v184 = vpop.permute.xlu0 %183
  %185 = vrot.lane.b32.xlu0 %v172, 102
  %v186 = vpop.permute.xlu0 %185
  %187 = vrot.lane.b32.xlu0 %v173, 102
  %v188 = vpop.permute.xlu0 %187
  %189 = vrot.lane.b32.xlu0 %v174, 102
  %v190 = vpop.permute.xlu0 %189
  %191 = vrot.lane.b32.xlu0 %v175, 102
  %v192 = vpop.permute.xlu0 %191
  %193 = vrot.lane.b32.xlu0 %v176, 102
  %v194 = vpop.permute.xlu0 %193
  %v195 = vrot.slane %v184, 4
  %v196 = vrot.slane %v186, 4
  %v197 = vrot.slane %v188, 4
  %v198 = vrot.slane %v190, 4
  %v199 = vrot.slane %v192, 4
  %v200 = vrot.slane %v194, 4
  %v201 = vsel %vm94, %v195, %v196
  %vm202 = vcmask 834560
  %v203 = vsel %vm202, %v184, %v201
  %v204 = vsel %vm94, %v196, %v197
  %v205 = vsel %vm202, %v186, %v204
  %v206 = vsel %vm94, %v197, %v198
  %v207 = vsel %vm202, %v188, %v206
  %v208 = vsel %vm94, %v198, %v199
  %v209 = vsel %vm202, %v190, %v208
  %v210 = vsel %vm94, %v199, %v200
  %v211 = vsel %vm202, %v192, %v210
  %218 = vst [vmem:[#allocation2 + $0x84] sm:$0xff] %v203
  %219 = vst [vmem:[#allocation2 + $0x8c] sm:$0xff] %v205
  %220 = vst [vmem:[#allocation2 + $0x94] sm:$0xff] %v207
  %221 = vst [vmem:[#allocation2 + $0x9c] sm:$0xff] %v209
  %222 = vst [vmem:[#allocation2 + $0xa4] sm:$0xff] %v211
  %223 = vst.msk [vmem:[#allocation2 + $0xac] sm:$0xf] %vm62, %v194
  %v224 = vld [vmem:[%s0] sm:$0xff]
  %v225 = vld [vmem:[%s0 + $0x8] sm:$0xff]
  %v226 = vld [vmem:[%s0 + $0x10] sm:$0xff]
  %v227 = vld [vmem:[%s0 + $0x18] sm:$0xff]
  %v228 = vld [vmem:[%s0 + $0x20] sm:$0xff]
  %v229 = vld [vmem:[%s0 + $0x28] sm:$0xf]
  %236 = vrot.lane.b32.xlu0 %v224, 101
  %v237 = vpop.permute.xlu0 %236
  %238 = vrot.lane.b32.xlu0 %v225, 101
  %v239 = vpop.permute.xlu0 %238
  %240 = vrot.lane.b32.xlu0 %v226, 101
  %v241 = vpop.permute.xlu0 %240
  %242 = vrot.lane.b32.xlu0 %v227, 101
  %v243 = vpop.permute.xlu0 %242
  %244 = vrot.lane.b32.xlu0 %v228, 101
  %v245 = vpop.permute.xlu0 %244
  %246 = vrot.lane.b32.xlu0 %v229, 101
  %v247 = vpop.permute.xlu0 %246
  %v248 = vrot.slane %v237, 4
  %v249 = vrot.slane %v239, 4
  %v250 = vrot.slane %v241, 4
  %v251 = vrot.slane %v243, 4
  %v252 = vrot.slane %v245, 4
  %v253 = vrot.slane %v247, 4
  %v254 = vsel %vm94, %v248, %v249
  %vm255 = vcmask 826368
  %v256 = vsel %vm255, %v237, %v254
  %v257 = vsel %vm94, %v249, %v250
  %v258 = vsel %vm255, %v239, %v257
  %v259 = vsel %vm94, %v250, %v251
  %v260 = vsel %vm255, %v241, %v259
  %v261 = vsel %vm94, %v251, %v252
  %v262 = vsel %vm255, %v243, %v261
  %v263 = vsel %vm94, %v252, %v253
  %v264 = vsel %vm255, %v245, %v263
  %271 = vst [vmem:[#allocation2 + $0xb0] sm:$0xff] %v256
  %272 = vst [vmem:[#allocation2 + $0xb8] sm:$0xff] %v258
  %273 = vst [vmem:[#allocation2 + $0xc0] sm:$0xff] %v260
  %274 = vst [vmem:[#allocation2 + $0xc8] sm:$0xff] %v262
  %275 = vst [vmem:[#allocation2 + $0xd0] sm:$0xff] %v264
  %276 = vst.msk [vmem:[#allocation2 + $0xd8] sm:$0xf] %vm62, %v247
  %v277 = vld [vmem:[%s0] sm:$0xff]
  %v278 = vld [vmem:[%s0 + $0x8] sm:$0xff]
  %v279 = vld [vmem:[%s0 + $0x10] sm:$0xff]
  %v280 = vld [vmem:[%s0 + $0x18] sm:$0xff]
  %v281 = vld [vmem:[%s0 + $0x20] sm:$0xff]
  %v282 = vld [vmem:[%s0 + $0x28] sm:$0xf]
  %289 = vrot.lane.b32.xlu0 %v277, 100
  %v290 = vpop.permute.xlu0 %289
  %291 = vrot.lane.b32.xlu0 %v278, 100
  %v292 = vpop.permute.xlu0 %291
  %293 = vrot.lane.b32.xlu0 %v279, 100
  %v294 = vpop.permute.xlu0 %293
  %295 = vrot.lane.b32.xlu0 %v280, 100
  %v296 = vpop.permute.xlu0 %295
  %297 = vrot.lane.b32.xlu0 %v281, 100
  %v298 = vpop.permute.xlu0 %297
  %299 = vrot.lane.b32.xlu0 %v282, 100
  %v300 = vpop.permute.xlu0 %299
  %v301 = vrot.slane %v290, 4
  %v302 = vrot.slane %v292, 4
  %v303 = vrot.slane %v294, 4
  %v304 = vrot.slane %v296, 4
  %v305 = vrot.slane %v298, 4
  %v306 = vrot.slane %v300, 4
  %v307 = vsel %vm94, %v301, %v302
  %vm308 = vcmask 818176
  %v309 = vsel %vm308, %v290, %v307
  %v310 = vsel %vm94, %v302, %v303
  %v311 = vsel %vm308, %v292, %v310
  %v312 = vsel %vm94, %v303, %v304
  %v313 = vsel %vm308, %v294, %v312
  %v314 = vsel %vm94, %v304, %v305
  %v315 = vsel %vm308, %v296, %v314
  %v316 = vsel %vm94, %v305, %v306
  %v317 = vsel %vm308, %v298, %v316
  %324 = vst [vmem:[#allocation2 + $0xdc] sm:$0xff] %v309
  %325 = vst [vmem:[#allocation2 + $0xe4] sm:$0xff] %v311
  %326 = vst [vmem:[#allocation2 + $0xec] sm:$0xff] %v313
  %327 = vst [vmem:[#allocation2 + $0xf4] sm:$0xff] %v315
  %328 = vst [vmem:[#allocation2 + $0xfc] sm:$0xff] %v317
  %329 = vst.msk [vmem:[#allocation2 + $0x104] sm:$0xf] %vm62, %v300
  %v330 = vld [vmem:[%s0] sm:$0xff]
  %v331 = vld [vmem:[%s0 + $0x8] sm:$0xff]
  %v332 = vld [vmem:[%s0 + $0x10] sm:$0xff]
  %v333 = vld [vmem:[%s0 + $0x18] sm:$0xff]
  %v334 = vld [vmem:[%s0 + $0x20] sm:$0xff]
  %v335 = vld [vmem:[%s0 + $0x28] sm:$0xf]
  %342 = vrot.lane.b32.xlu0 %v330, 76
  %v343 = vpop.permute.xlu0 %342
  %344 = vrot.lane.b32.xlu0 %v331, 76
  %v345 = vpop.permute.xlu0 %344
  %346 = vrot.lane.b32.xlu0 %v332, 76
  %v347 = vpop.permute.xlu0 %346
  %348 = vrot.lane.b32.xlu0 %v333, 76
  %v349 = vpop.permute.xlu0 %348
  %350 = vrot.lane.b32.xlu0 %v334, 76
  %v351 = vpop.permute.xlu0 %350
  %352 = vrot.lane.b32.xlu0 %v335, 76
  %v353 = vpop.permute.xlu0 %352
  %v354 = vrot.slane %v343, 4
  %v355 = vrot.slane %v345, 4
  %v356 = vrot.slane %v347, 4
  %v357 = vrot.slane %v349, 4
  %v358 = vrot.slane %v351, 4
  %v359 = vrot.slane %v353, 4
  %v360 = vsel %vm94, %v354, %v355
  %vm361 = vcmask 621568
  %v362 = vsel %vm361, %v343, %v360
  %v363 = vsel %vm94, %v355, %v356
  %v364 = vsel %vm361, %v345, %v363
  %v365 = vsel %vm94, %v356, %v357
  %v366 = vsel %vm361, %v347, %v365
  %v367 = vsel %vm94, %v357, %v358
  %v368 = vsel %vm361, %v349, %v367
  %v369 = vsel %vm94, %v358, %v359
  %v370 = vsel %vm361, %v351, %v369
  %377 = vst [vmem:[#allocation2 + $0x108] sm:$0xff] %v362
  %378 = vst [vmem:[#allocation2 + $0x110] sm:$0xff] %v364
  %379 = vst [vmem:[#allocation2 + $0x118] sm:$0xff] %v366
  %380 = vst [vmem:[#allocation2 + $0x120] sm:$0xff] %v368
  %381 = vst [vmem:[#allocation2 + $0x128] sm:$0xff] %v370
  %382 = vst.msk [vmem:[#allocation2 + $0x130] sm:$0xf] %vm62, %v353
  %v383 = vld [vmem:[%s0] sm:$0xff]
  %v384 = vld [vmem:[%s0 + $0x8] sm:$0xff]
  %v385 = vld [vmem:[%s0 + $0x10] sm:$0xff]
  %v386 = vld [vmem:[%s0 + $0x18] sm:$0xff]
  %v387 = vld [vmem:[%s0 + $0x20] sm:$0xff]
  %v388 = vld [vmem:[%s0 + $0x28] sm:$0xf]
  %395 = vrot.lane.b32.xlu0 %v383, 75
  %v396 = vpop.permute.xlu0 %395
  %397 = vrot.lane.b32.xlu0 %v384, 75
  %v398 = vpop.permute.xlu0 %397
  %399 = vrot.lane.b32.xlu0 %v385, 75
  %v400 = vpop.permute.xlu0 %399
  %401 = vrot.lane.b32.xlu0 %v386, 75
  %v402 = vpop.permute.xlu0 %401
  %403 = vrot.lane.b32.xlu0 %v387, 75
  %v404 = vpop.permute.xlu0 %403
  %405 = vrot.lane.b32.xlu0 %v388, 75
  %v406 = vpop.permute.xlu0 %405
  %v407 = vrot.slane %v396, 4
  %v408 = vrot.slane %v398, 4
  %v409 = vrot.slane %v400, 4
  %v410 = vrot.slane %v402, 4
  %v411 = vrot.slane %v404, 4
  %v412 = vrot.slane %v406, 4
  %v413 = vsel %vm94, %v407, %v408
  %vm414 = vcmask 613376
  %v415 = vsel %vm414, %v396, %v413
  %v416 = vsel %vm94, %v408, %v409
  %v417 = vsel %vm414, %v398, %v416
  %v418 = vsel %vm94, %v409, %v410
  %v419 = vsel %vm414, %v400, %v418
  %v420 = vsel %vm94, %v410, %v411
  %v421 = vsel %vm414, %v402, %v420
  %v422 = vsel %vm94, %v411, %v412
  %v423 = vsel %vm414, %v404, %v422
  %430 = vst [vmem:[#allocation2 + $0x134] sm:$0xff] %v415
  %431 = vst [vmem:[#allocation2 + $0x13c] sm:$0xff] %v417
  %432 = vst [vmem:[#allocation2 + $0x144] sm:$0xff] %v419
  %433 = vst [vmem:[#allocation2 + $0x14c] sm:$0xff] %v421
  %434 = vst [vmem:[#allocation2 + $0x154] sm:$0xff] %v423
  %435 = vst.msk [vmem:[#allocation2 + $0x15c] sm:$0xf] %vm62, %v406
  %v436 = vld [vmem:[%s0] sm:$0xff]
  %v437 = vld [vmem:[%s0 + $0x8] sm:$0xff]
  %v438 = vld [vmem:[%s0 + $0x10] sm:$0xff]
  %v439 = vld [vmem:[%s0 + $0x18] sm:$0xff]
  %v440 = vld [vmem:[%s0 + $0x20] sm:$0xff]
  %v441 = vld [vmem:[%s0 + $0x28] sm:$0xf]
  %448 = vrot.lane.b32.xlu0 %v436, 74
  %v449 = vpop.permute.xlu0 %448
  %450 = vrot.lane.b32.xlu0 %v437, 74
  %v451 = vpop.permute.xlu0 %450
  %452 = vrot.lane.b32.xlu0 %v438, 74
  %v453 = vpop.permute.xlu0 %452
  %454 = vrot.lane.b32.xlu0 %v439, 74
  %v455 = vpop.permute.xlu0 %454
  %456 = vrot.lane.b32.xlu0 %v440, 74
  %v457 = vpop.permute.xlu0 %456
  %458 = vrot.lane.b32.xlu0 %v441, 74
  %v459 = vpop.permute.xlu0 %458
  %v460 = vrot.slane %v449, 4
  %v461 = vrot.slane %v451, 4
  %v462 = vrot.slane %v453, 4
  %v463 = vrot.slane %v455, 4
  %v464 = vrot.slane %v457, 4
  %v465 = vrot.slane %v459, 4
  %v466 = vsel %vm94, %v460, %v461
  %vm467 = vcmask 605184
  %v468 = vsel %vm467, %v449, %v466
  %v469 = vsel %vm94, %v461, %v462
  %v470 = vsel %vm467, %v451, %v469
  %v471 = vsel %vm94, %v462, %v463
  %v472 = vsel %vm467, %v453, %v471
  %v473 = vsel %vm94, %v463, %v464
  %v474 = vsel %vm467, %v455, %v473
  %v475 = vsel %vm94, %v464, %v465
  %v476 = vsel %vm467, %v457, %v475
  %483 = vst [vmem:[#allocation2 + $0x160] sm:$0xff] %v468
  %484 = vst [vmem:[#allocation2 + $0x168] sm:$0xff] %v470
  %485 = vst [vmem:[#allocation2 + $0x170] sm:$0xff] %v472
  %486 = vst [vmem:[#allocation2 + $0x178] sm:$0xff] %v474
  %487 = vst [vmem:[#allocation2 + $0x180] sm:$0xff] %v476
  %488 = vst.msk [vmem:[#allocation2 + $0x188] sm:$0xf] %vm62, %v459
  %v489 = vld [vmem:[%s1] sm:$0xf]
  %v490 = vld [vmem:[#allocation2] sm:$0xff]
  %v491 = vld [vmem:[#allocation2 + $0x8] sm:$0xff]
  %v492 = vld [vmem:[#allocation2 + $0x10] sm:$0xff]
  %v493 = vld [vmem:[#allocation2 + $0x18] sm:$0xff]
  %v494 = vld [vmem:[#allocation2 + $0x20] sm:$0xff]
  %v495 = vld [vmem:[#allocation2 + $0x28] sm:$0xf]
  %v496 = vld [vmem:[#allocation2 + $0x2c] sm:$0xff]
  %v497 = vld [vmem:[#allocation2 + $0x34] sm:$0xff]
  %v498 = vld [vmem:[#allocation2 + $0x3c] sm:$0xff]
  %v499 = vld [vmem:[#allocation2 + $0x44] sm:$0xff]
  %v500 = vld [vmem:[#allocation2 + $0x4c] sm:$0xff]
  %v501 = vld [vmem:[#allocation2 + $0x54] sm:$0xf]
  %v502 = vld [vmem:[#allocation2 + $0x58] sm:$0xff]
  %v503 = vld [vmem:[#allocation2 + $0x60] sm:$0xff]
  %v504 = vld [vmem:[#allocation2 + $0x68] sm:$0xff]
  %v505 = vld [vmem:[#allocation2 + $0x70] sm:$0xff]
  %v506 = vld [vmem:[#allocation2 + $0x78] sm:$0xff]
  %v507 = vld [vmem:[#allocation2 + $0x80] sm:$0xf]
  %v508 = vld [vmem:[#allocation2 + $0x84] sm:$0xff]
  %v509 = vld [vmem:[#allocation2 + $0x8c] sm:$0xff]
  %v510 = vld [vmem:[#allocation2 + $0x94] sm:$0xff]
  %v511 = vld [vmem:[#allocation2 + $0x9c] sm:$0xff]
  %v512 = vld [vmem:[#allocation2 + $0xa4] sm:$0xff]
  %v513 = vld [vmem:[#allocation2 + $0xac] sm:$0xf]
  %v514 = vld [vmem:[#allocation2 + $0xb0] sm:$0xff]
  %v515 = vld [vmem:[#allocation2 + $0xb8] sm:$0xff]
  %v516 = vld [vmem:[#allocation2 + $0xc0] sm:$0xff]
  %v517 = vld [vmem:[#allocation2 + $0xc8] sm:$0xff]
  %v518 = vld [vmem:[#allocation2 + $0xd0] sm:$0xff]
  %v519 = vld [vmem:[#allocation2 + $0xd8] sm:$0xf]
  %v520 = vld [vmem:[#allocation2 + $0xdc] sm:$0xff]
  %v521 = vld [vmem:[#allocation2 + $0xe4] sm:$0xff]
  %v522 = vld [vmem:[#allocation2 + $0xec] sm:$0xff]
  %v523 = vld [vmem:[#allocation2 + $0xf4] sm:$0xff]
  %v524 = vld [vmem:[#allocation2 + $0xfc] sm:$0xff]
  %v525 = vld [vmem:[#allocation2 + $0x104] sm:$0xf]
  %v526 = vld [vmem:[#allocation2 + $0x108] sm:$0xff]
  %v527 = vld [vmem:[#allocation2 + $0x110] sm:$0xff]
  %v528 = vld [vmem:[#allocation2 + $0x118] sm:$0xff]
  %v529 = vld [vmem:[#allocation2 + $0x120] sm:$0xff]
  %v530 = vld [vmem:[#allocation2 + $0x128] sm:$0xff]
  %v531 = vld [vmem:[#allocation2 + $0x130] sm:$0xf]
  %v532 = vld [vmem:[#allocation2 + $0x134] sm:$0xff]
  %v533 = vld [vmem:[#allocation2 + $0x13c] sm:$0xff]
  %v534 = vld [vmem:[#allocation2 + $0x144] sm:$0xff]
  %v535 = vld [vmem:[#allocation2 + $0x14c] sm:$0xff]
  %v536 = vld [vmem:[#allocation2 + $0x154] sm:$0xff]
  %v537 = vld [vmem:[#allocation2 + $0x15c] sm:$0xf]
  %v538 = vld [vmem:[#allocation2 + $0x160] sm:$0xff]
  %v539 = vld [vmem:[#allocation2 + $0x168] sm:$0xff]
  %v540 = vld [vmem:[#allocation2 + $0x170] sm:$0xff]
  %v541 = vld [vmem:[#allocation2 + $0x178] sm:$0xff]
  %v542 = vld [vmem:[#allocation2 + $0x180] sm:$0xff]
  %v543 = vld [vmem:[#allocation2 + $0x188] sm:$0xf]
  %v598 = vunpack.c.l.b16 %v490
  %v599 = vunpack.c.h.b16 %v490
  %v600 = vunpack.c.l.b16 %v491
  %v601 = vunpack.c.h.b16 %v491
  %v602 = vunpack.c.l.b16 %v492
  %v603 = vunpack.c.h.b16 %v492
  %v604 = vunpack.c.l.b16 %v493
  %v605 = vunpack.c.h.b16 %v493
  %v606 = vunpack.c.l.b16 %v494
  %v607 = vunpack.c.h.b16 %v494
  %v608 = vunpack.c.l.b16 %v495
  %v609 = vunpack.c.l.b16 %v496
  %v610 = vunpack.c.h.b16 %v496
  %v611 = vunpack.c.l.b16 %v497
  %v612 = vunpack.c.h.b16 %v497
  %v613 = vunpack.c.l.b16 %v498
  %v614 = vunpack.c.h.b16 %v498
  %v615 = vunpack.c.l.b16 %v499
  %v616 = vunpack.c.h.b16 %v499
  %v617 = vunpack.c.l.b16 %v500
  %v618 = vunpack.c.h.b16 %v500
  %v619 = vunpack.c.l.b16 %v501
  %v620 = vunpack.c.l.b16 %v502
  %v621 = vunpack.c.h.b16 %v502
  %v622 = vunpack.c.l.b16 %v503
  %v623 = vunpack.c.h.b16 %v503
  %v624 = vunpack.c.l.b16 %v504
  %v625 = vunpack.c.h.b16 %v504
  %v626 = vunpack.c.l.b16 %v505
  %v627 = vunpack.c.h.b16 %v505
  %v628 = vunpack.c.l.b16 %v506
  %v629 = vunpack.c.h.b16 %v506
  %v630 = vunpack.c.l.b16 %v507
  %v631 = vunpack.c.l.b16 %v508
  %v632 = vunpack.c.h.b16 %v508
  %v633 = vunpack.c.l.b16 %v509
  %v634 = vunpack.c.h.b16 %v509
  %v635 = vunpack.c.l.b16 %v510
  %v636 = vunpack.c.h.b16 %v510
  %v637 = vunpack.c.l.b16 %v511
  %v638 = vunpack.c.h.b16 %v511
  %v639 = vunpack.c.l.b16 %v512
  %v640 = vunpack.c.h.b16 %v512
  %v641 = vunpack.c.l.b16 %v513
  %v642 = vunpack.c.l.b16 %v514
  %v643 = vunpack.c.h.b16 %v514
  %v644 = vunpack.c.l.b16 %v515
  %v645 = vunpack.c.h.b16 %v515
  %v646 = vunpack.c.l.b16 %v516
  %v647 = vunpack.c.h.b16 %v516
  %v648 = vunpack.c.l.b16 %v517
  %v649 = vunpack.c.h.b16 %v517
  %v650 = vunpack.c.l.b16 %v518
  %v651 = vunpack.c.h.b16 %v518
  %v652 = vunpack.c.l.b16 %v519
  %v653 = vunpack.c.l.b16 %v520
  %v654 = vunpack.c.h.b16 %v520
  %v655 = vunpack.c.l.b16 %v521
  %v656 = vunpack.c.h.b16 %v521
  %v657 = vunpack.c.l.b16 %v522
  %v658 = vunpack.c.h.b16 %v522
  %v659 = vunpack.c.l.b16 %v523
  %v660 = vunpack.c.h.b16 %v523
  %v661 = vunpack.c.l.b16 %v524
  %v662 = vunpack.c.h.b16 %v524
  %v663 = vunpack.c.l.b16 %v525
  %v664 = vunpack.c.l.b16 %v526
  %v665 = vunpack.c.h.b16 %v526
  %v666 = vunpack.c.l.b16 %v527
  %v667 = vunpack.c.h.b16 %v527
  %v668 = vunpack.c.l.b16 %v528
  %v669 = vunpack.c.h.b16 %v528
  %v670 = vunpack.c.l.b16 %v529
  %v671 = vunpack.c.h.b16 %v529
  %v672 = vunpack.c.l.b16 %v530
  %v673 = vunpack.c.h.b16 %v530
  %v674 = vunpack.c.l.b16 %v531
  %v675 = vunpack.c.l.b16 %v532
  %v676 = vunpack.c.h.b16 %v532
  %v677 = vunpack.c.l.b16 %v533
  %v678 = vunpack.c.h.b16 %v533
  %v679 = vunpack.c.l.b16 %v534
  %v680 = vunpack.c.h.b16 %v534
  %v681 = vunpack.c.l.b16 %v535
  %v682 = vunpack.c.h.b16 %v535
  %v683 = vunpack.c.l.b16 %v536
  %v684 = vunpack.c.h.b16 %v536
  %v685 = vunpack.c.l.b16 %v537
  %v686 = vunpack.c.l.b16 %v538
  %v687 = vunpack.c.h.b16 %v538
  %v688 = vunpack.c.l.b16 %v539
  %v689 = vunpack.c.h.b16 %v539
  %v690 = vunpack.c.l.b16 %v540
  %v691 = vunpack.c.h.b16 %v540
  %v692 = vunpack.c.l.b16 %v541
  %v693 = vunpack.c.h.b16 %v541
  %v694 = vunpack.c.l.b16 %v542
  %v695 = vunpack.c.h.b16 %v542
  %v696 = vunpack.c.l.b16 %v543
  %v697 = vpack.c.b16 %v609, %v598
  %v698 = vpack.c.b16 %v610, %v599
  %v699 = vpack.c.b16 %v611, %v600
  %v700 = vpack.c.b16 %v612, %v601
  %v701 = vpack.c.b16 %v613, %v602
  %v702 = vpack.c.b16 %v614, %v603
  %v703 = vpack.c.b16 %v615, %v604
  %v704 = vpack.c.b16 %v616, %v605
  %v705 = vpack.c.b16 %v617, %v606
  %v706 = vpack.c.b16 %v618, %v607
  %v707 = vpack.c.b16 %v619, %v608
  %v708 = vpack.c.b16 %v631, %v620
  %v709 = vpack.c.b16 %v632, %v621
  %v710 = vpack.c.b16 %v633, %v622
  %v711 = vpack.c.b16 %v634, %v623
  %v712 = vpack.c.b16 %v635, %v624
  %v713 = vpack.c.b16 %v636, %v625
  %v714 = vpack.c.b16 %v637, %v626
  %v715 = vpack.c.b16 %v638, %v627
  %v716 = vpack.c.b16 %v639, %v628
  %v717 = vpack.c.b16 %v640, %v629
  %v718 = vpack.c.b16 %v641, %v630
  %v719 = vpack.c.b16 %v653, %v642
  %v720 = vpack.c.b16 %v654, %v643
  %v721 = vpack.c.b16 %v655, %v644
  %v722 = vpack.c.b16 %v656, %v645
  %v723 = vpack.c.b16 %v657, %v646
  %v724 = vpack.c.b16 %v658, %v647
  %v725 = vpack.c.b16 %v659, %v648
  %v726 = vpack.c.b16 %v660, %v649
  %v727 = vpack.c.b16 %v661, %v650
  %v728 = vpack.c.b16 %v662, %v651
  %v729 = vpack.c.b16 %v663, %v652
  %v730 = vpack.c.b16 %v675, %v664
  %v731 = vpack.c.b16 %v676, %v665
  %v732 = vpack.c.b16 %v677, %v666
  %v733 = vpack.c.b16 %v678, %v667
  %v734 = vpack.c.b16 %v679, %v668
  %v735 = vpack.c.b16 %v680, %v669
  %v736 = vpack.c.b16 %v681, %v670
  %v737 = vpack.c.b16 %v682, %v671
  %v738 = vpack.c.b16 %v683, %v672
  %v739 = vpack.c.b16 %v684, %v673
  %v740 = vpack.c.b16 %v685, %v674
  %v741 = vpack.c.b16 %v686, %v686
  %v742 = vpack.c.b16 %v687, %v687
  %v743 = vpack.c.b16 %v688, %v688
  %v744 = vpack.c.b16 %v689, %v689
  %v745 = vpack.c.b16 %v690, %v690
  %v746 = vpack.c.b16 %v691, %v691
  %v747 = vpack.c.b16 %v692, %v692
  %v748 = vpack.c.b16 %v693, %v693
  %v749 = vpack.c.b16 %v694, %v694
  %v750 = vpack.c.b16 %v695, %v695
  %v751 = vpack.c.b16 %v696, %v696
  %vm796 = vcmask 588800
  %v798 = vsel %vm796, %v489, 0
  %vm800 = vcmask 1043456
  %v802 = vsel %vm800, %v741, 0
  %v805 = vsel %vm800, %v742, 0
  %v808 = vsel %vm800, %v743, 0
  %v811 = vsel %vm800, %v744, 0
  %v814 = vsel %vm800, %v745, 0
  %v817 = vsel %vm800, %v746, 0
  %v820 = vsel %vm800, %v747, 0
  %v823 = vsel %vm800, %v748, 0
  %v826 = vsel %vm800, %v749, 0
  %v829 = vsel %vm800, %v750, 0
  %v832 = vsel %vm800, %v751, 0
  %834 = vmatprep.subr.bf16.mxu0 %v698
  %835 = vmatpush1.bf16.msra.mxu0 %v697
  %836 = vmatprep.subr.bf16.mxu0 %v709
  %837 = vmatpush1.bf16.msra.mxu0 %v708
  %838 = vmatprep.subr.bf16.mxu0 %v720
  %839 = vmatpush1.bf16.msra.mxu0 %v719
  %840 = vmatprep.subr.bf16.mxu0 %v731
  %841 = vmatpush1.bf16.msra.mxu0 %v730
  %842 = vmatprep.subr.bf16.mxu0 %v805
  %843 = vmatpush1.bf16.msra.mxu0 %v802
  %844 = vmatprep.subr.bf16.mxu0 0
  %845 = vmatpush1.bf16.msra.mxu0 0
  %846 = vmatprep.subr.bf16.mxu0 0
  %847 = vmatpush1.bf16.msra.mxu0 0
  %848 = vmatprep.subr.bf16.mxu0 0
  %849 = vmatpush1.bf16.msra.mxu0 0
  %850 = vmatprep.subr.bf16.mxu0 0
  %851 = vmatpush1.bf16.msra.mxu0 0
  %852 = vmatprep.subr.bf16.mxu0 0
  %853 = vmatpush1.bf16.msra.mxu0 0
  %854 = vmatprep.subr.bf16.mxu0 0
  %855 = vmatpush1.bf16.msra.mxu0 0
  %856 = vmatprep.subr.bf16.mxu0 0
  %857 = vmatpush1.bf16.msra.mxu0 0
  %858 = vmatprep.subr.bf16.mxu0 0
  %859 = vmatpush1.bf16.msra.mxu0 0
  %860 = vmatprep.subr.bf16.mxu0 0
  %861 = vmatpush1.bf16.msra.mxu0 0
  %862 = vmatprep.subr.bf16.mxu0 0
  %863 = vmatpush1.bf16.msra.mxu0 0
  %864 = vmatprep.subr.bf16.mxu0 0
  %865 = vmatpush1.bf16.msra.mxu0 0
  %866 = vmatprep.mubr.bf16.mxu0 0
  %867 = vmatmul.mubr.bf16.gmra.mrb[0].mxu0 %v798
  %v868 = vpop.f32.mrb[0].mxu0
  %v869 = vadd.f32 0.0, %v868
  %v870 = vpop.f32.mrb[0].mxu0
  %v871 = vadd.f32 0.0, %v870
  %v872 = vpop.f32.mrb[0].mxu0
  %v873 = vpop.f32.mrb[0].mxu0
  %874 = vdwg.mxu0
  %875 = vmatprep.subr.bf16.mxu0 %v700
  %876 = vmatpush1.bf16.msra.mxu0 %v699
  %877 = vmatprep.subr.bf16.mxu0 %v711
  %878 = vmatpush1.bf16.msra.mxu0 %v710
  %879 = vmatprep.subr.bf16.mxu0 %v722
  %880 = vmatpush1.bf16.msra.mxu0 %v721
  %881 = vmatprep.subr.bf16.mxu0 %v733
  %882 = vmatpush1.bf16.msra.mxu0 %v732
  %883 = vmatprep.subr.bf16.mxu0 %v811
  %884 = vmatpush1.bf16.msra.mxu0 %v808
  %885 = vmatprep.subr.bf16.mxu0 0
  %886 = vmatpush1.bf16.msra.mxu0 0
  %887 = vmatprep.subr.bf16.mxu0 0
  %888 = vmatpush1.bf16.msra.mxu0 0
  %889 = vmatprep.subr.bf16.mxu0 0
  %890 = vmatpush1.bf16.msra.mxu0 0
  %891 = vmatprep.subr.bf16.mxu0 0
  %892 = vmatpush1.bf16.msra.mxu0 0
  %893 = vmatprep.subr.bf16.mxu0 0
  %894 = vmatpush1.bf16.msra.mxu0 0
  %895 = vmatprep.subr.bf16.mxu0 0
  %896 = vmatpush1.bf16.msra.mxu0 0
  %897 = vmatprep.subr.bf16.mxu0 0
  %898 = vmatpush1.bf16.msra.mxu0 0
  %899 = vmatprep.subr.bf16.mxu0 0
  %900 = vmatpush1.bf16.msra.mxu0 0
  %901 = vmatprep.subr.bf16.mxu0 0
  %902 = vmatpush1.bf16.msra.mxu0 0
  %903 = vmatprep.subr.bf16.mxu0 0
  %904 = vmatpush1.bf16.msra.mxu0 0
  %905 = vmatprep.subr.bf16.mxu0 0
  %906 = vmatpush1.bf16.msra.mxu0 0
  %907 = vmatprep.mubr.bf16.mxu0 0
  %908 = vmatmul.mubr.bf16.gmra.mrb[0].mxu0 %v798
  %v909 = vpop.f32.mrb[0].mxu0
  %v910 = vadd.f32 0.0, %v909
  %v911 = vpop.f32.mrb[0].mxu0
  %v912 = vadd.f32 0.0, %v911
  %v913 = vpop.f32.mrb[0].mxu0
  %v914 = vpop.f32.mrb[0].mxu0
  %915 = vdwg.mxu0
  %916 = vmatprep.subr.bf16.mxu0 %v702
  %917 = vmatpush1.bf16.msra.mxu0 %v701
  %918 = vmatprep.subr.bf16.mxu0 %v713
  %919 = vmatpush1.bf16.msra.mxu0 %v712
  %920 = vmatprep.subr.bf16.mxu0 %v724
  %921 = vmatpush1.bf16.msra.mxu0 %v723
  %922 = vmatprep.subr.bf16.mxu0 %v735
  %923 = vmatpush1.bf16.msra.mxu0 %v734
  %924 = vmatprep.subr.bf16.mxu0 %v817
  %925 = vmatpush1.bf16.msra.mxu0 %v814
  %926 = vmatprep.subr.bf16.mxu0 0
  %927 = vmatpush1.bf16.msra.mxu0 0
  %928 = vmatprep.subr.bf16.mxu0 0
  %929 = vmatpush1.bf16.msra.mxu0 0
  %930 = vmatprep.subr.bf16.mxu0 0
  %931 = vmatpush1.bf16.msra.mxu0 0
  %932 = vmatprep.subr.bf16.mxu0 0
  %933 = vmatpush1.bf16.msra.mxu0 0
  %934 = vmatprep.subr.bf16.mxu0 0
  %935 = vmatpush1.bf16.msra.mxu0 0
  %936 = vmatprep.subr.bf16.mxu0 0
  %937 = vmatpush1.bf16.msra.mxu0 0
  %938 = vmatprep.subr.bf16.mxu0 0
  %939 = vmatpush1.bf16.msra.mxu0 0
  %940 = vmatprep.subr.bf16.mxu0 0
  %941 = vmatpush1.bf16.msra.mxu0 0
  %942 = vmatprep.subr.bf16.mxu0 0
  %943 = vmatpush1.bf16.msra.mxu0 0
  %944 = vmatprep.subr.bf16.mxu0 0
  %945 = vmatpush1.bf16.msra.mxu0 0
  %946 = vmatprep.subr.bf16.mxu0 0
  %947 = vmatpush1.bf16.msra.mxu0 0
  %948 = vmatprep.mubr.bf16.mxu0 0
  %949 = vmatmul.mubr.bf16.gmra.mrb[0].mxu0 %v798
  %v950 = vpop.f32.mrb[0].mxu0
  %v951 = vadd.f32 0.0, %v950
  %v952 = vpop.f32.mrb[0].mxu0
  %v953 = vadd.f32 0.0, %v952
  %v954 = vpop.f32.mrb[0].mxu0
  %v955 = vpop.f32.mrb[0].mxu0
  %956 = vdwg.mxu0
  %957 = vmatprep.subr.bf16.mxu0 %v704
  %958 = vmatpush1.bf16.msra.mxu0 %v703
  %959 = vmatprep.subr.bf16.mxu0 %v715
  %960 = vmatpush1.bf16.msra.mxu0 %v714
  %961 = vmatprep.subr.bf16.mxu0 %v726
  %962 = vmatpush1.bf16.msra.mxu0 %v725
  %963 = vmatprep.subr.bf16.mxu0 %v737
  %964 = vmatpush1.bf16.msra.mxu0 %v736
  %965 = vmatprep.subr.bf16.mxu0 %v823
  %966 = vmatpush1.bf16.msra.mxu0 %v820
  %967 = vmatprep.subr.bf16.mxu0 0
  %968 = vmatpush1.bf16.msra.mxu0 0
  %969 = vmatprep.subr.bf16.mxu0 0
  %970 = vmatpush1.bf16.msra.mxu0 0
  %971 = vmatprep.subr.bf16.mxu0 0
  %972 = vmatpush1.bf16.msra.mxu0 0
  %973 = vmatprep.subr.bf16.mxu0 0
  %974 = vmatpush1.bf16.msra.mxu0 0
  %975 = vmatprep.subr.bf16.mxu0 0
  %976 = vmatpush1.bf16.msra.mxu0 0
  %977 = vmatprep.subr.bf16.mxu0 0
  %978 = vmatpush1.bf16.msra.mxu0 0
  %979 = vmatprep.subr.bf16.mxu0 0
  %980 = vmatpush1.bf16.msra.mxu0 0
  %981 = vmatprep.subr.bf16.mxu0 0
  %982 = vmatpush1.bf16.msra.mxu0 0
  %983 = vmatprep.subr.bf16.mxu0 0
  %984 = vmatpush1.bf16.msra.mxu0 0
  %985 = vmatprep.subr.bf16.mxu0 0
  %986 = vmatpush1.bf16.msra.mxu0 0
  %987 = vmatprep.subr.bf16.mxu0 0
  %988 = vmatpush1.bf16.msra.mxu0 0
  %989 = vmatprep.mubr.bf16.mxu0 0
  %990 = vmatmul.mubr.bf16.gmra.mrb[0].mxu0 %v798
  %v991 = vpop.f32.mrb[0].mxu0
  %v992 = vadd.f32 0.0, %v991
  %v993 = vpop.f32.mrb[0].mxu0
  %v994 = vadd.f32 0.0, %v993
  %v995 = vpop.f32.mrb[0].mxu0
  %v996 = vpop.f32.mrb[0].mxu0
  %997 = vdwg.mxu0
  %998 = vmatprep.subr.bf16.mxu0 %v706
  %999 = vmatpush1.bf16.msra.mxu0 %v705
  %1000 = vmatprep.subr.bf16.mxu0 %v717
  %1001 = vmatpush1.bf16.msra.mxu0 %v716
  %1002 = vmatprep.subr.bf16.mxu0 %v728
  %1003 = vmatpush1.bf16.msra.mxu0 %v727
  %1004 = vmatprep.subr.bf16.mxu0 %v739
  %1005 = vmatpush1.bf16.msra.mxu0 %v738
  %1006 = vmatprep.subr.bf16.mxu0 %v829
  %1007 = vmatpush1.bf16.msra.mxu0 %v826
  %1008 = vmatprep.subr.bf16.mxu0 0
  %1009 = vmatpush1.bf16.msra.mxu0 0
  %1010 = vmatprep.subr.bf16.mxu0 0
  %1011 = vmatpush1.bf16.msra.mxu0 0
  %1012 = vmatprep.subr.bf16.mxu0 0
  %1013 = vmatpush1.bf16.msra.mxu0 0
  %1014 = vmatprep.subr.bf16.mxu0 0
  %1015 = vmatpush1.bf16.msra.mxu0 0
  %1016 = vmatprep.subr.bf16.mxu0 0
  %1017 = vmatpush1.bf16.msra.mxu0 0
  %1018 = vmatprep.subr.bf16.mxu0 0
  %1019 = vmatpush1.bf16.msra.mxu0 0
  %1020 = vmatprep.subr.bf16.mxu0 0
  %1021 = vmatpush1.bf16.msra.mxu0 0
  %1022 = vmatprep.subr.bf16.mxu0 0
  %1023 = vmatpush1.bf16.msra.mxu0 0
  %1024 = vmatprep.subr.bf16.mxu0 0
  %1025 = vmatpush1.bf16.msra.mxu0 0
  %1026 = vmatprep.subr.bf16.mxu0 0
  %1027 = vmatpush1.bf16.msra.mxu0 0
  %1028 = vmatprep.subr.bf16.mxu0 0
  %1029 = vmatpush1.bf16.msra.mxu0 0
  %1030 = vmatprep.mubr.bf16.mxu0 0
  %1031 = vmatmul.mubr.bf16.gmra.mrb[0].mxu0 %v798
  %v1032 = vpop.f32.mrb[0].mxu0
  %v1033 = vadd.f32 0.0, %v1032
  %v1034 = vpop.f32.mrb[0].mxu0
  %v1035 = vadd.f32 0.0, %v1034
  %v1036 = vpop.f32.mrb[0].mxu0
  %v1037 = vpop.f32.mrb[0].mxu0
  %1038 = vdwg.mxu0
  %1039 = vmatprep.subr.bf16.mxu0 0
  %1040 = vmatpush1.bf16.msra.mxu0 %v707
  %1041 = vmatprep.subr.bf16.mxu0 0
  %1042 = vmatpush1.bf16.msra.mxu0 %v718
  %1043 = vmatprep.subr.bf16.mxu0 0
  %1044 = vmatpush1.bf16.msra.mxu0 %v729
  %1045 = vmatprep.subr.bf16.mxu0 0
  %1046 = vmatpush1.bf16.msra.mxu0 %v740
  %1047 = vmatprep.subr.bf16.mxu0 0
  %1048 = vmatpush1.bf16.msra.mxu0 %v832
  %1049 = vmatprep.subr.bf16.mxu0 0
  %1050 = vmatpush1.bf16.msra.mxu0 0
  %1051 = vmatprep.subr.bf16.mxu0 0
  %1052 = vmatpush1.bf16.msra.mxu0 0
  %1053 = vmatprep.subr.bf16.mxu0 0
  %1054 = vmatpush1.bf16.msra.mxu0 0
  %1055 = vmatprep.subr.bf16.mxu0 0
  %1056 = vmatpush1.bf16.msra.mxu0 0
  %1057 = vmatprep.subr.bf16.mxu0 0
  %1058 = vmatpush1.bf16.msra.mxu0 0
  %1059 = vmatprep.subr.bf16.mxu0 0
  %1060 = vmatpush1.bf16.msra.mxu0 0
  %1061 = vmatprep.subr.bf16.mxu0 0
  %1062 = vmatpush1.bf16.msra.mxu0 0
  %1063 = vmatprep.subr.bf16.mxu0 0
  %1064 = vmatpush1.bf16.msra.mxu0 0
  %1065 = vmatprep.subr.bf16.mxu0 0
  %1066 = vmatpush1.bf16.msra.mxu0 0
  %1067 = vmatprep.subr.bf16.mxu0 0
  %1068 = vmatpush1.bf16.msra.mxu0 0
  %1069 = vmatprep.subr.bf16.mxu0 0
  %1070 = vmatpush1.bf16.msra.mxu0 0
  %1071 = vmatprep.mubr.bf16.mxu0 0
  %1072 = vmatmul.mubr.bf16.gmra.mrb[0].mxu0 %v798
  %v1073 = vpop.f32.mrb[0].mxu0
  %v1074 = vadd.f32 0.0, %v1073
  %v1075 = vpop.f32.mrb[0].mxu0
  %v1076 = vpop.f32.mrb[0].mxu0
  %v1077 = vpop.f32.mrb[0].mxu0
  %1078 = vdwg.mxu0
  %v1079 = vld [vmem:[%s2] sm:$0xff]
  %v1080 = vld [vmem:[%s3] sm:$0xff]
  %v1081 = vld [vmem:[%s3 + $0x8] sm:$0x7]
  %v1084 = vlaneseq
  %v1085 = vshrl.u32 %v1084, 7
  %v1086 = vsub.s32 0, %v1085
  %v1087 = vrot.slane %v1080, %v1086
  %v1088 = vlaneseq
  %v1089 = vshrl.u32 %v1088, 7
  %v1090 = vsub.s32 1, %v1089
  %v1091 = vrot.slane %v1080, %v1090
  %v1092 = vlaneseq
  %v1093 = vshrl.u32 %v1092, 7
  %v1094 = vsub.s32 2, %v1093
  %v1095 = vrot.slane %v1080, %v1094
  %v1096 = vlaneseq
  %v1097 = vshrl.u32 %v1096, 7
  %v1098 = vsub.s32 3, %v1097
  %v1099 = vrot.slane %v1080, %v1098
  %v1100 = vlaneseq
  %v1101 = vshrl.u32 %v1100, 7
  %v1102 = vsub.s32 4, %v1101
  %v1103 = vrot.slane %v1080, %v1102
  %v1104 = vlaneseq
  %v1105 = vshrl.u32 %v1104, 7
  %v1106 = vsub.s32 5, %v1105
  %v1107 = vrot.slane %v1080, %v1106
  %v1108 = vlaneseq
  %v1109 = vshrl.u32 %v1108, 7
  %v1110 = vsub.s32 6, %v1109
  %v1111 = vrot.slane %v1080, %v1110
  %v1112 = vlaneseq
  %v1113 = vshrl.u32 %v1112, 7
  %v1114 = vsub.s32 7, %v1113
  %v1115 = vrot.slane %v1080, %v1114
  %v1116 = vlaneseq
  %v1117 = vshrl.u32 %v1116, 7
  %v1118 = vsub.s32 0, %v1117
  %v1119 = vrot.slane %v1081, %v1118
  %v1120 = vlaneseq
  %v1121 = vshrl.u32 %v1120, 7
  %v1122 = vsub.s32 1, %v1121
  %v1123 = vrot.slane %v1081, %v1122
  %v1124 = vlaneseq
  %v1125 = vshrl.u32 %v1124, 7
  %v1126 = vsub.s32 2, %v1125
  %v1127 = vrot.slane %v1081, %v1126
  %v1139 = vmul.f32 %v869, %v1087
  %v1140 = vmul.f32 %v871, %v1091
  %v1141 = vmul.f32 %v910, %v1095
  %v1142 = vmul.f32 %v912, %v1099
  %v1143 = vmul.f32 %v951, %v1103
  %v1144 = vmul.f32 %v953, %v1107
  %v1145 = vmul.f32 %v992, %v1111
  %v1146 = vmul.f32 %v994, %v1115
  %v1147 = vmul.f32 %v1033, %v1119
  %v1148 = vmul.f32 %v1035, %v1123
  %v1149 = vmul.f32 %v1074, %v1127
  %v1150 = vadd.f32 %v1139, %v1140
  %v1151 = vadd.f32 %v1150, %v1141
  %v1152 = vadd.f32 %v1151, %v1142
  %v1153 = vadd.f32 %v1152, %v1143
  %v1154 = vadd.f32 %v1153, %v1144
  %v1155 = vadd.f32 %v1154, %v1145
  %v1156 = vadd.f32 %v1155, %v1146
  %v1157 = vadd.f32 %v1156, %v1147
  %v1158 = vadd.f32 %v1157, %v1148
  %vm1159 = vcmask 146432
  %v1160 = vsel %vm1159, %v1149, 0.0
  %v1161 = vadd.f32 %v1158, %v1160
  %1162 = vadd.xlane.f32.xlu0 %v1161
  %v1163 = vpop.xlane.xlu0 %1162
  %v1164 = vmul.f32 %v1163, 0.00086805556
  %v1165 = vmul.f32 %v1139, %v869
  %v1166 = vmul.f32 %v1140, %v871
  %v1167 = vmul.f32 %v1141, %v910
  %v1168 = vmul.f32 %v1142, %v912
  %v1169 = vmul.f32 %v1143, %v951
  %v1170 = vmul.f32 %v1144, %v953
  %v1171 = vmul.f32 %v1145, %v992
  %v1172 = vmul.f32 %v1146, %v994
  %v1173 = vmul.f32 %v1147, %v1033
  %v1174 = vmul.f32 %v1148, %v1035
  %v1175 = vmul.f32 %v1149, %v1074
  %v1176 = vadd.f32 %v1165, %v1166
  %v1177 = vadd.f32 %v1176, %v1167
  %v1178 = vadd.f32 %v1177, %v1168
  %v1179 = vadd.f32 %v1178, %v1169
  %v1180 = vadd.f32 %v1179, %v1170
  %v1181 = vadd.f32 %v1180, %v1171
  %v1182 = vadd.f32 %v1181, %v1172
  %v1183 = vadd.f32 %v1182, %v1173
  %v1184 = vadd.f32 %v1183, %v1174
  %v1185 = vsel %vm1159, %v1175, 0.0
  %v1186 = vadd.f32 %v1184, %v1185
  %1187 = vadd.xlane.f32.xlu0 %v1186
  %v1188 = vpop.xlane.xlu0 %1187
  %v1189 = vmul.f32 %v1188, 0.00086805556
  %v1190 = vmul.f32 %v1164, %v1164
  %v1191 = vsub.f32 %v1189, %v1190
  %v1192 = vmax.f32 %v1191, 0.0
  %v1193 = vadd.f32 %v1192, 1e-05
  %v1194 = vrsqrt.pop %v1193
  %v1195 = vmul.f32 %v1079, %v1194
  %v1196 = vsub.f32 %v869, %v1164
  %v1197 = vsub.f32 %v871, %v1164
  %v1198 = vsub.f32 %v910, %v1164
  %v1199 = vsub.f32 %v912, %v1164
  %v1200 = vsub.f32 %v951, %v1164
  %v1201 = vsub.f32 %v953, %v1164
  %v1202 = vsub.f32 %v992, %v1164
  %v1203 = vsub.f32 %v994, %v1164
  %v1204 = vsub.f32 %v1033, %v1164
  %v1205 = vsub.f32 %v1035, %v1164
  %v1206 = vsub.f32 %v1074, %v1164
  %1208 = vset.pattern.permute.xlu0 0
  %1209 = vperm.xlu0 %1208, %v1195
  %v1210 = vpop.permute.xlu0 %1209
  %v1212 = vmul.f32 %v1196, %v1210
  %v1213 = vmul.f32 %v1197, %v1210
  %v1214 = vmul.f32 %v1198, %v1210
  %v1215 = vmul.f32 %v1199, %v1210
  %v1216 = vmul.f32 %v1200, %v1210
  %v1217 = vmul.f32 %v1201, %v1210
  %v1218 = vmul.f32 %v1202, %v1210
  %v1219 = vmul.f32 %v1203, %v1210
  %v1220 = vmul.f32 %v1204, %v1210
  %v1221 = vmul.f32 %v1205, %v1210
  %v1222 = vmul.f32 %v1206, %v1210
  %1224 = vset.pattern.permute.xlu0 1
  %1225 = vperm.xlu0 %1224, %v1079
  %v1226 = vpop.permute.xlu0 %1225
  %v1228 = vadd.f32 %v1212, %v1226
  %v1229 = vadd.f32 %v1213, %v1226
  %v1230 = vadd.f32 %v1214, %v1226
  %v1231 = vadd.f32 %v1215, %v1226
  %v1232 = vadd.f32 %v1216, %v1226
  %v1233 = vadd.f32 %v1217, %v1226
  %v1234 = vadd.f32 %v1218, %v1226
  %v1235 = vadd.f32 %v1219, %v1226
  %v1236 = vadd.f32 %v1220, %v1226
  %v1237 = vadd.f32 %v1221, %v1226
  %v1238 = vadd.f32 %v1222, %v1226
  %v1239 = vmax.f32 %v1228, 0.0
  %v1240 = vmax.f32 %v1229, 0.0
  %v1241 = vmax.f32 %v1230, 0.0
  %v1242 = vmax.f32 %v1231, 0.0
  %v1243 = vmax.f32 %v1232, 0.0
  %v1244 = vmax.f32 %v1233, 0.0
  %v1245 = vmax.f32 %v1234, 0.0
  %v1246 = vmax.f32 %v1235, 0.0
  %v1247 = vmax.f32 %v1236, 0.0
  %v1248 = vmax.f32 %v1237, 0.0
  %v1249 = vmax.f32 %v1238, 0.0
  %v1250 = vld [vmem:[%s4] sm:$0xff]
  %v1251 = vld [vmem:[%s4 + $0x8] sm:$0xf]
  %v1252 = vld [vmem:[%s4 + $0xc] sm:$0xff]
  %v1253 = vld [vmem:[%s4 + $0x14] sm:$0xf]
  %v1254 = vld [vmem:[%s4 + $0x18] sm:$0xff]
  %v1255 = vld [vmem:[%s4 + $0x20] sm:$0xf]
  %v1256 = vld [vmem:[%s4 + $0x24] sm:$0xff]
  %v1257 = vld [vmem:[%s4 + $0x2c] sm:$0xf]
  %v1258 = vld [vmem:[%s4 + $0x30] sm:$0xff]
  %v1259 = vld [vmem:[%s4 + $0x38] sm:$0xf]
  %v1260 = vld [vmem:[%s4 + $0x3c] sm:$0xff]
  %v1261 = vld [vmem:[%s4 + $0x44] sm:$0xf]
  %v1262 = vld [vmem:[%s4 + $0x48] sm:$0xff]
  %v1263 = vld [vmem:[%s4 + $0x50] sm:$0xf]
  %v1264 = vld [vmem:[%s4 + $0x54] sm:$0xff]
  %v1265 = vld [vmem:[%s4 + $0x5c] sm:$0xf]
  %v1266 = vld [vmem:[%s4 + $0x60] sm:$0xff]
  %v1267 = vld [vmem:[%s4 + $0x68] sm:$0xf]
  %v1268 = vld [vmem:[%s4 + $0x6c] sm:$0xff]
  %v1269 = vld [vmem:[%s4 + $0x74] sm:$0xf]
  %v1270 = vld [vmem:[%s4 + $0x78] sm:$0xff]
  %v1271 = vld [vmem:[%s4 + $0x80] sm:$0xf]
  %v1272 = vld [vmem:[%s4 + $0x84] sm:$0xff]
  %v1273 = vld [vmem:[%s4 + $0x8c] sm:$0xf]
  %v1274 = vld [vmem:[%s4 + $0x90] sm:$0xff]
  %v1275 = vld [vmem:[%s4 + $0x98] sm:$0xf]
  %v1276 = vld [vmem:[%s4 + $0x9c] sm:$0xff]
  %v1277 = vld [vmem:[%s4 + $0xa4] sm:$0xf]
  %v1278 = vld [vmem:[%s4 + $0xa8] sm:$0xff]
  %v1279 = vld [vmem:[%s4 + $0xb0] sm:$0xf]
  %v1280 = vld [vmem:[%s4 + $0xb4] sm:$0xff]
  %v1281 = vld [vmem:[%s4 + $0xbc] sm:$0xf]
  %v1282 = vld [vmem:[%s4 + $0xc0] sm:$0xff]
  %v1283 = vld [vmem:[%s4 + $0xc8] sm:$0xf]
  %v1284 = vld [vmem:[%s4 + $0xcc] sm:$0xff]
  %v1285 = vld [vmem:[%s4 + $0xd4] sm:$0xf]
  %v1286 = vld [vmem:[%s4 + $0xd8] sm:$0xff]
  %v1287 = vld [vmem:[%s4 + $0xe0] sm:$0xf]
  %v1288 = vld [vmem:[%s4 + $0xe4] sm:$0xff]
  %v1289 = vld [vmem:[%s4 + $0xec] sm:$0xf]
  %v1290 = vld [vmem:[%s4 + $0xf0] sm:$0xff]
  %v1291 = vld [vmem:[%s4 + $0xf8] sm:$0xf]
  %v1292 = vld [vmem:[%s4 + $0xfc] sm:$0xff]
  %v1293 = vld [vmem:[%s4 + $0x104] sm:$0xf]
  %v1294 = vld [vmem:[%s4 + $0x108] sm:$0xff]
  %v1295 = vld [vmem:[%s4 + $0x110] sm:$0xf]
  %v1296 = vld [vmem:[%s4 + $0x114] sm:$0xff]
  %v1297 = vld [vmem:[%s4 + $0x11c] sm:$0xf]
  %v1298 = vld [vmem:[%s4 + $0x120] sm:$0xff]
  %v1299 = vld [vmem:[%s4 + $0x128] sm:$0xf]
  %v1300 = vld [vmem:[%s4 + $0x12c] sm:$0xff]
  %v1301 = vld [vmem:[%s4 + $0x134] sm:$0xf]
  %v1302 = vld [vmem:[%s4 + $0x138] sm:$0xff]
  %v1303 = vld [vmem:[%s4 + $0x140] sm:$0xf]
  %v1304 = vld [vmem:[%s4 + $0x144] sm:$0xff]
  %v1305 = vld [vmem:[%s4 + $0x14c] sm:$0xf]
  %v1306 = vld [vmem:[%s4 + $0x150] sm:$0xff]
  %v1307 = vld [vmem:[%s4 + $0x158] sm:$0xf]
  %v1308 = vld [vmem:[%s4 + $0x15c] sm:$0xff]
  %v1309 = vld [vmem:[%s4 + $0x164] sm:$0xf]
  %v1310 = vld [vmem:[%s4 + $0x168] sm:$0xff]
  %v1311 = vld [vmem:[%s4 + $0x170] sm:$0xf]
  %v1312 = vld [vmem:[%s4 + $0x174] sm:$0xff]
  %v1313 = vld [vmem:[%s4 + $0x17c] sm:$0xf]
  %v1314 = vld [vmem:[%s4 + $0x180] sm:$0xff]
  %v1315 = vld [vmem:[%s4 + $0x188] sm:$0xf]
  %v1316 = vld [vmem:[%s4 + $0x18c] sm:$0xff]
  %v1317 = vld [vmem:[%s4 + $0x194] sm:$0xf]
  %v1318 = vld [vmem:[%s4 + $0x198] sm:$0xff]
  %v1319 = vld [vmem:[%s4 + $0x1a0] sm:$0xf]
  %v1320 = vld [vmem:[%s4 + $0x1a4] sm:$0xff]
  %v1321 = vld [vmem:[%s4 + $0x1ac] sm:$0xf]
  %v1322 = vld [vmem:[%s4 + $0x1b0] sm:$0xff]
  %v1323 = vld [vmem:[%s4 + $0x1b8] sm:$0xf]
  %v1324 = vld [vmem:[%s4 + $0x1bc] sm:$0xff]
  %v1325 = vld [vmem:[%s4 + $0x1c4] sm:$0xf]
  %v1326 = vld [vmem:[%s4 + $0x1c8] sm:$0xff]
  %v1327 = vld [vmem:[%s4 + $0x1d0] sm:$0xf]
  %v1328 = vld [vmem:[%s4 + $0x1d4] sm:$0xff]
  %v1329 = vld [vmem:[%s4 + $0x1dc] sm:$0xf]
  %v1330 = vld [vmem:[%s4 + $0x1e0] sm:$0xff]
  %v1331 = vld [vmem:[%s4 + $0x1e8] sm:$0xf]
  %v1332 = vld [vmem:[%s4 + $0x1ec] sm:$0xff]
  %v1333 = vld [vmem:[%s4 + $0x1f4] sm:$0xf]
  %v1334 = vld [vmem:[%s4 + $0x1f8] sm:$0xff]
  %v1335 = vld [vmem:[%s4 + $0x200] sm:$0xf]
  %v1336 = vld [vmem:[%s4 + $0x204] sm:$0xff]
  %v1337 = vld [vmem:[%s4 + $0x20c] sm:$0xf]
  %v1338 = vld [vmem:[%s4 + $0x210] sm:$0xff]
  %v1339 = vld [vmem:[%s4 + $0x218] sm:$0xf]
  %v1340 = vld [vmem:[%s4 + $0x21c] sm:$0xff]
  %v1341 = vld [vmem:[%s4 + $0x224] sm:$0xf]
  %v1342 = vld [vmem:[%s4 + $0x228] sm:$0xff]
  %v1343 = vld [vmem:[%s4 + $0x230] sm:$0xf]
  %v1344 = vld [vmem:[%s4 + $0x234] sm:$0xff]
  %v1345 = vld [vmem:[%s4 + $0x23c] sm:$0xf]
  %v1346 = vld [vmem:[%s4 + $0x240] sm:$0xff]
  %v1347 = vld [vmem:[%s4 + $0x248] sm:$0xf]
  %v1348 = vld [vmem:[%s4 + $0x24c] sm:$0xff]
  %v1349 = vld [vmem:[%s4 + $0x254] sm:$0xf]
  %v1350 = vld [vmem:[%s4 + $0x258] sm:$0xff]
  %v1351 = vld [vmem:[%s4 + $0x260] sm:$0xf]
  %v1352 = vld [vmem:[%s4 + $0x264] sm:$0xff]
  %v1353 = vld [vmem:[%s4 + $0x26c] sm:$0xf]
  %v1354 = vld [vmem:[%s4 + $0x270] sm:$0xff]
  %v1355 = vld [vmem:[%s4 + $0x278] sm:$0xf]
  %v1356 = vld [vmem:[%s4 + $0x27c] sm:$0xff]
  %v1357 = vld [vmem:[%s4 + $0x284] sm:$0xf]
  %v1358 = vld [vmem:[%s4 + $0x288] sm:$0xff]
  %v1359 = vld [vmem:[%s4 + $0x290] sm:$0xf]
  %v1360 = vld [vmem:[%s4 + $0x294] sm:$0xff]
  %v1361 = vld [vmem:[%s4 + $0x29c] sm:$0xf]
  %v1362 = vld [vmem:[%s4 + $0x2a0] sm:$0xff]
  %v1363 = vld [vmem:[%s4 + $0x2a8] sm:$0xf]
  %v1364 = vld [vmem:[%s4 + $0x2ac] sm:$0xff]
  %v1365 = vld [vmem:[%s4 + $0x2b4] sm:$0xf]
  %v1366 = vld [vmem:[%s4 + $0x2b8] sm:$0xff]
  %v1367 = vld [vmem:[%s4 + $0x2c0] sm:$0xf]
  %v1368 = vld [vmem:[%s4 + $0x2c4] sm:$0xff]
  %v1369 = vld [vmem:[%s4 + $0x2cc] sm:$0xf]
  %v1370 = vld [vmem:[%s4 + $0x2d0] sm:$0xff]
  %v1371 = vld [vmem:[%s4 + $0x2d8] sm:$0xf]
  %v1372 = vld [vmem:[%s4 + $0x2dc] sm:$0xff]
  %v1373 = vld [vmem:[%s4 + $0x2e4] sm:$0xf]
  %v1374 = vld [vmem:[%s4 + $0x2e8] sm:$0xff]
  %v1375 = vld [vmem:[%s4 + $0x2f0] sm:$0xf]
  %v1376 = vld [vmem:[%s4 + $0x2f4] sm:$0xff]
  %v1377 = vld [vmem:[%s4 + $0x2fc] sm:$0xf]
  %v1378 = vld [vmem:[%s4 + $0x300] sm:$0xff]
  %v1379 = vld [vmem:[%s4 + $0x308] sm:$0xf]
  %v1380 = vld [vmem:[%s4 + $0x30c] sm:$0xff]
  %v1381 = vld [vmem:[%s4 + $0x314] sm:$0xf]
  %v1382 = vld [vmem:[%s4 + $0x318] sm:$0xff]
  %v1383 = vld [vmem:[%s4 + $0x320] sm:$0xf]
  %v1384 = vld [vmem:[%s4 + $0x324] sm:$0xff]
  %v1385 = vld [vmem:[%s4 + $0x32c] sm:$0xf]
  %v1386 = vld [vmem:[%s4 + $0x330] sm:$0xff]
  %v1387 = vld [vmem:[%s4 + $0x338] sm:$0xf]
  %v1388 = vld [vmem:[%s4 + $0x33c] sm:$0xff]
  %v1389 = vld [vmem:[%s4 + $0x344] sm:$0xf]
  %v1390 = vld [vmem:[%s4 + $0x348] sm:$0xff]
  %v1391 = vld [vmem:[%s4 + $0x350] sm:$0xf]
  %v1392 = vld [vmem:[%s4 + $0x354] sm:$0xff]
  %v1393 = vld [vmem:[%s4 + $0x35c] sm:$0xf]
  %v1394 = vld [vmem:[%s4 + $0x360] sm:$0xff]
  %v1395 = vld [vmem:[%s4 + $0x368] sm:$0xf]
  %v1396 = vld [vmem:[%s4 + $0x36c] sm:$0xff]
  %v1397 = vld [vmem:[%s4 + $0x374] sm:$0xf]
  %v1398 = vld [vmem:[%s4 + $0x378] sm:$0xff]
  %v1399 = vld [vmem:[%s4 + $0x380] sm:$0xf]
  %v1400 = vld [vmem:[%s4 + $0x384] sm:$0xff]
  %v1401 = vld [vmem:[%s4 + $0x38c] sm:$0xf]
  %v1402 = vld [vmem:[%s4 + $0x390] sm:$0xff]
  %v1403 = vld [vmem:[%s4 + $0x398] sm:$0xf]
  %v1404 = vld [vmem:[%s4 + $0x39c] sm:$0xff]
  %v1405 = vld [vmem:[%s4 + $0x3a4] sm:$0xf]
  %v1406 = vld [vmem:[%s4 + $0x3a8] sm:$0xff]
  %v1407 = vld [vmem:[%s4 + $0x3b0] sm:$0xf]
  %v1408 = vld [vmem:[%s4 + $0x3b4] sm:$0xff]
  %v1409 = vld [vmem:[%s4 + $0x3bc] sm:$0xf]
  %v1410 = vld [vmem:[%s4 + $0x3c0] sm:$0xff]
  %v1411 = vld [vmem:[%s4 + $0x3c8] sm:$0xf]
  %v1412 = vld [vmem:[%s4 + $0x3cc] sm:$0xff]
  %v1413 = vld [vmem:[%s4 + $0x3d4] sm:$0xf]
  %v1414 = vld [vmem:[%s4 + $0x3d8] sm:$0xff]
  %v1415 = vld [vmem:[%s4 + $0x3e0] sm:$0xf]
  %v1416 = vld [vmem:[%s4 + $0x3e4] sm:$0xff]
  %v1417 = vld [vmem:[%s4 + $0x3ec] sm:$0xf]
  %v1418 = vld [vmem:[%s4 + $0x3f0] sm:$0xff]
  %v1419 = vld [vmem:[%s4 + $0x3f8] sm:$0xf]
  %v1420 = vld [vmem:[%s4 + $0x3fc] sm:$0xff]
  %v1421 = vld [vmem:[%s4 + $0x404] sm:$0xf]
  %v1422 = vld [vmem:[%s4 + $0x408] sm:$0xff]
  %v1423 = vld [vmem:[%s4 + $0x410] sm:$0xf]
  %v1424 = vld [vmem:[%s4 + $0x414] sm:$0xff]
  %v1425 = vld [vmem:[%s4 + $0x41c] sm:$0xf]
  %v1426 = vld [vmem:[%s4 + $0x420] sm:$0xff]
  %v1427 = vld [vmem:[%s4 + $0x428] sm:$0xf]
  %v1428 = vld [vmem:[%s4 + $0x42c] sm:$0xff]
  %v1429 = vld [vmem:[%s4 + $0x434] sm:$0xf]
  %v1430 = vld [vmem:[%s4 + $0x438] sm:$0xff]
  %v1431 = vld [vmem:[%s4 + $0x440] sm:$0xf]
  %v1432 = vld [vmem:[%s4 + $0x444] sm:$0xff]
  %v1433 = vld [vmem:[%s4 + $0x44c] sm:$0xf]
  %v1434 = vld [vmem:[%s4 + $0x450] sm:$0xff]
  %v1435 = vld [vmem:[%s4 + $0x458] sm:$0xf]
  %v1436 = vld [vmem:[%s4 + $0x45c] sm:$0xff]
  %v1437 = vld [vmem:[%s4 + $0x464] sm:$0xf]
  %v1438 = vld [vmem:[%s4 + $0x468] sm:$0xff]
  %v1439 = vld [vmem:[%s4 + $0x470] sm:$0xf]
  %v1440 = vld [vmem:[%s4 + $0x474] sm:$0xff]
  %v1441 = vld [vmem:[%s4 + $0x47c] sm:$0xf]
  %v1442 = vld [vmem:[%s4 + $0x480] sm:$0xff]
  %v1443 = vld [vmem:[%s4 + $0x488] sm:$0xf]
  %v1444 = vld [vmem:[%s4 + $0x48c] sm:$0xff]
  %v1445 = vld [vmem:[%s4 + $0x494] sm:$0xf]
  %v1446 = vld [vmem:[%s4 + $0x498] sm:$0xff]
  %v1447 = vld [vmem:[%s4 + $0x4a0] sm:$0xf]
  %v1448 = vld [vmem:[%s4 + $0x4a4] sm:$0xff]
  %v1449 = vld [vmem:[%s4 + $0x4ac] sm:$0xf]
  %v1450 = vld [vmem:[%s4 + $0x4b0] sm:$0xff]
  %v1451 = vld [vmem:[%s4 + $0x4b8] sm:$0xf]
  %v1452 = vld [vmem:[%s4 + $0x4bc] sm:$0xff]
  %v1453 = vld [vmem:[%s4 + $0x4c4] sm:$0xf]
  %v1454 = vld [vmem:[%s4 + $0x4c8] sm:$0xff]
  %v1455 = vld [vmem:[%s4 + $0x4d0] sm:$0xf]
  %v1456 = vld [vmem:[%s4 + $0x4d4] sm:$0xff]
  %v1457 = vld [vmem:[%s4 + $0x4dc] sm:$0xf]
  %v1458 = vld [vmem:[%s4 + $0x4e0] sm:$0xff]
  %v1459 = vld [vmem:[%s4 + $0x4e8] sm:$0xf]
  %v1460 = vld [vmem:[%s4 + $0x4ec] sm:$0xff]
  %v1461 = vld [vmem:[%s4 + $0x4f4] sm:$0xf]
  %v1462 = vld [vmem:[%s4 + $0x4f8] sm:$0xff]
  %v1463 = vld [vmem:[%s4 + $0x500] sm:$0xf]
  %v1464 = vld [vmem:[%s4 + $0x504] sm:$0xff]
  %v1465 = vld [vmem:[%s4 + $0x50c] sm:$0xf]
  %v1466 = vld [vmem:[%s4 + $0x510] sm:$0xff]
  %v1467 = vld [vmem:[%s4 + $0x518] sm:$0xf]
  %v1468 = vld [vmem:[%s4 + $0x51c] sm:$0xff]
  %v1469 = vld [vmem:[%s4 + $0x524] sm:$0xf]
  %v1470 = vld [vmem:[%s4 + $0x528] sm:$0xff]
  %v1471 = vld [vmem:[%s4 + $0x530] sm:$0xf]
  %v1472 = vld [vmem:[%s4 + $0x534] sm:$0xff]
  %v1473 = vld [vmem:[%s4 + $0x53c] sm:$0xf]
  %v1474 = vld [vmem:[%s4 + $0x540] sm:$0xff]
  %v1475 = vld [vmem:[%s4 + $0x548] sm:$0xf]
  %v1476 = vld [vmem:[%s4 + $0x54c] sm:$0xff]
  %v1477 = vld [vmem:[%s4 + $0x554] sm:$0xf]
  %v1478 = vld [vmem:[%s4 + $0x558] sm:$0xff]
  %v1479 = vld [vmem:[%s4 + $0x560] sm:$0xf]
  %v1480 = vld [vmem:[%s4 + $0x564] sm:$0xff]
  %v1481 = vld [vmem:[%s4 + $0x56c] sm:$0xf]
  %v1482 = vld [vmem:[%s4 + $0x570] sm:$0xff]
  %v1483 = vld [vmem:[%s4 + $0x578] sm:$0xf]
  %v1484 = vld [vmem:[%s4 + $0x57c] sm:$0xff]
  %v1485 = vld [vmem:[%s4 + $0x584] sm:$0xf]
  %v1486 = vld [vmem:[%s4 + $0x588] sm:$0xff]
  %v1487 = vld [vmem:[%s4 + $0x590] sm:$0xf]
  %v1488 = vld [vmem:[%s4 + $0x594] sm:$0xff]
  %v1489 = vld [vmem:[%s4 + $0x59c] sm:$0xf]
  %v1490 = vld [vmem:[%s4 + $0x5a0] sm:$0xff]
  %v1491 = vld [vmem:[%s4 + $0x5a8] sm:$0xf]
  %v1492 = vld [vmem:[%s4 + $0x5ac] sm:$0xff]
  %v1493 = vld [vmem:[%s4 + $0x5b4] sm:$0xf]
  %v1494 = vld [vmem:[%s4 + $0x5b8] sm:$0xff]
  %v1495 = vld [vmem:[%s4 + $0x5c0] sm:$0xf]
  %v1496 = vld [vmem:[%s4 + $0x5c4] sm:$0xff]
  %v1497 = vld [vmem:[%s4 + $0x5cc] sm:$0xf]
  %v1498 = vld [vmem:[%s4 + $0x5d0] sm:$0xff]
  %v1499 = vld [vmem:[%s4 + $0x5d8] sm:$0xf]
  %v1500 = vld [vmem:[%s4 + $0x5dc] sm:$0xff]
  %v1501 = vld [vmem:[%s4 + $0x5e4] sm:$0xf]
  %v1502 = vld [vmem:[%s4 + $0x5e8] sm:$0xff]
  %v1503 = vld [vmem:[%s4 + $0x5f0] sm:$0xf]
  %v1504 = vld [vmem:[%s4 + $0x5f4] sm:$0xff]
  %v1505 = vld [vmem:[%s4 + $0x5fc] sm:$0xf]
  %v1506 = vld [vmem:[%s4 + $0x600] sm:$0xff]
  %v1507 = vld [vmem:[%s4 + $0x608] sm:$0xf]
  %v1508 = vld [vmem:[%s4 + $0x60c] sm:$0xff]
  %v1509 = vld [vmem:[%s4 + $0x614] sm:$0xf]
  %v1510 = vld [vmem:[%s4 + $0x618] sm:$0xff]
  %v1511 = vld [vmem:[%s4 + $0x620] sm:$0xf]
  %v1512 = vld [vmem:[%s4 + $0x624] sm:$0xff]
  %v1513 = vld [vmem:[%s4 + $0x62c] sm:$0xf]
  %v1514 = vld [vmem:[%s4 + $0x630] sm:$0xff]
  %v1515 = vld [vmem:[%s4 + $0x638] sm:$0xf]
  %v1516 = vld [vmem:[%s4 + $0x63c] sm:$0xff]
  %v1517 = vld [vmem:[%s4 + $0x644] sm:$0xf]
  %v1518 = vld [vmem:[%s4 + $0x648] sm:$0xff]
  %v1519 = vld [vmem:[%s4 + $0x650] sm:$0xf]
  %v1520 = vld [vmem:[%s4 + $0x654] sm:$0xff]
  %v1521 = vld [vmem:[%s4 + $0x65c] sm:$0xf]
  %v1522 = vld [vmem:[%s4 + $0x660] sm:$0xff]
  %v1523 = vld [vmem:[%s4 + $0x668] sm:$0xf]
  %v1524 = vld [vmem:[%s4 + $0x66c] sm:$0xff]
  %v1525 = vld [vmem:[%s4 + $0x674] sm:$0xf]
  %v1526 = vld [vmem:[%s4 + $0x678] sm:$0xff]
  %v1527 = vld [vmem:[%s4 + $0x680] sm:$0xf]
  %v1528 = vld [vmem:[%s4 + $0x684] sm:$0xff]
  %v1529 = vld [vmem:[%s4 + $0x68c] sm:$0xf]
  %v1530 = vld [vmem:[%s4 + $0x690] sm:$0xff]
  %v1531 = vld [vmem:[%s4 + $0x698] sm:$0xf]
  %v1532 = vld [vmem:[%s4 + $0x69c] sm:$0xff]
  %v1533 = vld [vmem:[%s4 + $0x6a4] sm:$0xf]
  %v1534 = vld [vmem:[%s4 + $0x6a8] sm:$0xff]
  %v1535 = vld [vmem:[%s4 + $0x6b0] sm:$0xf]
  %v1536 = vld [vmem:[%s4 + $0x6b4] sm:$0xff]
  %v1537 = vld [vmem:[%s4 + $0x6bc] sm:$0xf]
  %v1538 = vld [vmem:[%s4 + $0x6c0] sm:$0xff]
  %v1539 = vld [vmem:[%s4 + $0x6c8] sm:$0xf]
  %v1540 = vld [vmem:[%s4 + $0x6cc] sm:$0xff]
  %v1541 = vld [vmem:[%s4 + $0x6d4] sm:$0xf]
  %v1542 = vld [vmem:[%s4 + $0x6d8] sm:$0xff]
  %v1543 = vld [vmem:[%s4 + $0x6e0] sm:$0xf]
  %v1544 = vld [vmem:[%s4 + $0x6e4] sm:$0xff]
  %v1545 = vld [vmem:[%s4 + $0x6ec] sm:$0xf]
  %v1546 = vld [vmem:[%s4 + $0x6f0] sm:$0xff]
  %v1547 = vld [vmem:[%s4 + $0x6f8] sm:$0xf]
  %v1548 = vld [vmem:[%s4 + $0x6fc] sm:$0xff]
  %v1549 = vld [vmem:[%s4 + $0x704] sm:$0xf]
  %v1550 = vld [vmem:[%s4 + $0x708] sm:$0xff]
  %v1551 = vld [vmem:[%s4 + $0x710] sm:$0xf]
  %v1552 = vld [vmem:[%s4 + $0x714] sm:$0xff]
  %v1553 = vld [vmem:[%s4 + $0x71c] sm:$0xf]
  %v1554 = vld [vmem:[%s4 + $0x720] sm:$0xff]
  %v1555 = vld [vmem:[%s4 + $0x728] sm:$0xf]
  %v1556 = vld [vmem:[%s4 + $0x72c] sm:$0xff]
  %v1557 = vld [vmem:[%s4 + $0x734] sm:$0xf]
  %v1558 = vld [vmem:[%s4 + $0x738] sm:$0xff]
  %v1559 = vld [vmem:[%s4 + $0x740] sm:$0xf]
  %v1560 = vld [vmem:[%s4 + $0x744] sm:$0xff]
  %v1561 = vld [vmem:[%s4 + $0x74c] sm:$0xf]
  %v1562 = vld [vmem:[%s4 + $0x750] sm:$0xff]
  %v1563 = vld [vmem:[%s4 + $0x758] sm:$0xf]
  %v1564 = vld [vmem:[%s4 + $0x75c] sm:$0xff]
  %v1565 = vld [vmem:[%s4 + $0x764] sm:$0xf]
  %v1566 = vld [vmem:[%s4 + $0x768] sm:$0xff]
  %v1567 = vld [vmem:[%s4 + $0x770] sm:$0xf]
  %1579 = vrot.lane.b32.xlu0 %v1239, 102
  %v1580 = vpop.permute.xlu0 %1579
  %1581 = vrot.lane.b32.xlu0 %v1240, 102
  %v1582 = vpop.permute.xlu0 %1581
  %1583 = vrot.lane.b32.xlu0 %v1241, 102
  %v1584 = vpop.permute.xlu0 %1583
  %1585 = vrot.lane.b32.xlu0 %v1242, 102
  %v1586 = vpop.permute.xlu0 %1585
  %1587 = vrot.lane.b32.xlu0 %v1243, 102
  %v1588 = vpop.permute.xlu0 %1587
  %1589 = vrot.lane.b32.xlu0 %v1244, 102
  %v1590 = vpop.permute.xlu0 %1589
  %1591 = vrot.lane.b32.xlu0 %v1245, 102
  %v1592 = vpop.permute.xlu0 %1591
  %1593 = vrot.lane.b32.xlu0 %v1246, 102
  %v1594 = vpop.permute.xlu0 %1593
  %1595 = vrot.lane.b32.xlu0 %v1247, 102
  %v1596 = vpop.permute.xlu0 %1595
  %1597 = vrot.lane.b32.xlu0 %v1248, 102
  %v1598 = vpop.permute.xlu0 %1597
  %1599 = vrot.lane.b32.xlu0 %v1249, 102
  %v1600 = vpop.permute.xlu0 %1599
  %vm1601 = vcmask 834560
  %v1602 = vsel %vm1601, %v1580, %v1582
  %v1603 = vsel %vm1601, %v1582, %v1584
  %v1604 = vsel %vm1601, %v1584, %v1586
  %v1605 = vsel %vm1601, %v1586, %v1588
  %v1606 = vsel %vm1601, %v1588, %v1590
  %v1607 = vsel %vm1601, %v1590, %v1592
  %v1608 = vsel %vm1601, %v1592, %v1594
  %v1609 = vsel %vm1601, %v1594, %v1596
  %v1610 = vsel %vm1601, %v1596, %v1598
  %v1611 = vsel %vm1601, %v1598, %v1600
  %v1622 = vmax.f32 %v1239, %v1602
  %v1623 = vmax.f32 %v1240, %v1603
  %v1624 = vmax.f32 %v1241, %v1604
  %v1625 = vmax.f32 %v1242, %v1605
  %v1626 = vmax.f32 %v1243, %v1606
  %v1627 = vmax.f32 %v1244, %v1607
  %v1628 = vmax.f32 %v1245, %v1608
  %v1629 = vmax.f32 %v1246, %v1609
  %v1630 = vmax.f32 %v1247, %v1610
  %v1631 = vmax.f32 %v1248, %v1611
  %1642 = vrot.lane.b32.xlu0 %v1622, 127
  %v1643 = vpop.permute.xlu0 %1642
  %1644 = vrot.lane.b32.xlu0 %v1623, 127
  %v1645 = vpop.permute.xlu0 %1644
  %1646 = vrot.lane.b32.xlu0 %v1624, 127
  %v1647 = vpop.permute.xlu0 %1646
  %1648 = vrot.lane.b32.xlu0 %v1625, 127
  %v1649 = vpop.permute.xlu0 %1648
  %1650 = vrot.lane.b32.xlu0 %v1626, 127
  %v1651 = vpop.permute.xlu0 %1650
  %1652 = vrot.lane.b32.xlu0 %v1627, 127
  %v1653 = vpop.permute.xlu0 %1652
  %1654 = vrot.lane.b32.xlu0 %v1628, 127
  %v1655 = vpop.permute.xlu0 %1654
  %1656 = vrot.lane.b32.xlu0 %v1629, 127
  %v1657 = vpop.permute.xlu0 %1656
  %1658 = vrot.lane.b32.xlu0 %v1630, 127
  %v1659 = vpop.permute.xlu0 %1658
  %1660 = vrot.lane.b32.xlu0 %v1631, 127
  %v1661 = vpop.permute.xlu0 %1660
  %vm1662 = vcmask 1039360
  %v1663 = vsel %vm1662, %v1643, %v1645
  %v1664 = vsel %vm1662, %v1645, %v1647
  %v1665 = vsel %vm1662, %v1647, %v1649
  %v1666 = vsel %vm1662, %v1649, %v1651
  %v1667 = vsel %vm1662, %v1651, %v1653
  %v1668 = vsel %vm1662, %v1653, %v1655
  %v1669 = vsel %vm1662, %v1655, %v1657
  %v1670 = vsel %vm1662, %v1657, %v1659
  %v1671 = vsel %vm1662, %v1659, %v1661
  %v1682 = vmax.f32 %v1622, %v1663
  %v1683 = vmax.f32 %v1623, %v1664
  %v1684 = vmax.f32 %v1624, %v1665
  %v1685 = vmax.f32 %v1625, %v1666
  %v1686 = vmax.f32 %v1626, %v1667
  %v1687 = vmax.f32 %v1627, %v1668
  %v1688 = vmax.f32 %v1628, %v1669
  %v1689 = vmax.f32 %v1629, %v1670
  %v1690 = vmax.f32 %v1630, %v1671
  %v1691 = vmax.f32 %v1631, %v1661
  %v1692 = vpack.c.bf16 %v1682, %v1682
  %v1693 = vpack.c.bf16 %v1683, %v1683
  %v1694 = vpack.c.bf16 %v1684, %v1684
  %v1695 = vpack.c.bf16 %v1685, %v1685
  %v1696 = vpack.c.bf16 %v1686, %v1686
  %v1697 = vpack.c.bf16 %v1687, %v1687
  %v1698 = vpack.c.bf16 %v1688, %v1688
  %v1699 = vpack.c.bf16 %v1689, %v1689
  %v1700 = vpack.c.bf16 %v1690, %v1690
  %v1701 = vpack.c.bf16 %v1691, %v1691
  %v2020 = vunpack.c.l.b16 %v1250
  %v2021 = vunpack.c.h.b16 %v1250
  %v2022 = vunpack.c.l.b16 %v1251
  %v2023 = vunpack.c.l.b16 %v1252
  %v2024 = vunpack.c.h.b16 %v1252
  %v2025 = vunpack.c.l.b16 %v1253
  %v2026 = vunpack.c.l.b16 %v1254
  %v2027 = vunpack.c.h.b16 %v1254
  %v2028 = vunpack.c.l.b16 %v1255
  %v2029 = vunpack.c.l.b16 %v1256
  %v2030 = vunpack.c.h.b16 %v1256
  %v2031 = vunpack.c.l.b16 %v1257
  %v2032 = vunpack.c.l.b16 %v1258
  %v2033 = vunpack.c.h.b16 %v1258
  %v2034 = vunpack.c.l.b16 %v1259
  %v2035 = vunpack.c.l.b16 %v1260
  %v2036 = vunpack.c.h.b16 %v1260
  %v2037 = vunpack.c.l.b16 %v1261
  %v2038 = vunpack.c.l.b16 %v1262
  %v2039 = vunpack.c.h.b16 %v1262
  %v2040 = vunpack.c.l.b16 %v1263
  %v2041 = vunpack.c.l.b16 %v1264
  %v2042 = vunpack.c.h.b16 %v1264
  %v2043 = vunpack.c.l.b16 %v1265
  %v2044 = vunpack.c.l.b16 %v1266
  %v2045 = vunpack.c.h.b16 %v1266
  %v2046 = vunpack.c.l.b16 %v1267
  %v2047 = vunpack.c.l.b16 %v1268
  %v2048 = vunpack.c.h.b16 %v1268
  %v2049 = vunpack.c.l.b16 %v1269
  %v2050 = vunpack.c.l.b16 %v1270
  %v2051 = vunpack.c.h.b16 %v1270
  %v2052 = vunpack.c.l.b16 %v1271
  %v2053 = vunpack.c.l.b16 %v1272
  %v2054 = vunpack.c.h.b16 %v1272
  %v2055 = vunpack.c.l.b16 %v1273
  %v2056 = vunpack.c.l.b16 %v1274
  %v2057 = vunpack.c.h.b16 %v1274
  %v2058 = vunpack.c.l.b16 %v1275
  %v2059 = vunpack.c.l.b16 %v1276
  %v2060 = vunpack.c.h.b16 %v1276
  %v2061 = vunpack.c.l.b16 %v1277
  %v2062 = vunpack.c.l.b16 %v1278
  %v2063 = vunpack.c.h.b16 %v1278
  %v2064 = vunpack.c.l.b16 %v1279
  %v2065 = vunpack.c.l.b16 %v1280
  %v2066 = vunpack.c.h.b16 %v1280
  %v2067 = vunpack.c.l.b16 %v1281
  %v2068 = vunpack.c.l.b16 %v1282
  %v2069 = vunpack.c.h.b16 %v1282
  %v2070 = vunpack.c.l.b16 %v1283
  %v2071 = vunpack.c.l.b16 %v1284
  %v2072 = vunpack.c.h.b16 %v1284
  %v2073 = vunpack.c.l.b16 %v1285
  %v2074 = vunpack.c.l.b16 %v1286
  %v2075 = vunpack.c.h.b16 %v1286
  %v2076 = vunpack.c.l.b16 %v1287
  %v2077 = vunpack.c.l.b16 %v1288
  %v2078 = vunpack.c.h.b16 %v1288
  %v2079 = vunpack.c.l.b16 %v1289
  %v2080 = vunpack.c.l.b16 %v1290
  %v2081 = vunpack.c.h.b16 %v1290
  %v2082 = vunpack.c.l.b16 %v1291
  %v2083 = vunpack.c.l.b16 %v1292
  %v2084 = vunpack.c.h.b16 %v1292
  %v2085 = vunpack.c.l.b16 %v1293
  %v2086 = vunpack.c.l.b16 %v1294
  %v2087 = vunpack.c.h.b16 %v1294
  %v2088 = vunpack.c.l.b16 %v1295
  %v2089 = vunpack.c.l.b16 %v1296
  %v2090 = vunpack.c.h.b16 %v1296
  %v2091 = vunpack.c.l.b16 %v1297
  %v2092 = vunpack.c.l.b16 %v1298
  %v2093 = vunpack.c.h.b16 %v1298
  %v2094 = vunpack.c.l.b16 %v1299
  %v2095 = vunpack.c.l.b16 %v1300
  %v2096 = vunpack.c.h.b16 %v1300
  %v2097 = vunpack.c.l.b16 %v1301
  %v2098 = vunpack.c.l.b16 %v1302
  %v2099 = vunpack.c.h.b16 %v1302
  %v2100 = vunpack.c.l.b16 %v1303
  %v2101 = vunpack.c.l.b16 %v1304
  %v2102 = vunpack.c.h.b16 %v1304
  %v2103 = vunpack.c.l.b16 %v1305
  %v2104 = vunpack.c.l.b16 %v1306
  %v2105 = vunpack.c.h.b16 %v1306
  %v2106 = vunpack.c.l.b16 %v1307
  %v2107 = vunpack.c.l.b16 %v1308
  %v2108 = vunpack.c.h.b16 %v1308
  %v2109 = vunpack.c.l.b16 %v1309
  %v2110 = vunpack.c.l.b16 %v1310
  %v2111 = vunpack.c.h.b16 %v1310
  %v2112 = vunpack.c.l.b16 %v1311
  %v2113 = vunpack.c.l.b16 %v1312
  %v2114 = vunpack.c.h.b16 %v1312
  %v2115 = vunpack.c.l.b16 %v1313
  %v2116 = vunpack.c.l.b16 %v1314
  %v2117 = vunpack.c.h.b16 %v1314
  %v2118 = vunpack.c.l.b16 %v1315
  %v2119 = vunpack.c.l.b16 %v1316
  %v2120 = vunpack.c.h.b16 %v1316
  %v2121 = vunpack.c.l.b16 %v1317
  %v2122 = vunpack.c.l.b16 %v1318
  %v2123 = vunpack.c.h.b16 %v1318
  %v2124 = vunpack.c.l.b16 %v1319
  %v2125 = vunpack.c.l.b16 %v1320
  %v2126 = vunpack.c.h.b16 %v1320
  %v2127 = vunpack.c.l.b16 %v1321
  %v2128 = vunpack.c.l.b16 %v1322
  %v2129 = vunpack.c.h.b16 %v1322
  %v2130 = vunpack.c.l.b16 %v1323
  %v2131 = vunpack.c.l.b16 %v1324
  %v2132 = vunpack.c.h.b16 %v1324
  %v2133 = vunpack.c.l.b16 %v1325
  %v2134 = vunpack.c.l.b16 %v1326
  %v2135 = vunpack.c.h.b16 %v1326
  %v2136 = vunpack.c.l.b16 %v1327
  %v2137 = vunpack.c.l.b16 %v1328
  %v2138 = vunpack.c.h.b16 %v1328
  %v2139 = vunpack.c.l.b16 %v1329
  %v2140 = vunpack.c.l.b16 %v1330
  %v2141 = vunpack.c.h.b16 %v1330
  %v2142 = vunpack.c.l.b16 %v1331
  %v2143 = vunpack.c.l.b16 %v1332
  %v2144 = vunpack.c.h.b16 %v1332
  %v2145 = vunpack.c.l.b16 %v1333
  %v2146 = vunpack.c.l.b16 %v1334
  %v2147 = vunpack.c.h.b16 %v1334
  %v2148 = vunpack.c.l.b16 %v1335
  %v2149 = vunpack.c.l.b16 %v1336
  %v2150 = vunpack.c.h.b16 %v1336
  %v2151 = vunpack.c.l.b16 %v1337
  %v2152 = vunpack.c.l.b16 %v1338
  %v2153 = vunpack.c.h.b16 %v1338
  %v2154 = vunpack.c.l.b16 %v1339
  %v2155 = vunpack.c.l.b16 %v1340
  %v2156 = vunpack.c.h.b16 %v1340
  %v2157 = vunpack.c.l.b16 %v1341
  %v2158 = vunpack.c.l.b16 %v1342
  %v2159 = vunpack.c.h.b16 %v1342
  %v2160 = vunpack.c.l.b16 %v1343
  %v2161 = vunpack.c.l.b16 %v1344
  %v2162 = vunpack.c.h.b16 %v1344
  %v2163 = vunpack.c.l.b16 %v1345
  %v2164 = vunpack.c.l.b16 %v1346
  %v2165 = vunpack.c.h.b16 %v1346
  %v2166 = vunpack.c.l.b16 %v1347
  %v2167 = vunpack.c.l.b16 %v1348
  %v2168 = vunpack.c.h.b16 %v1348
  %v2169 = vunpack.c.l.b16 %v1349
  %v2170 = vunpack.c.l.b16 %v1350
  %v2171 = vunpack.c.h.b16 %v1350
  %v2172 = vunpack.c.l.b16 %v1351
  %v2173 = vunpack.c.l.b16 %v1352
  %v2174 = vunpack.c.h.b16 %v1352
  %v2175 = vunpack.c.l.b16 %v1353
  %v2176 = vunpack.c.l.b16 %v1354
  %v2177 = vunpack.c.h.b16 %v1354
  %v2178 = vunpack.c.l.b16 %v1355
  %v2179 = vunpack.c.l.b16 %v1356
  %v2180 = vunpack.c.h.b16 %v1356
  %v2181 = vunpack.c.l.b16 %v1357
  %v2182 = vunpack.c.l.b16 %v1358
  %v2183 = vunpack.c.h.b16 %v1358
  %v2184 = vunpack.c.l.b16 %v1359
  %v2185 = vunpack.c.l.b16 %v1360
  %v2186 = vunpack.c.h.b16 %v1360
  %v2187 = vunpack.c.l.b16 %v1361
  %v2188 = vunpack.c.l.b16 %v1362
  %v2189 = vunpack.c.h.b16 %v1362
  %v2190 = vunpack.c.l.b16 %v1363
  %v2191 = vunpack.c.l.b16 %v1364
  %v2192 = vunpack.c.h.b16 %v1364
  %v2193 = vunpack.c.l.b16 %v1365
  %v2194 = vunpack.c.l.b16 %v1366
  %v2195 = vunpack.c.h.b16 %v1366
  %v2196 = vunpack.c.l.b16 %v1367
  %v2197 = vunpack.c.l.b16 %v1368
  %v2198 = vunpack.c.h.b16 %v1368
  %v2199 = vunpack.c.l.b16 %v1369
  %v2200 = vunpack.c.l.b16 %v1370
  %v2201 = vunpack.c.h.b16 %v1370
  %v2202 = vunpack.c.l.b16 %v1371
  %v2203 = vunpack.c.l.b16 %v1372
  %v2204 = vunpack.c.h.b16 %v1372
  %v2205 = vunpack.c.l.b16 %v1373
  %v2206 = vunpack.c.l.b16 %v1374
  %v2207 = vunpack.c.h.b16 %v1374
  %v2208 = vunpack.c.l.b16 %v1375
  %v2209 = vunpack.c.l.b16 %v1376
  %v2210 = vunpack.c.h.b16 %v1376
  %v2211 = vunpack.c.l.b16 %v1377
  %v2212 = vunpack.c.l.b16 %v1378
  %v2213 = vunpack.c.h.b16 %v1378
  %v2214 = vunpack.c.l.b16 %v1379
  %v2215 = vunpack.c.l.b16 %v1380
  %v2216 = vunpack.c.h.b16 %v1380
  %v2217 = vunpack.c.l.b16 %v1381
  %v2218 = vunpack.c.l.b16 %v1382
  %v2219 = vunpack.c.h.b16 %v1382
  %v2220 = vunpack.c.l.b16 %v1383
  %v2221 = vunpack.c.l.b16 %v1384
  %v2222 = vunpack.c.h.b16 %v1384
  %v2223 = vunpack.c.l.b16 %v1385
  %v2224 = vunpack.c.l.b16 %v1386
  %v2225 = vunpack.c.h.b16 %v1386
  %v2226 = vunpack.c.l.b16 %v1387
  %v2227 = vunpack.c.l.b16 %v1388
  %v2228 = vunpack.c.h.b16 %v1388
  %v2229 = vunpack.c.l.b16 %v1389
  %v2230 = vunpack.c.l.b16 %v1390
  %v2231 = vunpack.c.h.b16 %v1390
  %v2232 = vunpack.c.l.b16 %v1391
  %v2233 = vunpack.c.l.b16 %v1392
  %v2234 = vunpack.c.h.b16 %v1392
  %v2235 = vunpack.c.l.b16 %v1393
  %v2236 = vunpack.c.l.b16 %v1394
  %v2237 = vunpack.c.h.b16 %v1394
  %v2238 = vunpack.c.l.b16 %v1395
  %v2239 = vunpack.c.l.b16 %v1396
  %v2240 = vunpack.c.h.b16 %v1396
  %v2241 = vunpack.c.l.b16 %v1397
  %v2242 = vunpack.c.l.b16 %v1398
  %v2243 = vunpack.c.h.b16 %v1398
  %v2244 = vunpack.c.l.b16 %v1399
  %v2245 = vunpack.c.l.b16 %v1400
  %v2246 = vunpack.c.h.b16 %v1400
  %v2247 = vunpack.c.l.b16 %v1401
  %v2248 = vunpack.c.l.b16 %v1402
  %v2249 = vunpack.c.h.b16 %v1402
  %v2250 = vunpack.c.l.b16 %v1403
  %v2251 = vunpack.c.l.b16 %v1404
  %v2252 = vunpack.c.h.b16 %v1404
  %v2253 = vunpack.c.l.b16 %v1405
  %v2254 = vunpack.c.l.b16 %v1406
  %v2255 = vunpack.c.h.b16 %v1406
  %v2256 = vunpack.c.l.b16 %v1407
  %v2257 = vunpack.c.l.b16 %v1408
  %v2258 = vunpack.c.h.b16 %v1408
  %v2259 = vunpack.c.l.b16 %v1409
  %v2260 = vunpack.c.l.b16 %v1410
  %v2261 = vunpack.c.h.b16 %v1410
  %v2262 = vunpack.c.l.b16 %v1411
  %v2263 = vunpack.c.l.b16 %v1412
  %v2264 = vunpack.c.h.b16 %v1412
  %v2265 = vunpack.c.l.b16 %v1413
  %v2266 = vunpack.c.l.b16 %v1414
  %v2267 = vunpack.c.h.b16 %v1414
  %v2268 = vunpack.c.l.b16 %v1415
  %v2269 = vunpack.c.l.b16 %v1416
  %v2270 = vunpack.c.h.b16 %v1416
  %v2271 = vunpack.c.l.b16 %v1417
  %v2272 = vunpack.c.l.b16 %v1418
  %v2273 = vunpack.c.h.b16 %v1418
  %v2274 = vunpack.c.l.b16 %v1419
  %v2275 = vunpack.c.l.b16 %v1420
  %v2276 = vunpack.c.h.b16 %v1420
  %v2277 = vunpack.c.l.b16 %v1421
  %v2278 = vunpack.c.l.b16 %v1422
  %v2279 = vunpack.c.h.b16 %v1422
  %v2280 = vunpack.c.l.b16 %v1423
  %v2281 = vunpack.c.l.b16 %v1424
  %v2282 = vunpack.c.h.b16 %v1424
  %v2283 = vunpack.c.l.b16 %v1425
  %v2284 = vunpack.c.l.b16 %v1426
  %v2285 = vunpack.c.h.b16 %v1426
  %v2286 = vunpack.c.l.b16 %v1427
  %v2287 = vunpack.c.l.b16 %v1428
  %v2288 = vunpack.c.h.b16 %v1428
  %v2289 = vunpack.c.l.b16 %v1429
  %v2290 = vunpack.c.l.b16 %v1430
  %v2291 = vunpack.c.h.b16 %v1430
  %v2292 = vunpack.c.l.b16 %v1431
  %v2293 = vunpack.c.l.b16 %v1432
  %v2294 = vunpack.c.h.b16 %v1432
  %v2295 = vunpack.c.l.b16 %v1433
  %v2296 = vunpack.c.l.b16 %v1434
  %v2297 = vunpack.c.h.b16 %v1434
  %v2298 = vunpack.c.l.b16 %v1435
  %v2299 = vunpack.c.l.b16 %v1436
  %v2300 = vunpack.c.h.b16 %v1436
  %v2301 = vunpack.c.l.b16 %v1437
  %v2302 = vunpack.c.l.b16 %v1438
  %v2303 = vunpack.c.h.b16 %v1438
  %v2304 = vunpack.c.l.b16 %v1439
  %v2305 = vunpack.c.l.b16 %v1440
  %v2306 = vunpack.c.h.b16 %v1440
  %v2307 = vunpack.c.l.b16 %v1441
  %v2308 = vunpack.c.l.b16 %v1442
  %v2309 = vunpack.c.h.b16 %v1442
  %v2310 = vunpack.c.l.b16 %v1443
  %v2311 = vunpack.c.l.b16 %v1444
  %v2312 = vunpack.c.h.b16 %v1444
  %v2313 = vunpack.c.l.b16 %v1445
  %v2314 = vunpack.c.l.b16 %v1446
  %v2315 = vunpack.c.h.b16 %v1446
  %v2316 = vunpack.c.l.b16 %v1447
  %v2317 = vunpack.c.l.b16 %v1448
  %v2318 = vunpack.c.h.b16 %v1448
  %v2319 = vunpack.c.l.b16 %v1449
  %v2320 = vunpack.c.l.b16 %v1450
  %v2321 = vunpack.c.h.b16 %v1450
  %v2322 = vunpack.c.l.b16 %v1451
  %v2323 = vunpack.c.l.b16 %v1452
  %v2324 = vunpack.c.h.b16 %v1452
  %v2325 = vunpack.c.l.b16 %v1453
  %v2326 = vunpack.c.l.b16 %v1454
  %v2327 = vunpack.c.h.b16 %v1454
  %v2328 = vunpack.c.l.b16 %v1455
  %v2329 = vunpack.c.l.b16 %v1456
  %v2330 = vunpack.c.h.b16 %v1456
  %v2331 = vunpack.c.l.b16 %v1457
  %v2332 = vunpack.c.l.b16 %v1458
  %v2333 = vunpack.c.h.b16 %v1458
  %v2334 = vunpack.c.l.b16 %v1459
  %v2335 = vunpack.c.l.b16 %v1460
  %v2336 = vunpack.c.h.b16 %v1460
  %v2337 = vunpack.c.l.b16 %v1461
  %v2338 = vunpack.c.l.b16 %v1462
  %v2339 = vunpack.c.h.b16 %v1462
  %v2340 = vunpack.c.l.b16 %v1463
  %v2341 = vunpack.c.l.b16 %v1464
  %v2342 = vunpack.c.h.b16 %v1464
  %v2343 = vunpack.c.l.b16 %v1465
  %v2344 = vunpack.c.l.b16 %v1466
  %v2345 = vunpack.c.h.b16 %v1466
  %v2346 = vunpack.c.l.b16 %v1467
  %v2347 = vunpack.c.l.b16 %v1468
  %v2348 = vunpack.c.h.b16 %v1468
  %v2349 = vunpack.c.l.b16 %v1469
  %v2350 = vunpack.c.l.b16 %v1470
  %v2351 = vunpack.c.h.b16 %v1470
  %v2352 = vunpack.c.l.b16 %v1471
  %v2353 = vunpack.c.l.b16 %v1472
  %v2354 = vunpack.c.h.b16 %v1472
  %v2355 = vunpack.c.l.b16 %v1473
  %v2356 = vunpack.c.l.b16 %v1474
  %v2357 = vunpack.c.h.b16 %v1474
  %v2358 = vunpack.c.l.b16 %v1475
  %v2359 = vunpack.c.l.b16 %v1476
  %v2360 = vunpack.c.h.b16 %v1476
  %v2361 = vunpack.c.l.b16 %v1477
  %v2362 = vunpack.c.l.b16 %v1478
  %v2363 = vunpack.c.h.b16 %v1478
  %v2364 = vunpack.c.l.b16 %v1479
  %v2365 = vunpack.c.l.b16 %v1480
  %v2366 = vunpack.c.h.b16 %v1480
  %v2367 = vunpack.c.l.b16 %v1481
  %v2368 = vunpack.c.l.b16 %v1482
  %v2369 = vunpack.c.h.b16 %v1482
  %v2370 = vunpack.c.l.b16 %v1483
  %v2371 = vunpack.c.l.b16 %v1484
  %v2372 = vunpack.c.h.b16 %v1484
  %v2373 = vunpack.c.l.b16 %v1485
  %v2374 = vunpack.c.l.b16 %v1486
  %v2375 = vunpack.c.h.b16 %v1486
  %v2376 = vunpack.c.l.b16 %v1487
  %v2377 = vunpack.c.l.b16 %v1488
  %v2378 = vunpack.c.h.b16 %v1488
  %v2379 = vunpack.c.l.b16 %v1489
  %v2380 = vunpack.c.l.b16 %v1490
  %v2381 = vunpack.c.h.b16 %v1490
  %v2382 = vunpack.c.l.b16 %v1491
  %v2383 = vunpack.c.l.b16 %v1492
  %v2384 = vunpack.c.h.b16 %v1492
  %v2385 = vunpack.c.l.b16 %v1493
  %v2386 = vunpack.c.l.b16 %v1494
  %v2387 = vunpack.c.h.b16 %v1494
  %v2388 = vunpack.c.l.b16 %v1495
  %v2389 = vunpack.c.l.b16 %v1496
  %v2390 = vunpack.c.h.b16 %v1496
  %v2391 = vunpack.c.l.b16 %v1497
  %v2392 = vunpack.c.l.b16 %v1498
  %v2393 = vunpack.c.h.b16 %v1498
  %v2394 = vunpack.c.l.b16 %v1499
  %v2395 = vunpack.c.l.b16 %v1500
  %v2396 = vunpack.c.h.b16 %v1500
  %v2397 = vunpack.c.l.b16 %v1501
  %v2398 = vunpack.c.l.b16 %v1502
  %v2399 = vunpack.c.h.b16 %v1502
  %v2400 = vunpack.c.l.b16 %v1503
  %v2401 = vunpack.c.l.b16 %v1504
  %v2402 = vunpack.c.h.b16 %v1504
  %v2403 = vunpack.c.l.b16 %v1505
  %v2404 = vunpack.c.l.b16 %v1506
  %v2405 = vunpack.c.h.b16 %v1506
  %v2406 = vunpack.c.l.b16 %v1507
  %v2407 = vunpack.c.l.b16 %v1508
  %v2408 = vunpack.c.h.b16 %v1508
  %v2409 = vunpack.c.l.b16 %v1509
  %v2410 = vunpack.c.l.b16 %v1510
  %v2411 = vunpack.c.h.b16 %v1510
  %v2412 = vunpack.c.l.b16 %v1511
  %v2413 = vunpack.c.l.b16 %v1512
  %v2414 = vunpack.c.h.b16 %v1512
  %v2415 = vunpack.c.l.b16 %v1513
  %v2416 = vunpack.c.l.b16 %v1514
  %v2417 = vunpack.c.h.b16 %v1514
  %v2418 = vunpack.c.l.b16 %v1515
  %v2419 = vunpack.c.l.b16 %v1516
  %v2420 = vunpack.c.h.b16 %v1516
  %v2421 = vunpack.c.l.b16 %v1517
  %v2422 = vunpack.c.l.b16 %v1518
  %v2423 = vunpack.c.h.b16 %v1518
  %v2424 = vunpack.c.l.b16 %v1519
  %v2425 = vunpack.c.l.b16 %v1520
  %v2426 = vunpack.c.h.b16 %v1520
  %v2427 = vunpack.c.l.b16 %v1521
  %v2428 = vunpack.c.l.b16 %v1522
  %v2429 = vunpack.c.h.b16 %v1522
  %v2430 = vunpack.c.l.b16 %v1523
  %v2431 = vunpack.c.l.b16 %v1524
  %v2432 = vunpack.c.h.b16 %v1524
  %v2433 = vunpack.c.l.b16 %v1525
  %v2434 = vunpack.c.l.b16 %v1526
  %v2435 = vunpack.c.h.b16 %v1526
  %v2436 = vunpack.c.l.b16 %v1527
  %v2437 = vunpack.c.l.b16 %v1528
  %v2438 = vunpack.c.h.b16 %v1528
  %v2439 = vunpack.c.l.b16 %v1529
  %v2440 = vunpack.c.l.b16 %v1530
  %v2441 = vunpack.c.h.b16 %v1530
  %v2442 = vunpack.c.l.b16 %v1531
  %v2443 = vunpack.c.l.b16 %v1532
  %v2444 = vunpack.c.h.b16 %v1532
  %v2445 = vunpack.c.l.b16 %v1533
  %v2446 = vunpack.c.l.b16 %v1534
  %v2447 = vunpack.c.h.b16 %v1534
  %v2448 = vunpack.c.l.b16 %v1535
  %v2449 = vunpack.c.l.b16 %v1536
  %v2450 = vunpack.c.h.b16 %v1536
  %v2451 = vunpack.c.l.b16 %v1537
  %v2452 = vunpack.c.l.b16 %v1538
  %v2453 = vunpack.c.h.b16 %v1538
  %v2454 = vunpack.c.l.b16 %v1539
  %v2455 = vunpack.c.l.b16 %v1540
  %v2456 = vunpack.c.h.b16 %v1540
  %v2457 = vunpack.c.l.b16 %v1541
  %v2458 = vunpack.c.l.b16 %v1542
  %v2459 = vunpack.c.h.b16 %v1542
  %v2460 = vunpack.c.l.b16 %v1543
  %v2461 = vunpack.c.l.b16 %v1544
  %v2462 = vunpack.c.h.b16 %v1544
  %v2463 = vunpack.c.l.b16 %v1545
  %v2464 = vunpack.c.l.b16 %v1546
  %v2465 = vunpack.c.h.b16 %v1546
  %v2466 = vunpack.c.l.b16 %v1547
  %v2467 = vunpack.c.l.b16 %v1548
  %v2468 = vunpack.c.h.b16 %v1548
  %v2469 = vunpack.c.l.b16 %v1549
  %v2470 = vunpack.c.l.b16 %v1550
  %v2471 = vunpack.c.h.b16 %v1550
  %v2472 = vunpack.c.l.b16 %v1551
  %v2473 = vunpack.c.l.b16 %v1552
  %v2474 = vunpack.c.h.b16 %v1552
  %v2475 = vunpack.c.l.b16 %v1553
  %v2476 = vunpack.c.l.b16 %v1554
  %v2477 = vunpack.c.h.b16 %v1554
  %v2478 = vunpack.c.l.b16 %v1555
  %v2479 = vunpack.c.l.b16 %v1556
  %v2480 = vunpack.c.h.b16 %v1556
  %v2481 = vunpack.c.l.b16 %v1557
  %v2482 = vunpack.c.l.b16 %v1558
  %v2483 = vunpack.c.h.b16 %v1558
  %v2484 = vunpack.c.l.b16 %v1559
  %v2485 = vunpack.c.l.b16 %v1560
  %v2486 = vunpack.c.h.b16 %v1560
  %v2487 = vunpack.c.l.b16 %v1561
  %v2488 = vunpack.c.l.b16 %v1562
  %v2489 = vunpack.c.h.b16 %v1562
  %v2490 = vunpack.c.l.b16 %v1563
  %v2491 = vunpack.c.l.b16 %v1564
  %v2492 = vunpack.c.h.b16 %v1564
  %v2493 = vunpack.c.l.b16 %v1565
  %v2494 = vunpack.c.l.b16 %v1566
  %v2495 = vunpack.c.h.b16 %v1566
  %v2496 = vunpack.c.l.b16 %v1567
  %v2497 = vpack.c.b16 %v2023, %v2020
  %v2498 = vpack.c.b16 %v2024, %v2021
  %v2499 = vpack.c.b16 %v2025, %v2022
  %v2500 = vpack.c.b16 %v2029, %v2026
  %v2501 = vpack.c.b16 %v2030, %v2027
  %v2502 = vpack.c.b16 %v2031, %v2028
  %v2503 = vpack.c.b16 %v2035, %v2032
  %v2504 = vpack.c.b16 %v2036, %v2033
  %v2505 = vpack.c.b16 %v2037, %v2034
  %v2506 = vpack.c.b16 %v2041, %v2038
  %v2507 = vpack.c.b16 %v2042, %v2039
  %v2508 = vpack.c.b16 %v2043, %v2040
  %v2509 = vpack.c.b16 %v2047, %v2044
  %v2510 = vpack.c.b16 %v2048, %v2045
  %v2511 = vpack.c.b16 %v2049, %v2046
  %v2512 = vpack.c.b16 %v2053, %v2050
  %v2513 = vpack.c.b16 %v2054, %v2051
  %v2514 = vpack.c.b16 %v2055, %v2052
  %v2515 = vpack.c.b16 %v2059, %v2056
  %v2516 = vpack.c.b16 %v2060, %v2057
  %v2517 = vpack.c.b16 %v2061, %v2058
  %v2518 = vpack.c.b16 %v2065, %v2062
  %v2519 = vpack.c.b16 %v2066, %v2063
  %v2520 = vpack.c.b16 %v2067, %v2064
  %v2521 = vpack.c.b16 %v2071, %v2068
  %v2522 = vpack.c.b16 %v2072, %v2069
  %v2523 = vpack.c.b16 %v2073, %v2070
  %v2524 = vpack.c.b16 %v2077, %v2074
  %v2525 = vpack.c.b16 %v2078, %v2075
  %v2526 = vpack.c.b16 %v2079, %v2076
  %v2527 = vpack.c.b16 %v2083, %v2080
  %v2528 = vpack.c.b16 %v2084, %v2081
  %v2529 = vpack.c.b16 %v2085, %v2082
  %v2530 = vpack.c.b16 %v2089, %v2086
  %v2531 = vpack.c.b16 %v2090, %v2087
  %v2532 = vpack.c.b16 %v2091, %v2088
  %v2533 = vpack.c.b16 %v2095, %v2092
  %v2534 = vpack.c.b16 %v2096, %v2093
  %v2535 = vpack.c.b16 %v2097, %v2094
  %v2536 = vpack.c.b16 %v2101, %v2098
  %v2537 = vpack.c.b16 %v2102, %v2099
  %v2538 = vpack.c.b16 %v2103, %v2100
  %v2539 = vpack.c.b16 %v2107, %v2104
  %v2540 = vpack.c.b16 %v2108, %v2105
  %v2541 = vpack.c.b16 %v2109, %v2106
  %v2542 = vpack.c.b16 %v2113, %v2110
  %v2543 = vpack.c.b16 %v2114, %v2111
  %v2544 = vpack.c.b16 %v2115, %v2112
  %v2545 = vpack.c.b16 %v2119, %v2116
  %v2546 = vpack.c.b16 %v2120, %v2117
  %v2547 = vpack.c.b16 %v2121, %v2118
  %v2548 = vpack.c.b16 %v2125, %v2122
  %v2549 = vpack.c.b16 %v2126, %v2123
  %v2550 = vpack.c.b16 %v2127, %v2124
  %v2551 = vpack.c.b16 %v2131, %v2128
  %v2552 = vpack.c.b16 %v2132, %v2129
  %v2553 = vpack.c.b16 %v2133, %v2130
  %v2554 = vpack.c.b16 %v2137, %v2134
  %v2555 = vpack.c.b16 %v2138, %v2135
  %v2556 = vpack.c.b16 %v2139, %v2136
  %v2557 = vpack.c.b16 %v2143, %v2140
  %v2558 = vpack.c.b16 %v2144, %v2141
  %v2559 = vpack.c.b16 %v2145, %v2142
  %v2560 = vpack.c.b16 %v2149, %v2146
  %v2561 = vpack.c.b16 %v2150, %v2147
  %v2562 = vpack.c.b16 %v2151, %v2148
  %v2563 = vpack.c.b16 %v2155, %v2152
  %v2564 = vpack.c.b16 %v2156, %v2153
  %v2565 = vpack.c.b16 %v2157, %v2154
  %v2566 = vpack.c.b16 %v2161, %v2158
  %v2567 = vpack.c.b16 %v2162, %v2159
  %v2568 = vpack.c.b16 %v2163, %v2160
  %v2569 = vpack.c.b16 %v2167, %v2164
  %v2570 = vpack.c.b16 %v2168, %v2165
  %v2571 = vpack.c.b16 %v2169, %v2166
  %v2572 = vpack.c.b16 %v2173, %v2170
  %v2573 = vpack.c.b16 %v2174, %v2171
  %v2574 = vpack.c.b16 %v2175, %v2172
  %v2575 = vpack.c.b16 %v2179, %v2176
  %v2576 = vpack.c.b16 %v2180, %v2177
  %v2577 = vpack.c.b16 %v2181, %v2178
  %v2578 = vpack.c.b16 %v2185, %v2182
  %v2579 = vpack.c.b16 %v2186, %v2183
  %v2580 = vpack.c.b16 %v2187, %v2184
  %v2581 = vpack.c.b16 %v2191, %v2188
  %v2582 = vpack.c.b16 %v2192, %v2189
  %v2583 = vpack.c.b16 %v2193, %v2190
  %v2584 = vpack.c.b16 %v2197, %v2194
  %v2585 = vpack.c.b16 %v2198, %v2195
  %v2586 = vpack.c.b16 %v2199, %v2196
  %v2587 = vpack.c.b16 %v2203, %v2200
  %v2588 = vpack.c.b16 %v2204, %v2201
  %v2589 = vpack.c.b16 %v2205, %v2202
  %v2590 = vpack.c.b16 %v2209, %v2206
  %v2591 = vpack.c.b16 %v2210, %v2207
  %v2592 = vpack.c.b16 %v2211, %v2208
  %v2593 = vpack.c.b16 %v2215, %v2212
  %v2594 = vpack.c.b16 %v2216, %v2213
  %v2595 = vpack.c.b16 %v2217, %v2214
  %v2596 = vpack.c.b16 %v2221, %v2218
  %v2597 = vpack.c.b16 %v2222, %v2219
  %v2598 = vpack.c.b16 %v2223, %v2220
  %v2599 = vpack.c.b16 %v2227, %v2224
  %v2600 = vpack.c.b16 %v2228, %v2225
  %v2601 = vpack.c.b16 %v2229, %v2226
  %v2602 = vpack.c.b16 %v2233, %v2230
  %v2603 = vpack.c.b16 %v2234, %v2231
  %v2604 = vpack.c.b16 %v2235, %v2232
  %v2605 = vpack.c.b16 %v2239, %v2236
  %v2606 = vpack.c.b16 %v2240, %v2237
  %v2607 = vpack.c.b16 %v2241, %v2238
  %v2608 = vpack.c.b16 %v2245, %v2242
  %v2609 = vpack.c.b16 %v2246, %v2243
  %v2610 = vpack.c.b16 %v2247, %v2244
  %v2611 = vpack.c.b16 %v2251, %v2248
  %v2612 = vpack.c.b16 %v2252, %v2249
  %v2613 = vpack.c.b16 %v2253, %v2250
  %v2614 = vpack.c.b16 %v2257, %v2254
  %v2615 = vpack.c.b16 %v2258, %v2255
  %v2616 = vpack.c.b16 %v2259, %v2256
  %v2617 = vpack.c.b16 %v2263, %v2260
  %v2618 = vpack.c.b16 %v2264, %v2261
  %v2619 = vpack.c.b16 %v2265, %v2262
  %v2620 = vpack.c.b16 %v2269, %v2266
  %v2621 = vpack.c.b16 %v2270, %v2267
  %v2622 = vpack.c.b16 %v2271, %v2268
  %v2623 = vpack.c.b16 %v2275, %v2272
  %v2624 = vpack.c.b16 %v2276, %v2273
  %v2625 = vpack.c.b16 %v2277, %v2274
  %v2626 = vpack.c.b16 %v2281, %v2278
  %v2627 = vpack.c.b16 %v2282, %v2279
  %v2628 = vpack.c.b16 %v2283, %v2280
  %v2629 = vpack.c.b16 %v2287, %v2284
  %v2630 = vpack.c.b16 %v2288, %v2285
  %v2631 = vpack.c.b16 %v2289, %v2286
  %v2632 = vpack.c.b16 %v2293, %v2290
  %v2633 = vpack.c.b16 %v2294, %v2291
  %v2634 = vpack.c.b16 %v2295, %v2292
  %v2635 = vpack.c.b16 %v2299, %v2296
  %v2636 = vpack.c.b16 %v2300, %v2297
  %v2637 = vpack.c.b16 %v2301, %v2298
  %v2638 = vpack.c.b16 %v2305, %v2302
  %v2639 = vpack.c.b16 %v2306, %v2303
  %v2640 = vpack.c.b16 %v2307, %v2304
  %v2641 = vpack.c.b16 %v2311, %v2308
  %v2642 = vpack.c.b16 %v2312, %v2309
  %v2643 = vpack.c.b16 %v2313, %v2310
  %v2644 = vpack.c.b16 %v2317, %v2314
  %v2645 = vpack.c.b16 %v2318, %v2315
  %v2646 = vpack.c.b16 %v2319, %v2316
  %v2647 = vpack.c.b16 %v2323, %v2320
  %v2648 = vpack.c.b16 %v2324, %v2321
  %v2649 = vpack.c.b16 %v2325, %v2322
  %v2650 = vpack.c.b16 %v2329, %v2326
  %v2651 = vpack.c.b16 %v2330, %v2327
  %v2652 = vpack.c.b16 %v2331, %v2328
  %v2653 = vpack.c.b16 %v2335, %v2332
  %v2654 = vpack.c.b16 %v2336, %v2333
  %v2655 = vpack.c.b16 %v2337, %v2334
  %v2656 = vpack.c.b16 %v2341, %v2338
  %v2657 = vpack.c.b16 %v2342, %v2339
  %v2658 = vpack.c.b16 %v2343, %v2340
  %v2659 = vpack.c.b16 %v2347, %v2344
  %v2660 = vpack.c.b16 %v2348, %v2345
  %v2661 = vpack.c.b16 %v2349, %v2346
  %v2662 = vpack.c.b16 %v2353, %v2350
  %v2663 = vpack.c.b16 %v2354, %v2351
  %v2664 = vpack.c.b16 %v2355, %v2352
  %v2665 = vpack.c.b16 %v2359, %v2356
  %v2666 = vpack.c.b16 %v2360, %v2357
  %v2667 = vpack.c.b16 %v2361, %v2358
  %v2668 = vpack.c.b16 %v2365, %v2362
  %v2669 = vpack.c.b16 %v2366, %v2363
  %v2670 = vpack.c.b16 %v2367, %v2364
  %v2671 = vpack.c.b16 %v2371, %v2368
  %v2672 = vpack.c.b16 %v2372, %v2369
  %v2673 = vpack.c.b16 %v2373, %v2370
  %v2674 = vpack.c.b16 %v2377, %v2374
  %v2675 = vpack.c.b16 %v2378, %v2375
  %v2676 = vpack.c.b16 %v2379, %v2376
  %v2677 = vpack.c.b16 %v2383, %v2380
  %v2678 = vpack.c.b16 %v2384, %v2381
  %v2679 = vpack.c.b16 %v2385, %v2382
  %v2680 = vpack.c.b16 %v2389, %v2386
  %v2681 = vpack.c.b16 %v2390, %v2387
  %v2682 = vpack.c.b16 %v2391, %v2388
  %v2683 = vpack.c.b16 %v2395, %v2392
  %v2684 = vpack.c.b16 %v2396, %v2393
  %v2685 = vpack.c.b16 %v2397, %v2394
  %v2686 = vpack.c.b16 %v2401, %v2398
  %v2687 = vpack.c.b16 %v2402, %v2399
  %v2688 = vpack.c.b16 %v2403, %v2400
  %v2689 = vpack.c.b16 %v2407, %v2404
  %v2690 = vpack.c.b16 %v2408, %v2405
  %v2691 = vpack.c.b16 %v2409, %v2406
  %v2692 = vpack.c.b16 %v2413, %v2410
  %v2693 = vpack.c.b16 %v2414, %v2411
  %v2694 = vpack.c.b16 %v2415, %v2412
  %v2695 = vpack.c.b16 %v2419, %v2416
  %v2696 = vpack.c.b16 %v2420, %v2417
  %v2697 = vpack.c.b16 %v2421, %v2418
  %v2698 = vpack.c.b16 %v2425, %v2422
  %v2699 = vpack.c.b16 %v2426, %v2423
  %v2700 = vpack.c.b16 %v2427, %v2424
  %v2701 = vpack.c.b16 %v2431, %v2428
  %v2702 = vpack.c.b16 %v2432, %v2429
  %v2703 = vpack.c.b16 %v2433, %v2430
  %v2704 = vpack.c.b16 %v2437, %v2434
  %v2705 = vpack.c.b16 %v2438, %v2435
  %v2706 = vpack.c.b16 %v2439, %v2436
  %v2707 = vpack.c.b16 %v2443, %v2440
  %v2708 = vpack.c.b16 %v2444, %v2441
  %v2709 = vpack.c.b16 %v2445, %v2442
  %v2710 = vpack.c.b16 %v2449, %v2446
  %v2711 = vpack.c.b16 %v2450, %v2447
  %v2712 = vpack.c.b16 %v2451, %v2448
  %v2713 = vpack.c.b16 %v2455, %v2452
  %v2714 = vpack.c.b16 %v2456, %v2453
  %v2715 = vpack.c.b16 %v2457, %v2454
  %v2716 = vpack.c.b16 %v2461, %v2458
  %v2717 = vpack.c.b16 %v2462, %v2459
  %v2718 = vpack.c.b16 %v2463, %v2460
  %v2719 = vpack.c.b16 %v2467, %v2464
  %v2720 = vpack.c.b16 %v2468, %v2465
  %v2721 = vpack.c.b16 %v2469, %v2466
  %v2722 = vpack.c.b16 %v2473, %v2470
  %v2723 = vpack.c.b16 %v2474, %v2471
  %v2724 = vpack.c.b16 %v2475, %v2472
  %v2725 = vpack.c.b16 %v2479, %v2476
  %v2726 = vpack.c.b16 %v2480, %v2477
  %v2727 = vpack.c.b16 %v2481, %v2478
  %v2728 = vpack.c.b16 %v2485, %v2482
  %v2729 = vpack.c.b16 %v2486, %v2483
  %v2730 = vpack.c.b16 %v2487, %v2484
  %v2731 = vpack.c.b16 %v2491, %v2488
  %v2732 = vpack.c.b16 %v2492, %v2489
  %v2733 = vpack.c.b16 %v2493, %v2490
  %v2734 = vpack.c.b16 %v2494, %v2494
  %v2735 = vpack.c.b16 %v2495, %v2495
  %v2736 = vpack.c.b16 %v2496, %v2496
  %vm2974 = vcmask 973824
  %v2976 = vsel %vm2974, %v1701, 0
  %vm2978 = vcmask 1042432
  %v2979 = vsel %vm2978, 4294967295, 65535
  %v2980 = vsel %vm800, %v2979, 0
  %v2982 = vand.u32 %v2734, %v2980
  %v2985 = vand.u32 %v2735, %v2980
  %v2988 = vand.u32 %v2736, %v2980
  %2990 = vmatprep.subr.bf16.mxu0 %v2498
  %2991 = vmatpush1.bf16.msra.mxu0 %v2497
  %2992 = vmatprep.subr.bf16.mxu0 %v2501
  %2993 = vmatpush1.bf16.msra.mxu0 %v2500
  %2994 = vmatprep.subr.bf16.mxu0 %v2504
  %2995 = vmatpush1.bf16.msra.mxu0 %v2503
  %2996 = vmatprep.subr.bf16.mxu0 %v2507
  %2997 = vmatpush1.bf16.msra.mxu0 %v2506
  %2998 = vmatprep.subr.bf16.mxu0 %v2510
  %2999 = vmatpush1.bf16.msra.mxu0 %v2509
  %3000 = vmatprep.subr.bf16.mxu0 %v2513
  %3001 = vmatpush1.bf16.msra.mxu0 %v2512
  %3002 = vmatprep.subr.bf16.mxu0 %v2516
  %3003 = vmatpush1.bf16.msra.mxu0 %v2515
  %3004 = vmatprep.subr.bf16.mxu0 %v2519
  %3005 = vmatpush1.bf16.msra.mxu0 %v2518
  %3006 = vmatprep.subr.bf16.mxu0 %v2522
  %3007 = vmatpush1.bf16.msra.mxu0 %v2521
  %3008 = vmatprep.subr.bf16.mxu0 %v2525
  %3009 = vmatpush1.bf16.msra.mxu0 %v2524
  %3010 = vmatprep.subr.bf16.mxu0 %v2528
  %3011 = vmatpush1.bf16.msra.mxu0 %v2527
  %3012 = vmatprep.subr.bf16.mxu0 %v2531
  %3013 = vmatpush1.bf16.msra.mxu0 %v2530
  %3014 = vmatprep.subr.bf16.mxu0 %v2534
  %3015 = vmatpush1.bf16.msra.mxu0 %v2533
  %3016 = vmatprep.subr.bf16.mxu0 %v2537
  %3017 = vmatpush1.bf16.msra.mxu0 %v2536
  %3018 = vmatprep.subr.bf16.mxu0 %v2540
  %3019 = vmatpush1.bf16.msra.mxu0 %v2539
  %3020 = vmatprep.subr.bf16.mxu0 %v2543
  %3021 = vmatpush1.bf16.msra.mxu0 %v2542
  %3022 = vmatprep.mubr.bf16.mxu0 %v1693
  %3023 = vmatmul.mubr.bf16.gmra.mrb[0].mxu0 %v1692
  %v3024 = vpop.f32.mrb[0].mxu0
  %v3025 = vadd.f32 0.0, %v3024
  %v3026 = vpop.f32.mrb[0].mxu0
  %v3027 = vadd.f32 0.0, %v3026
  %v3028 = vpop.f32.mrb[0].mxu0
  %v3029 = vpop.f32.mrb[0].mxu0
  %3030 = vdwg.mxu0
  %3031 = vmatprep.subr.bf16.mxu0 %v2546
  %3032 = vmatpush1.bf16.msra.mxu0 %v2545
  %3033 = vmatprep.subr.bf16.mxu0 %v2549
  %3034 = vmatpush1.bf16.msra.mxu0 %v2548
  %3035 = vmatprep.subr.bf16.mxu0 %v2552
  %3036 = vmatpush1.bf16.msra.mxu0 %v2551
  %3037 = vmatprep.subr.bf16.mxu0 %v2555
  %3038 = vmatpush1.bf16.msra.mxu0 %v2554
  %3039 = vmatprep.subr.bf16.mxu0 %v2558
  %3040 = vmatpush1.bf16.msra.mxu0 %v2557
  %3041 = vmatprep.subr.bf16.mxu0 %v2561
  %3042 = vmatpush1.bf16.msra.mxu0 %v2560
  %3043 = vmatprep.subr.bf16.mxu0 %v2564
  %3044 = vmatpush1.bf16.msra.mxu0 %v2563
  %3045 = vmatprep.subr.bf16.mxu0 %v2567
  %3046 = vmatpush1.bf16.msra.mxu0 %v2566
  %3047 = vmatprep.subr.bf16.mxu0 %v2570
  %3048 = vmatpush1.bf16.msra.mxu0 %v2569
  %3049 = vmatprep.subr.bf16.mxu0 %v2573
  %3050 = vmatpush1.bf16.msra.mxu0 %v2572
  %3051 = vmatprep.subr.bf16.mxu0 %v2576
  %3052 = vmatpush1.bf16.msra.mxu0 %v2575
  %3053 = vmatprep.subr.bf16.mxu0 %v2579
  %3054 = vmatpush1.bf16.msra.mxu0 %v2578
  %3055 = vmatprep.subr.bf16.mxu0 %v2582
  %3056 = vmatpush1.bf16.msra.mxu0 %v2581
  %3057 = vmatprep.subr.bf16.mxu0 %v2585
  %3058 = vmatpush1.bf16.msra.mxu0 %v2584
  %3059 = vmatprep.subr.bf16.mxu0 %v2588
  %3060 = vmatpush1.bf16.msra.mxu0 %v2587
  %3061 = vmatprep.subr.bf16.mxu0 %v2591
  %3062 = vmatpush1.bf16.msra.mxu0 %v2590
  %3063 = vmatprep.mubr.bf16.mxu0 %v1695
  %3064 = vmatmul.mubr.bf16.gmra.mrb[0].mxu0 %v1694
  %v3065 = vpop.f32.mrb[0].mxu0
  %v3066 = vadd.f32 %v3025, %v3065
  %v3067 = vpop.f32.mrb[0].mxu0
  %v3068 = vadd.f32 %v3027, %v3067
  %v3069 = vpop.f32.mrb[0].mxu0
  %v3070 = vpop.f32.mrb[0].mxu0
  %3071 = vdwg.mxu0
  %3072 = vmatprep.subr.bf16.mxu0 %v2594
  %3073 = vmatpush1.bf16.msra.mxu0 %v2593
  %3074 = vmatprep.subr.bf16.mxu0 %v2597
  %3075 = vmatpush1.bf16.msra.mxu0 %v2596
  %3076 = vmatprep.subr.bf16.mxu0 %v2600
  %3077 = vmatpush1.bf16.msra.mxu0 %v2599
  %3078 = vmatprep.subr.bf16.mxu0 %v2603
  %3079 = vmatpush1.bf16.msra.mxu0 %v2602
  %3080 = vmatprep.subr.bf16.mxu0 %v2606
  %3081 = vmatpush1.bf16.msra.mxu0 %v2605
  %3082 = vmatprep.subr.bf16.mxu0 %v2609
  %3083 = vmatpush1.bf16.msra.mxu0 %v2608
  %3084 = vmatprep.subr.bf16.mxu0 %v2612
  %3085 = vmatpush1.bf16.msra.mxu0 %v2611
  %3086 = vmatprep.subr.bf16.mxu0 %v2615
  %3087 = vmatpush1.bf16.msra.mxu0 %v2614
  %3088 = vmatprep.subr.bf16.mxu0 %v2618
  %3089 = vmatpush1.bf16.msra.mxu0 %v2617
  %3090 = vmatprep.subr.bf16.mxu0 %v2621
  %3091 = vmatpush1.bf16.msra.mxu0 %v2620
  %3092 = vmatprep.subr.bf16.mxu0 %v2624
  %3093 = vmatpush1.bf16.msra.mxu0 %v2623
  %3094 = vmatprep.subr.bf16.mxu0 %v2627
  %3095 = vmatpush1.bf16.msra.mxu0 %v2626
  %3096 = vmatprep.subr.bf16.mxu0 %v2630
  %3097 = vmatpush1.bf16.msra.mxu0 %v2629
  %3098 = vmatprep.subr.bf16.mxu0 %v2633
  %3099 = vmatpush1.bf16.msra.mxu0 %v2632
  %3100 = vmatprep.subr.bf16.mxu0 %v2636
  %3101 = vmatpush1.bf16.msra.mxu0 %v2635
  %3102 = vmatprep.subr.bf16.mxu0 %v2639
  %3103 = vmatpush1.bf16.msra.mxu0 %v2638
  %3104 = vmatprep.mubr.bf16.mxu0 %v1697
  %3105 = vmatmul.mubr.bf16.gmra.mrb[0].mxu0 %v1696
  %v3106 = vpop.f32.mrb[0].mxu0
  %v3107 = vadd.f32 %v3066, %v3106
  %v3108 = vpop.f32.mrb[0].mxu0
  %v3109 = vadd.f32 %v3068, %v3108
  %v3110 = vpop.f32.mrb[0].mxu0
  %v3111 = vpop.f32.mrb[0].mxu0
  %3112 = vdwg.mxu0
  %3113 = vmatprep.subr.bf16.mxu0 %v2642
  %3114 = vmatpush1.bf16.msra.mxu0 %v2641
  %3115 = vmatprep.subr.bf16.mxu0 %v2645
  %3116 = vmatpush1.bf16.msra.mxu0 %v2644
  %3117 = vmatprep.subr.bf16.mxu0 %v2648
  %3118 = vmatpush1.bf16.msra.mxu0 %v2647
  %3119 = vmatprep.subr.bf16.mxu0 %v2651
  %3120 = vmatpush1.bf16.msra.mxu0 %v2650
  %3121 = vmatprep.subr.bf16.mxu0 %v2654
  %3122 = vmatpush1.bf16.msra.mxu0 %v2653
  %3123 = vmatprep.subr.bf16.mxu0 %v2657
  %3124 = vmatpush1.bf16.msra.mxu0 %v2656
  %3125 = vmatprep.subr.bf16.mxu0 %v2660
  %3126 = vmatpush1.bf16.msra.mxu0 %v2659
  %3127 = vmatprep.subr.bf16.mxu0 %v2663
  %3128 = vmatpush1.bf16.msra.mxu0 %v2662
  %3129 = vmatprep.subr.bf16.mxu0 %v2666
  %3130 = vmatpush1.bf16.msra.mxu0 %v2665
  %3131 = vmatprep.subr.bf16.mxu0 %v2669
  %3132 = vmatpush1.bf16.msra.mxu0 %v2668
  %3133 = vmatprep.subr.bf16.mxu0 %v2672
  %3134 = vmatpush1.bf16.msra.mxu0 %v2671
  %3135 = vmatprep.subr.bf16.mxu0 %v2675
  %3136 = vmatpush1.bf16.msra.mxu0 %v2674
  %3137 = vmatprep.subr.bf16.mxu0 %v2678
  %3138 = vmatpush1.bf16.msra.mxu0 %v2677
  %3139 = vmatprep.subr.bf16.mxu0 %v2681
  %3140 = vmatpush1.bf16.msra.mxu0 %v2680
  %3141 = vmatprep.subr.bf16.mxu0 %v2684
  %3142 = vmatpush1.bf16.msra.mxu0 %v2683
  %3143 = vmatprep.subr.bf16.mxu0 %v2687
  %3144 = vmatpush1.bf16.msra.mxu0 %v2686
  %3145 = vmatprep.mubr.bf16.mxu0 %v1699
  %3146 = vmatmul.mubr.bf16.gmra.mrb[0].mxu0 %v1698
  %v3147 = vpop.f32.mrb[0].mxu0
  %v3148 = vadd.f32 %v3107, %v3147
  %v3149 = vpop.f32.mrb[0].mxu0
  %v3150 = vadd.f32 %v3109, %v3149
  %v3151 = vpop.f32.mrb[0].mxu0
  %v3152 = vpop.f32.mrb[0].mxu0
  %3153 = vdwg.mxu0
  %3154 = vmatprep.subr.bf16.mxu0 %v2690
  %3155 = vmatpush1.bf16.msra.mxu0 %v2689
  %3156 = vmatprep.subr.bf16.mxu0 %v2693
  %3157 = vmatpush1.bf16.msra.mxu0 %v2692
  %3158 = vmatprep.subr.bf16.mxu0 %v2696
  %3159 = vmatpush1.bf16.msra.mxu0 %v2695
  %3160 = vmatprep.subr.bf16.mxu0 %v2699
  %3161 = vmatpush1.bf16.msra.mxu0 %v2698
  %3162 = vmatprep.subr.bf16.mxu0 %v2702
  %3163 = vmatpush1.bf16.msra.mxu0 %v2701
  %3164 = vmatprep.subr.bf16.mxu0 %v2705
  %3165 = vmatpush1.bf16.msra.mxu0 %v2704
  %3166 = vmatprep.subr.bf16.mxu0 %v2708
  %3167 = vmatpush1.bf16.msra.mxu0 %v2707
  %3168 = vmatprep.subr.bf16.mxu0 %v2711
  %3169 = vmatpush1.bf16.msra.mxu0 %v2710
  %3170 = vmatprep.subr.bf16.mxu0 %v2714
  %3171 = vmatpush1.bf16.msra.mxu0 %v2713
  %3172 = vmatprep.subr.bf16.mxu0 %v2717
  %3173 = vmatpush1.bf16.msra.mxu0 %v2716
  %3174 = vmatprep.subr.bf16.mxu0 %v2720
  %3175 = vmatpush1.bf16.msra.mxu0 %v2719
  %3176 = vmatprep.subr.bf16.mxu0 %v2723
  %3177 = vmatpush1.bf16.msra.mxu0 %v2722
  %3178 = vmatprep.subr.bf16.mxu0 %v2726
  %3179 = vmatpush1.bf16.msra.mxu0 %v2725
  %3180 = vmatprep.subr.bf16.mxu0 %v2729
  %3181 = vmatpush1.bf16.msra.mxu0 %v2728
  %3182 = vmatprep.subr.bf16.mxu0 %v2732
  %3183 = vmatpush1.bf16.msra.mxu0 %v2731
  %3184 = vmatprep.subr.bf16.mxu0 %v2985
  %3185 = vmatpush1.bf16.msra.mxu0 %v2982
  %3186 = vmatprep.mubr.bf16.mxu0 %v2976
  %3187 = vmatmul.mubr.bf16.gmra.mrb[0].mxu0 %v1700
  %v3188 = vpop.f32.mrb[0].mxu0
  %v3189 = vadd.f32 %v3148, %v3188
  %v3190 = vpop.f32.mrb[0].mxu0
  %v3191 = vadd.f32 %v3150, %v3190
  %v3192 = vpop.f32.mrb[0].mxu0
  %v3193 = vpop.f32.mrb[0].mxu0
  %3194 = vdwg.mxu0
  %3195 = vmatprep.subr.bf16.mxu0 0
  %3196 = vmatpush1.bf16.msra.mxu0 %v2499
  %3197 = vmatprep.subr.bf16.mxu0 0
  %3198 = vmatpush1.bf16.msra.mxu0 %v2502
  %3199 = vmatprep.subr.bf16.mxu0 0
  %3200 = vmatpush1.bf16.msra.mxu0 %v2505
  %3201 = vmatprep.subr.bf16.mxu0 0
  %3202 = vmatpush1.bf16.msra.mxu0 %v2508
  %3203 = vmatprep.subr.bf16.mxu0 0
  %3204 = vmatpush1.bf16.msra.mxu0 %v2511
  %3205 = vmatprep.subr.bf16.mxu0 0
  %3206 = vmatpush1.bf16.msra.mxu0 %v2514
  %3207 = vmatprep.subr.bf16.mxu0 0
  %3208 = vmatpush1.bf16.msra.mxu0 %v2517
  %3209 = vmatprep.subr.bf16.mxu0 0
  %3210 = vmatpush1.bf16.msra.mxu0 %v2520
  %3211 = vmatprep.subr.bf16.mxu0 0
  %3212 = vmatpush1.bf16.msra.mxu0 %v2523
  %3213 = vmatprep.subr.bf16.mxu0 0
  %3214 = vmatpush1.bf16.msra.mxu0 %v2526
  %3215 = vmatprep.subr.bf16.mxu0 0
  %3216 = vmatpush1.bf16.msra.mxu0 %v2529
  %3217 = vmatprep.subr.bf16.mxu0 0
  %3218 = vmatpush1.bf16.msra.mxu0 %v2532
  %3219 = vmatprep.subr.bf16.mxu0 0
  %3220 = vmatpush1.bf16.msra.mxu0 %v2535
  %3221 = vmatprep.subr.bf16.mxu0 0
  %3222 = vmatpush1.bf16.msra.mxu0 %v2538
  %3223 = vmatprep.subr.bf16.mxu0 0
  %3224 = vmatpush1.bf16.msra.mxu0 %v2541
  %3225 = vmatprep.subr.bf16.mxu0 0
  %3226 = vmatpush1.bf16.msra.mxu0 %v2544
  %3227 = vmatprep.mubr.bf16.mxu0 %v1693
  %3228 = vmatmul.mubr.bf16.gmra.mrb[0].mxu0 %v1692
  %v3229 = vpop.f32.mrb[0].mxu0
  %v3230 = vadd.f32 0.0, %v3229
  %v3231 = vpop.f32.mrb[0].mxu0
  %v3232 = vpop.f32.mrb[0].mxu0
  %v3233 = vpop.f32.mrb[0].mxu0
  %3234 = vdwg.mxu0
  %3235 = vmatprep.subr.bf16.mxu0 0
  %3236 = vmatpush1.bf16.msra.mxu0 %v2547
  %3237 = vmatprep.subr.bf16.mxu0 0
  %3238 = vmatpush1.bf16.msra.mxu0 %v2550
  %3239 = vmatprep.subr.bf16.mxu0 0
  %3240 = vmatpush1.bf16.msra.mxu0 %v2553
  %3241 = vmatprep.subr.bf16.mxu0 0
  %3242 = vmatpush1.bf16.msra.mxu0 %v2556
  %3243 = vmatprep.subr.bf16.mxu0 0
  %3244 = vmatpush1.bf16.msra.mxu0 %v2559
  %3245 = vmatprep.subr.bf16.mxu0 0
  %3246 = vmatpush1.bf16.msra.mxu0 %v2562
  %3247 = vmatprep.subr.bf16.mxu0 0
  %3248 = vmatpush1.bf16.msra.mxu0 %v2565
  %3249 = vmatprep.subr.bf16.mxu0 0
  %3250 = vmatpush1.bf16.msra.mxu0 %v2568
  %3251 = vmatprep.subr.bf16.mxu0 0
  %3252 = vmatpush1.bf16.msra.mxu0 %v2571
  %3253 = vmatprep.subr.bf16.mxu0 0
  %3254 = vmatpush1.bf16.msra.mxu0 %v2574
  %3255 = vmatprep.subr.bf16.mxu0 0
  %3256 = vmatpush1.bf16.msra.mxu0 %v2577
  %3257 = vmatprep.subr.bf16.mxu0 0
  %3258 = vmatpush1.bf16.msra.mxu0 %v2580
  %3259 = vmatprep.subr.bf16.mxu0 0
  %3260 = vmatpush1.bf16.msra.mxu0 %v2583
  %3261 = vmatprep.subr.bf16.mxu0 0
  %3262 = vmatpush1.bf16.msra.mxu0 %v2586
  %3263 = vmatprep.subr.bf16.mxu0 0
  %3264 = vmatpush1.bf16.msra.mxu0 %v2589
  %3265 = vmatprep.subr.bf16.mxu0 0
  %3266 = vmatpush1.bf16.msra.mxu0 %v2592
  %3267 = vmatprep.mubr.bf16.mxu0 %v1695
  %3268 = vmatmul.mubr.bf16.gmra.mrb[0].mxu0 %v1694
  %v3269 = vpop.f32.mrb[0].mxu0
  %v3270 = vadd.f32 %v3230, %v3269
  %v3271 = vpop.f32.mrb[0].mxu0
  %v3272 = vpop.f32.mrb[0].mxu0
  %v3273 = vpop.f32.mrb[0].mxu0
  %3274 = vdwg.mxu0
  %3275 = vmatprep.subr.bf16.mxu0 0
  %3276 = vmatpush1.bf16.msra.mxu0 %v2595
  %3277 = vmatprep.subr.bf16.mxu0 0
  %3278 = vmatpush1.bf16.msra.mxu0 %v2598
  %3279 = vmatprep.subr.bf16.mxu0 0
  %3280 = vmatpush1.bf16.msra.mxu0 %v2601
  %3281 = vmatprep.subr.bf16.mxu0 0
  %3282 = vmatpush1.bf16.msra.mxu0 %v2604
  %3283 = vmatprep.subr.bf16.mxu0 0
  %3284 = vmatpush1.bf16.msra.mxu0 %v2607
  %3285 = vmatprep.subr.bf16.mxu0 0
  %3286 = vmatpush1.bf16.msra.mxu0 %v2610
  %3287 = vmatprep.subr.bf16.mxu0 0
  %3288 = vmatpush1.bf16.msra.mxu0 %v2613
  %3289 = vmatprep.subr.bf16.mxu0 0
  %3290 = vmatpush1.bf16.msra.mxu0 %v2616
  %3291 = vmatprep.subr.bf16.mxu0 0
  %3292 = vmatpush1.bf16.msra.mxu0 %v2619
  %3293 = vmatprep.subr.bf16.mxu0 0
  %3294 = vmatpush1.bf16.msra.mxu0 %v2622
  %3295 = vmatprep.subr.bf16.mxu0 0
  %3296 = vmatpush1.bf16.msra.mxu0 %v2625
  %3297 = vmatprep.subr.bf16.mxu0 0
  %3298 = vmatpush1.bf16.msra.mxu0 %v2628
  %3299 = vmatprep.subr.bf16.mxu0 0
  %3300 = vmatpush1.bf16.msra.mxu0 %v2631
  %3301 = vmatprep.subr.bf16.mxu0 0
  %3302 = vmatpush1.bf16.msra.mxu0 %v2634
  %3303 = vmatprep.subr.bf16.mxu0 0
  %3304 = vmatpush1.bf16.msra.mxu0 %v2637
  %3305 = vmatprep.subr.bf16.mxu0 0
  %3306 = vmatpush1.bf16.msra.mxu0 %v2640
  %3307 = vmatprep.mubr.bf16.mxu0 %v1697
  %3308 = vmatmul.mubr.bf16.gmra.mrb[0].mxu0 %v1696
  %v3309 = vpop.f32.mrb[0].mxu0
  %v3310 = vadd.f32 %v3270, %v3309
  %v3311 = vpop.f32.mrb[0].mxu0
  %v3312 = vpop.f32.mrb[0].mxu0
  %v3313 = vpop.f32.mrb[0].mxu0
  %3314 = vdwg.mxu0
  %3315 = vmatprep.subr.bf16.mxu0 0
  %3316 = vmatpush1.bf16.msra.mxu0 %v2643
  %3317 = vmatprep.subr.bf16.mxu0 0
  %3318 = vmatpush1.bf16.msra.mxu0 %v2646
  %3319 = vmatprep.subr.bf16.mxu0 0
  %3320 = vmatpush1.bf16.msra.mxu0 %v2649
  %3321 = vmatprep.subr.bf16.mxu0 0
  %3322 = vmatpush1.bf16.msra.mxu0 %v2652
  %3323 = vmatprep.subr.bf16.mxu0 0
  %3324 = vmatpush1.bf16.msra.mxu0 %v2655
  %3325 = vmatprep.subr.bf16.mxu0 0
  %3326 = vmatpush1.bf16.msra.mxu0 %v2658
  %3327 = vmatprep.subr.bf16.mxu0 0
  %3328 = vmatpush1.bf16.msra.mxu0 %v2661
  %3329 = vmatprep.subr.bf16.mxu0 0
  %3330 = vmatpush1.bf16.msra.mxu0 %v2664
  %3331 = vmatprep.subr.bf16.mxu0 0
  %3332 = vmatpush1.bf16.msra.mxu0 %v2667
  %3333 = vmatprep.subr.bf16.mxu0 0
  %3334 = vmatpush1.bf16.msra.mxu0 %v2670
  %3335 = vmatprep.subr.bf16.mxu0 0
  %3336 = vmatpush1.bf16.msra.mxu0 %v2673
  %3337 = vmatprep.subr.bf16.mxu0 0
  %3338 = vmatpush1.bf16.msra.mxu0 %v2676
  %3339 = vmatprep.subr.bf16.mxu0 0
  %3340 = vmatpush1.bf16.msra.mxu0 %v2679
  %3341 = vmatprep.subr.bf16.mxu0 0
  %3342 = vmatpush1.bf16.msra.mxu0 %v2682
  %3343 = vmatprep.subr.bf16.mxu0 0
  %3344 = vmatpush1.bf16.msra.mxu0 %v2685
  %3345 = vmatprep.subr.bf16.mxu0 0
  %3346 = vmatpush1.bf16.msra.mxu0 %v2688
  %3347 = vmatprep.mubr.bf16.mxu0 %v1699
  %3348 = vmatmul.mubr.bf16.gmra.mrb[0].mxu0 %v1698
  %v3349 = vpop.f32.mrb[0].mxu0
  %v3350 = vadd.f32 %v3310, %v3349
  %v3351 = vpop.f32.mrb[0].mxu0
  %v3352 = vpop.f32.mrb[0].mxu0
  %v3353 = vpop.f32.mrb[0].mxu0
  %3354 = vdwg.mxu0
  %3355 = vmatprep.subr.bf16.mxu0 0
  %3356 = vmatpush1.bf16.msra.mxu0 %v2691
  %3357 = vmatprep.subr.bf16.mxu0 0
  %3358 = vmatpush1.bf16.msra.mxu0 %v2694
  %3359 = vmatprep.subr.bf16.mxu0 0
  %3360 = vmatpush1.bf16.msra.mxu0 %v2697
  %3361 = vmatprep.subr.bf16.mxu0 0
  %3362 = vmatpush1.bf16.msra.mxu0 %v2700
  %3363 = vmatprep.subr.bf16.mxu0 0
  %3364 = vmatpush1.bf16.msra.mxu0 %v2703
  %3365 = vmatprep.subr.bf16.mxu0 0
  %3366 = vmatpush1.bf16.msra.mxu0 %v2706
  %3367 = vmatprep.subr.bf16.mxu0 0
  %3368 = vmatpush1.bf16.msra.mxu0 %v2709
  %3369 = vmatprep.subr.bf16.mxu0 0
  %3370 = vmatpush1.bf16.msra.mxu0 %v2712
  %3371 = vmatprep.subr.bf16.mxu0 0
  %3372 = vmatpush1.bf16.msra.mxu0 %v2715
  %3373 = vmatprep.subr.bf16.mxu0 0
  %3374 = vmatpush1.bf16.msra.mxu0 %v2718
  %3375 = vmatprep.subr.bf16.mxu0 0
  %3376 = vmatpush1.bf16.msra.mxu0 %v2721
  %3377 = vmatprep.subr.bf16.mxu0 0
  %3378 = vmatpush1.bf16.msra.mxu0 %v2724
  %3379 = vmatprep.subr.bf16.mxu0 0
  %3380 = vmatpush1.bf16.msra.mxu0 %v2727
  %3381 = vmatprep.subr.bf16.mxu0 0
  %3382 = vmatpush1.bf16.msra.mxu0 %v2730
  %3383 = vmatprep.subr.bf16.mxu0 0
  %3384 = vmatpush1.bf16.msra.mxu0 %v2733
  %3385 = vmatprep.subr.bf16.mxu0 0
  %3386 = vmatpush1.bf16.msra.mxu0 %v2988
  %3387 = vmatprep.mubr.bf16.mxu0 %v2976
  %3388 = vmatmul.mubr.bf16.gmra.mrb[0].mxu0 %v1700
  %v3389 = vpop.f32.mrb[0].mxu0
  %v3390 = vadd.f32 %v3350, %v3389
  %v3391 = vpop.f32.mrb[0].mxu0
  %v3392 = vpop.f32.mrb[0].mxu0
  %v3393 = vpop.f32.mrb[0].mxu0
  %3394 = vdwg.mxu0
  %v3395 = vpack.c.bf16 %v3189, %v3189
  %v3396 = vpack.c.bf16 %v3191, %v3191
  %v3397 = vpack.c.bf16 %v3390, %v3390
  %v3401 = vunpack.c.l.b16 %v3395
  %v3402 = vunpack.c.l.b16 %v3396
  %v3403 = vunpack.c.l.b16 %v3397
  %v3404 = vpack.c.b16 %v3402, %v3401
  %v3405 = vpack.c.b16 %v3403, %v3403
  %3408 = vst [vmem:[#allocation3] sm:$0xff] %v3404
  %vm3409 = vcmask 44032
  %3410 = vst.msk [vmem:[#allocation3 + $0x8] sm:$0xf] %vm3409, %v3405
  %3411 = vrot.lane.b32.xlu0 %v3404, 127
  %v3412 = vpop.permute.xlu0 %3411
  %3413 = vrot.lane.b32.xlu0 %v3405, 127
  %v3414 = vpop.permute.xlu0 %3413
  %v3415 = vrot.slane %v3412, 4
  %v3416 = vrot.slane %v3414, 4
  %v3417 = vsel %vm94, %v3415, %v3416
  %v3418 = vsel %vm96, %v3412, %v3417
  %3421 = vst [vmem:[#allocation3 + $0xc] sm:$0xff] %v3418
  %3422 = vst.msk [vmem:[#allocation3 + $0x14] sm:$0xf] %vm3409, %v3414
  %3423 = vrot.lane.b32.xlu0 %v3404, 126
  %v3424 = vpop.permute.xlu0 %3423
  %3425 = vrot.lane.b32.xlu0 %v3405, 126
  %v3426 = vpop.permute.xlu0 %3425
  %v3427 = vrot.slane %v3424, 4
  %v3428 = vrot.slane %v3426, 4
  %v3429 = vsel %vm94, %v3427, %v3428
  %v3430 = vsel %vm149, %v3424, %v3429
  %3433 = vst [vmem:[#allocation3 + $0x18] sm:$0xff] %v3430
  %3434 = vst.msk [vmem:[#allocation3 + $0x20] sm:$0xf] %vm3409, %v3426
  %3435 = vrot.lane.b32.xlu0 %v3404, 116
  %v3436 = vpop.permute.xlu0 %3435
  %3437 = vrot.lane.b32.xlu0 %v3405, 116
  %v3438 = vpop.permute.xlu0 %3437
  %v3439 = vrot.slane %v3436, 4
  %v3440 = vrot.slane %v3438, 4
  %v3441 = vsel %vm94, %v3439, %v3440
  %vm3442 = vcmask 949248
  %v3443 = vsel %vm3442, %v3436, %v3441
  %3446 = vst [vmem:[#allocation3 + $0x24] sm:$0xff] %v3443
  %3447 = vst.msk [vmem:[#allocation3 + $0x2c] sm:$0xf] %vm3409, %v3438
  %3448 = vrot.lane.b32.xlu0 %v3404, 115
  %v3449 = vpop.permute.xlu0 %3448
  %3450 = vrot.lane.b32.xlu0 %v3405, 115
  %v3451 = vpop.permute.xlu0 %3450
  %v3452 = vrot.slane %v3449, 4
  %v3453 = vrot.slane %v3451, 4
  %v3454 = vsel %vm94, %v3452, %v3453
  %vm3455 = vcmask 941056
  %v3456 = vsel %vm3455, %v3449, %v3454
  %3459 = vst [vmem:[#allocation3 + $0x30] sm:$0xff] %v3456
  %3460 = vst.msk [vmem:[#allocation3 + $0x38] sm:$0xf] %vm3409, %v3451
  %3461 = vrot.lane.b32.xlu0 %v3404, 114
  %v3462 = vpop.permute.xlu0 %3461
  %3463 = vrot.lane.b32.xlu0 %v3405, 114
  %v3464 = vpop.permute.xlu0 %3463
  %v3465 = vrot.slane %v3462, 4
  %v3466 = vrot.slane %v3464, 4
  %v3467 = vsel %vm94, %v3465, %v3466
  %vm3468 = vcmask 932864
  %v3469 = vsel %vm3468, %v3462, %v3467
  %3472 = vst [vmem:[#allocation3 + $0x3c] sm:$0xff] %v3469
  %3473 = vst.msk [vmem:[#allocation3 + $0x44] sm:$0xf] %vm3409, %v3464
  %3474 = vrot.lane.b32.xlu0 %v3404, 104
  %v3475 = vpop.permute.xlu0 %3474
  %3476 = vrot.lane.b32.xlu0 %v3405, 104
  %v3477 = vpop.permute.xlu0 %3476
  %v3478 = vrot.slane %v3475, 4
  %v3479 = vrot.slane %v3477, 4
  %v3480 = vsel %vm94, %v3478, %v3479
  %vm3481 = vcmask 850944
  %v3482 = vsel %vm3481, %v3475, %v3480
  %3485 = vst [vmem:[#allocation3 + $0x48] sm:$0xff] %v3482
  %3486 = vst.msk [vmem:[#allocation3 + $0x50] sm:$0xf] %vm3409, %v3477
  %3487 = vrot.lane.b32.xlu0 %v3404, 103
  %v3488 = vpop.permute.xlu0 %3487
  %3489 = vrot.lane.b32.xlu0 %v3405, 103
  %v3490 = vpop.permute.xlu0 %3489
  %v3491 = vrot.slane %v3488, 4
  %v3492 = vrot.slane %v3490, 4
  %v3493 = vsel %vm94, %v3491, %v3492
  %vm3494 = vcmask 842752
  %v3495 = vsel %vm3494, %v3488, %v3493
  %3498 = vst [vmem:[#allocation3 + $0x54] sm:$0xff] %v3495
  %3499 = vst.msk [vmem:[#allocation3 + $0x5c] sm:$0xf] %vm3409, %v3490
  %3500 = vrot.lane.b32.xlu0 %v3404, 102
  %v3501 = vpop.permute.xlu0 %3500
  %3502 = vrot.lane.b32.xlu0 %v3405, 102
  %v3503 = vpop.permute.xlu0 %3502
  %v3504 = vrot.slane %v3501, 4
  %v3505 = vrot.slane %v3503, 4
  %v3506 = vsel %vm94, %v3504, %v3505
  %v3507 = vsel %vm202, %v3501, %v3506
  %3510 = vst [vmem:[#allocation3 + $0x60] sm:$0xff] %v3507
  %3511 = vst.msk [vmem:[#allocation3 + $0x68] sm:$0xf] %vm3409, %v3503
  %v3512 = vld [vmem:[%s5] sm:$0xf]
  %v3513 = vld [vmem:[%s5 + $0x4] sm:$0xf]
  %v3514 = vld [vmem:[#allocation3] sm:$0xff]
  %v3515 = vld [vmem:[#allocation3 + $0x8] sm:$0xf]
  %v3516 = vld [vmem:[#allocation3 + $0xc] sm:$0xff]
  %v3517 = vld [vmem:[#allocation3 + $0x14] sm:$0xf]
  %v3518 = vld [vmem:[#allocation3 + $0x18] sm:$0xff]
  %v3519 = vld [vmem:[#allocation3 + $0x20] sm:$0xf]
  %v3520 = vld [vmem:[#allocation3 + $0x24] sm:$0xff]
  %v3521 = vld [vmem:[#allocation3 + $0x2c] sm:$0xf]
  %v3522 = vld [vmem:[#allocation3 + $0x30] sm:$0xff]
  %v3523 = vld [vmem:[#allocation3 + $0x38] sm:$0xf]
  %v3524 = vld [vmem:[#allocation3 + $0x3c] sm:$0xff]
  %v3525 = vld [vmem:[#allocation3 + $0x44] sm:$0xf]
  %v3526 = vld [vmem:[#allocation3 + $0x48] sm:$0xff]
  %v3527 = vld [vmem:[#allocation3 + $0x50] sm:$0xf]
  %v3528 = vld [vmem:[#allocation3 + $0x54] sm:$0xff]
  %v3529 = vld [vmem:[#allocation3 + $0x5c] sm:$0xf]
  %v3530 = vld [vmem:[#allocation3 + $0x60] sm:$0xff]
  %v3531 = vld [vmem:[#allocation3 + $0x68] sm:$0xf]
  %v3534 = vunpack.c.l.b16 %v3512
  %v3535 = vunpack.c.l.b16 %v3513
  %v3536 = vpack.c.b16 %v3535, %v3534
  %v3555 = vunpack.c.l.b16 %v3514
  %v3556 = vunpack.c.h.b16 %v3514
  %v3557 = vunpack.c.l.b16 %v3515
  %v3558 = vunpack.c.l.b16 %v3516
  %v3559 = vunpack.c.h.b16 %v3516
  %v3560 = vunpack.c.l.b16 %v3517
  %v3561 = vunpack.c.l.b16 %v3518
  %v3562 = vunpack.c.h.b16 %v3518
  %v3563 = vunpack.c.l.b16 %v3519
  %v3564 = vunpack.c.l.b16 %v3520
  %v3565 = vunpack.c.h.b16 %v3520
  %v3566 = vunpack.c.l.b16 %v3521
  %v3567 = vunpack.c.l.b16 %v3522
  %v3568 = vunpack.c.h.b16 %v3522
  %v3569 = vunpack.c.l.b16 %v3523
  %v3570 = vunpack.c.l.b16 %v3524
  %v3571 = vunpack.c.h.b16 %v3524
  %v3572 = vunpack.c.l.b16 %v3525
  %v3573 = vunpack.c.l.b16 %v3526
  %v3574 = vunpack.c.h.b16 %v3526
  %v3575 = vunpack.c.l.b16 %v3527
  %v3576 = vunpack.c.l.b16 %v3528
  %v3577 = vunpack.c.h.b16 %v3528
  %v3578 = vunpack.c.l.b16 %v3529
  %v3579 = vunpack.c.l.b16 %v3530
  %v3580 = vunpack.c.h.b16 %v3530
  %v3581 = vunpack.c.l.b16 %v3531
  %v3582 = vpack.c.b16 %v3558, %v3555
  %v3583 = vpack.c.b16 %v3559, %v3556
  %v3584 = vpack.c.b16 %v3560, %v3557
  %v3585 = vpack.c.b16 %v3564, %v3561
  %v3586 = vpack.c.b16 %v3565, %v3562
  %v3587 = vpack.c.b16 %v3566, %v3563
  %v3588 = vpack.c.b16 %v3570, %v3567
  %v3589 = vpack.c.b16 %v3571, %v3568
  %v3590 = vpack.c.b16 %v3572, %v3569
  %v3591 = vpack.c.b16 %v3576, %v3573
  %v3592 = vpack.c.b16 %v3577, %v3574
  %v3593 = vpack.c.b16 %v3578, %v3575
  %v3594 = vpack.c.b16 %v3579, %v3579
  %v3595 = vpack.c.b16 %v3580, %v3580
  %v3596 = vpack.c.b16 %v3581, %v3581
  %v3610 = vsel %vm796, %v3536, 0
  %v3613 = vsel %vm800, %v3594, 0
  %v3616 = vsel %vm800, %v3595, 0
  %v3619 = vsel %vm800, %v3596, 0
  %3621 = vmatprep.subr.bf16.mxu0 %v3583
  %3622 = vmatpush1.bf16.msra.mxu0 %v3582
  %3623 = vmatprep.subr.bf16.mxu0 %v3586
  %3624 = vmatpush1.bf16.msra.mxu0 %v3585
  %3625 = vmatprep.subr.bf16.mxu0 %v3589
  %3626 = vmatpush1.bf16.msra.mxu0 %v3588
  %3627 = vmatprep.subr.bf16.mxu0 %v3592
  %3628 = vmatpush1.bf16.msra.mxu0 %v3591
  %3629 = vmatprep.subr.bf16.mxu0 %v3616
  %3630 = vmatpush1.bf16.msra.mxu0 %v3613
  %3631 = vmatprep.subr.bf16.mxu0 0
  %3632 = vmatpush1.bf16.msra.mxu0 0
  %3633 = vmatprep.subr.bf16.mxu0 0
  %3634 = vmatpush1.bf16.msra.mxu0 0
  %3635 = vmatprep.subr.bf16.mxu0 0
  %3636 = vmatpush1.bf16.msra.mxu0 0
  %3637 = vmatprep.subr.bf16.mxu0 0
  %3638 = vmatpush1.bf16.msra.mxu0 0
  %3639 = vmatprep.subr.bf16.mxu0 0
  %3640 = vmatpush1.bf16.msra.mxu0 0
  %3641 = vmatprep.subr.bf16.mxu0 0
  %3642 = vmatpush1.bf16.msra.mxu0 0
  %3643 = vmatprep.subr.bf16.mxu0 0
  %3644 = vmatpush1.bf16.msra.mxu0 0
  %3645 = vmatprep.subr.bf16.mxu0 0
  %3646 = vmatpush1.bf16.msra.mxu0 0
  %3647 = vmatprep.subr.bf16.mxu0 0
  %3648 = vmatpush1.bf16.msra.mxu0 0
  %3649 = vmatprep.subr.bf16.mxu0 0
  %3650 = vmatpush1.bf16.msra.mxu0 0
  %3651 = vmatprep.subr.bf16.mxu0 0
  %3652 = vmatpush1.bf16.msra.mxu0 0
  %3653 = vmatprep.mubr.bf16.mxu0 0
  %3654 = vmatmul.mubr.bf16.gmra.mrb[0].mxu0 %v3610
  %v3655 = vpop.f32.mrb[0].mxu0
  %v3656 = vadd.f32 0.0, %v3655
  %v3657 = vpop.f32.mrb[0].mxu0
  %v3658 = vadd.f32 0.0, %v3657
  %v3659 = vpop.f32.mrb[0].mxu0
  %v3660 = vadd.f32 0.0, %v3659
  %v3661 = vpop.f32.mrb[0].mxu0
  %v3662 = vadd.f32 0.0, %v3661
  %3663 = vdwg.mxu0
  %3664 = vmatprep.subr.bf16.mxu0 0
  %3665 = vmatpush1.bf16.msra.mxu0 %v3584
  %3666 = vmatprep.subr.bf16.mxu0 0
  %3667 = vmatpush1.bf16.msra.mxu0 %v3587
  %3668 = vmatprep.subr.bf16.mxu0 0
  %3669 = vmatpush1.bf16.msra.mxu0 %v3590
  %3670 = vmatprep.subr.bf16.mxu0 0
  %3671 = vmatpush1.bf16.msra.mxu0 %v3593
  %3672 = vmatprep.subr.bf16.mxu0 0
  %3673 = vmatpush1.bf16.msra.mxu0 %v3619
  %3674 = vmatprep.subr.bf16.mxu0 0
  %3675 = vmatpush1.bf16.msra.mxu0 0
  %3676 = vmatprep.subr.bf16.mxu0 0
  %3677 = vmatpush1.bf16.msra.mxu0 0
  %3678 = vmatprep.subr.bf16.mxu0 0
  %3679 = vmatpush1.bf16.msra.mxu0 0
  %3680 = vmatprep.subr.bf16.mxu0 0
  %3681 = vmatpush1.bf16.msra.mxu0 0
  %3682 = vmatprep.subr.bf16.mxu0 0
  %3683 = vmatpush1.bf16.msra.mxu0 0
  %3684 = vmatprep.subr.bf16.mxu0 0
  %3685 = vmatpush1.bf16.msra.mxu0 0
  %3686 = vmatprep.subr.bf16.mxu0 0
  %3687 = vmatpush1.bf16.msra.mxu0 0
  %3688 = vmatprep.subr.bf16.mxu0 0
  %3689 = vmatpush1.bf16.msra.mxu0 0
  %3690 = vmatprep.subr.bf16.mxu0 0
  %3691 = vmatpush1.bf16.msra.mxu0 0
  %3692 = vmatprep.subr.bf16.mxu0 0
  %3693 = vmatpush1.bf16.msra.mxu0 0
  %3694 = vmatprep.subr.bf16.mxu0 0
  %3695 = vmatpush1.bf16.msra.mxu0 0
  %3696 = vmatprep.mubr.bf16.mxu0 0
  %3697 = vmatmul.mubr.bf16.gmra.mrb[0].mxu0 %v3610
  %v3698 = vpop.f32.mrb[0].mxu0
  %v3699 = vadd.f32 0.0, %v3698
  %v3700 = vpop.f32.mrb[0].mxu0
  %v3701 = vpop.f32.mrb[0].mxu0
  %v3702 = vadd.f32 0.0, %v3701
  %v3703 = vpop.f32.mrb[0].mxu0
  %3704 = vdwg.mxu0
  %v3705 = vld [vmem:[%s6] sm:$0xff]
  %v3706 = vld [vmem:[%s6 + $0x8] sm:$0xff]
  %v3707 = vld [vmem:[%s7] sm:$0x7]
  %v3709 = vlaneseq
  %v3710 = vshrl.u32 %v3709, 7
  %v3711 = vsub.s32 0, %v3710
  %v3712 = vrot.slane %v3707, %v3711
  %v3713 = vlaneseq
  %v3714 = vshrl.u32 %v3713, 7
  %v3715 = vsub.s32 1, %v3714
  %v3716 = vrot.slane %v3707, %v3715
  %v3717 = vlaneseq
  %v3718 = vshrl.u32 %v3717, 7
  %v3719 = vsub.s32 2, %v3718
  %v3720 = vrot.slane %v3707, %v3719
  %v3724 = vmul.f32 %v3656, %v3712
  %v3725 = vmul.f32 %v3658, %v3716
  %v3726 = vmul.f32 %v3699, %v3720
  %v3727 = vmul.f32 %v3660, %v3712
  %v3728 = vmul.f32 %v3662, %v3716
  %v3729 = vmul.f32 %v3702, %v3720
  %v3730 = vadd.f32 %v3724, %v3725
  %vm3731 = vcmask 48128
  %v3732 = vsel %vm3731, %v3726, 0.0
  %v3733 = vadd.f32 %v3730, %v3732
  %3734 = vadd.xlane.f32.xlu0 %v3733
  %v3735 = vpop.xlane.xlu0 %3734
  %v3736 = vadd.f32 %v3727, %v3728
  %v3737 = vsel %vm3731, %v3729, 0.0
  %v3738 = vadd.f32 %v3736, %v3737
  %3739 = vadd.xlane.f32.xlu0 %v3738
  %v3740 = vpop.xlane.xlu0 %3739
  %v3741 = vmul.f32 %v3735, 0.005
  %v3742 = vmul.f32 %v3740, 0.005
  %v3743 = vmul.f32 %v3724, %v3656
  %v3744 = vmul.f32 %v3725, %v3658
  %v3745 = vmul.f32 %v3726, %v3699
  %v3746 = vmul.f32 %v3727, %v3660
  %v3747 = vmul.f32 %v3728, %v3662
  %v3748 = vmul.f32 %v3729, %v3702
  %v3749 = vadd.f32 %v3743, %v3744
  %v3750 = vsel %vm3731, %v3745, 0.0
  %v3751 = vadd.f32 %v3749, %v3750
  %3752 = vadd.xlane.f32.xlu0 %v3751
  %v3753 = vpop.xlane.xlu0 %3752
  %v3754 = vadd.f32 %v3746, %v3747
  %v3755 = vsel %vm3731, %v3748, 0.0
  %v3756 = vadd.f32 %v3754, %v3755
  %3757 = vadd.xlane.f32.xlu0 %v3756
  %v3758 = vpop.xlane.xlu0 %3757
  %v3759 = vmul.f32 %v3753, 0.005
  %v3760 = vmul.f32 %v3758, 0.005
  %v3761 = vmul.f32 %v3741, %v3741
  %v3762 = vmul.f32 %v3742, %v3742
  %v3763 = vsub.f32 %v3759, %v3761
  %v3764 = vsub.f32 %v3760, %v3762
  %v3765 = vmax.f32 %v3763, 0.0
  %v3766 = vmax.f32 %v3764, 0.0
  %v3767 = vadd.f32 %v3765, 1e-05
  %v3768 = vadd.f32 %v3766, 1e-05
  %v3769 = vrsqrt.pop %v3767
  %v3770 = vrsqrt.pop %v3768
  %v3771 = vmul.f32 %v3705, %v3769
  %v3772 = vmul.f32 %v3706, %v3770
  %v3773 = vsub.f32 %v3656, %v3741
  %v3774 = vsub.f32 %v3658, %v3741
  %v3775 = vsub.f32 %v3699, %v3741
  %v3776 = vsub.f32 %v3660, %v3742
  %v3777 = vsub.f32 %v3662, %v3742
  %v3778 = vsub.f32 %v3702, %v3742
  %3780 = vset.pattern.permute.xlu0 0
  %3781 = vperm.xlu0 %3780, %v3771
  %v3782 = vpop.permute.xlu0 %3781
  %3785 = vset.pattern.permute.xlu0 0
  %3786 = vperm.xlu0 %3785, %v3772
  %v3787 = vpop.permute.xlu0 %3786
  %v3789 = vmul.f32 %v3773, %v3782
  %v3790 = vmul.f32 %v3774, %v3782
  %v3791 = vmul.f32 %v3775, %v3782
  %v3792 = vmul.f32 %v3776, %v3787
  %v3793 = vmul.f32 %v3777, %v3787
  %v3794 = vmul.f32 %v3778, %v3787
  %3796 = vset.pattern.permute.xlu0 1
  %3797 = vperm.xlu0 %3796, %v3705
  %v3798 = vpop.permute.xlu0 %3797
  %3801 = vset.pattern.permute.xlu0 1
  %3802 = vperm.xlu0 %3801, %v3706
  %v3803 = vpop.permute.xlu0 %3802
  %v3805 = vadd.f32 %v3789, %v3798
  %v3806 = vadd.f32 %v3790, %v3798
  %v3807 = vadd.f32 %v3791, %v3798
  %v3808 = vadd.f32 %v3792, %v3803
  %v3809 = vadd.f32 %v3793, %v3803
  %v3810 = vadd.f32 %v3794, %v3803
  %v3811 = vmax.f32 %v3805, 0.0
  %v3812 = vmax.f32 %v3806, 0.0
  %v3813 = vmax.f32 %v3807, 0.0
  %v3814 = vmax.f32 %v3808, 0.0
  %v3815 = vmax.f32 %v3809, 0.0
  %v3816 = vmax.f32 %v3810, 0.0
  %v3817 = vld [vmem:[%s8] sm:$0xf]
  %v3818 = vld [vmem:[%s8 + $0x4] sm:$0xf]
  %v3819 = vld [vmem:[%s8 + $0x8] sm:$0xf]
  %v3820 = vld [vmem:[%s8 + $0xc] sm:$0xf]
  %v3821 = vld [vmem:[%s8 + $0x10] sm:$0xf]
  %v3822 = vld [vmem:[%s8 + $0x14] sm:$0xf]
  %v3823 = vld [vmem:[%s8 + $0x18] sm:$0xf]
  %v3824 = vld [vmem:[%s8 + $0x1c] sm:$0xf]
  %v3825 = vld [vmem:[%s8 + $0x20] sm:$0xf]
  %v3826 = vld [vmem:[%s8 + $0x24] sm:$0xf]
  %v3827 = vld [vmem:[%s8 + $0x28] sm:$0xf]
  %v3828 = vld [vmem:[%s8 + $0x2c] sm:$0xf]
  %v3829 = vld [vmem:[%s8 + $0x30] sm:$0xf]
  %v3830 = vld [vmem:[%s8 + $0x34] sm:$0xf]
  %v3831 = vld [vmem:[%s8 + $0x38] sm:$0xf]
  %v3832 = vld [vmem:[%s8 + $0x3c] sm:$0xf]
  %v3833 = vld [vmem:[%s8 + $0x40] sm:$0xf]
  %v3834 = vld [vmem:[%s8 + $0x44] sm:$0xf]
  %v3835 = vld [vmem:[%s8 + $0x48] sm:$0xf]
  %v3836 = vld [vmem:[%s8 + $0x4c] sm:$0xf]
  %v3837 = vld [vmem:[%s8 + $0x50] sm:$0xf]
  %v3838 = vld [vmem:[%s8 + $0x54] sm:$0xf]
  %v3839 = vld [vmem:[%s8 + $0x58] sm:$0xf]
  %v3840 = vld [vmem:[%s8 + $0x5c] sm:$0xf]
  %v3841 = vld [vmem:[%s8 + $0x60] sm:$0xf]
  %v3842 = vld [vmem:[%s8 + $0x64] sm:$0xf]
  %v3843 = vld [vmem:[%s8 + $0x68] sm:$0xf]
  %v3844 = vld [vmem:[%s8 + $0x6c] sm:$0xf]
  %v3845 = vld [vmem:[%s8 + $0x70] sm:$0xf]
  %v3846 = vld [vmem:[%s8 + $0x74] sm:$0xf]
  %v3847 = vld [vmem:[%s8 + $0x78] sm:$0xf]
  %v3848 = vld [vmem:[%s8 + $0x7c] sm:$0x1]
  %3855 = vrot.lane.b32.xlu0 %v3811, 116
  %v3856 = vpop.permute.xlu0 %3855
  %3857 = vrot.lane.b32.xlu0 %v3812, 116
  %v3858 = vpop.permute.xlu0 %3857
  %3859 = vrot.lane.b32.xlu0 %v3813, 116
  %v3860 = vpop.permute.xlu0 %3859
  %3861 = vrot.lane.b32.xlu0 %v3814, 116
  %v3862 = vpop.permute.xlu0 %3861
  %3863 = vrot.lane.b32.xlu0 %v3815, 116
  %v3864 = vpop.permute.xlu0 %3863
  %3865 = vrot.lane.b32.xlu0 %v3816, 116
  %v3866 = vpop.permute.xlu0 %3865
  %vm3867 = vcmask 949248
  %v3868 = vsel %vm3867, %v3856, %v3858
  %v3869 = vsel %vm3867, %v3858, %v3860
  %v3870 = vsel %vm3867, %v3862, %v3864
  %v3871 = vsel %vm3867, %v3864, %v3866
  %v3876 = vmax.f32 %v3811, %v3868
  %v3877 = vmax.f32 %v3812, %v3869
  %v3878 = vmax.f32 %v3814, %v3870
  %v3879 = vmax.f32 %v3815, %v3871
  %3884 = vrot.lane.b32.xlu0 %v3876, 127
  %v3885 = vpop.permute.xlu0 %3884
  %3886 = vrot.lane.b32.xlu0 %v3877, 127
  %v3887 = vpop.permute.xlu0 %3886
  %3888 = vrot.lane.b32.xlu0 %v3878, 127
  %v3889 = vpop.permute.xlu0 %3888
  %3890 = vrot.lane.b32.xlu0 %v3879, 127
  %v3891 = vpop.permute.xlu0 %3890
  %v3892 = vsel %vm1662, %v3885, %v3887
  %v3893 = vsel %vm1662, %v3889, %v3891
  %v3898 = vmax.f32 %v3876, %v3892
  %v3899 = vmax.f32 %v3877, %v3887
  %v3900 = vmax.f32 %v3878, %v3893
  %v3901 = vmax.f32 %v3879, %v3891
  %v3902 = vpack.c.bf16 %v3900, %v3898
  %v3903 = vpack.c.bf16 %v3901, %v3899
  %v3936 = vunpack.c.l.b16 %v3817
  %v3937 = vunpack.c.l.b16 %v3818
  %v3938 = vunpack.c.l.b16 %v3819
  %v3939 = vunpack.c.l.b16 %v3820
  %v3940 = vunpack.c.l.b16 %v3821
  %v3941 = vunpack.c.l.b16 %v3822
  %v3942 = vunpack.c.l.b16 %v3823
  %v3943 = vunpack.c.l.b16 %v3824
  %v3944 = vunpack.c.l.b16 %v3825
  %v3945 = vunpack.c.l.b16 %v3826
  %v3946 = vunpack.c.l.b16 %v3827
  %v3947 = vunpack.c.l.b16 %v3828
  %v3948 = vunpack.c.l.b16 %v3829
  %v3949 = vunpack.c.l.b16 %v3830
  %v3950 = vunpack.c.l.b16 %v3831
  %v3951 = vunpack.c.l.b16 %v3832
  %v3952 = vunpack.c.l.b16 %v3833
  %v3953 = vunpack.c.l.b16 %v3834
  %v3954 = vunpack.c.l.b16 %v3835
  %v3955 = vunpack.c.l.b16 %v3836
  %v3956 = vunpack.c.l.b16 %v3837
  %v3957 = vunpack.c.l.b16 %v3838
  %v3958 = vunpack.c.l.b16 %v3839
  %v3959 = vunpack.c.l.b16 %v3840
  %v3960 = vunpack.c.l.b16 %v3841
  %v3961 = vunpack.c.l.b16 %v3842
  %v3962 = vunpack.c.l.b16 %v3843
  %v3963 = vunpack.c.l.b16 %v3844
  %v3964 = vunpack.c.l.b16 %v3845
  %v3965 = vunpack.c.l.b16 %v3846
  %v3966 = vunpack.c.l.b16 %v3847
  %v3967 = vunpack.c.l.b16 %v3848
  %v3968 = vpack.c.b16 %v3937, %v3936
  %v3969 = vpack.c.b16 %v3939, %v3938
  %v3970 = vpack.c.b16 %v3941, %v3940
  %v3971 = vpack.c.b16 %v3943, %v3942
  %v3972 = vpack.c.b16 %v3945, %v3944
  %v3973 = vpack.c.b16 %v3947, %v3946
  %v3974 = vpack.c.b16 %v3949, %v3948
  %v3975 = vpack.c.b16 %v3951, %v3950
  %v3976 = vpack.c.b16 %v3953, %v3952
  %v3977 = vpack.c.b16 %v3955, %v3954
  %v3978 = vpack.c.b16 %v3957, %v3956
  %v3979 = vpack.c.b16 %v3959, %v3958
  %v3980 = vpack.c.b16 %v3961, %v3960
  %v3981 = vpack.c.b16 %v3963, %v3962
  %v3982 = vpack.c.b16 %v3965, %v3964
  %v3983 = vpack.c.b16 %v3967, %v3966
  %vm3999 = vcmask 990208
  %v4001 = vsel %vm3999, %v3903, 0
  %vm4003 = vcmask 1044480
  %v4004 = vsel %vm800, 4294967295, 65535
  %v4005 = vsel %vm4003, %v4004, 0
  %v4007 = vand.u32 %v3983, %v4005
  %4009 = vmatprep.subr.bf16.mxu0 0
  %4010 = vmatpush1.bf16.msra.mxu0 %v3968
  %4011 = vmatprep.subr.bf16.mxu0 0
  %4012 = vmatpush1.bf16.msra.mxu0 %v3969
  %4013 = vmatprep.subr.bf16.mxu0 0
  %4014 = vmatpush1.bf16.msra.mxu0 %v3970
  %4015 = vmatprep.subr.bf16.mxu0 0
  %4016 = vmatpush1.bf16.msra.mxu0 %v3971
  %4017 = vmatprep.subr.bf16.mxu0 0
  %4018 = vmatpush1.bf16.msra.mxu0 %v3972
  %4019 = vmatprep.subr.bf16.mxu0 0
  %4020 = vmatpush1.bf16.msra.mxu0 %v3973
  %4021 = vmatprep.subr.bf16.mxu0 0
  %4022 = vmatpush1.bf16.msra.mxu0 %v3974
  %4023 = vmatprep.subr.bf16.mxu0 0
  %4024 = vmatpush1.bf16.msra.mxu0 %v3975
  %4025 = vmatprep.subr.bf16.mxu0 0
  %4026 = vmatpush1.bf16.msra.mxu0 %v3976
  %4027 = vmatprep.subr.bf16.mxu0 0
  %4028 = vmatpush1.bf16.msra.mxu0 %v3977
  %4029 = vmatprep.subr.bf16.mxu0 0
  %4030 = vmatpush1.bf16.msra.mxu0 %v3978
  %4031 = vmatprep.subr.bf16.mxu0 0
  %4032 = vmatpush1.bf16.msra.mxu0 %v3979
  %4033 = vmatprep.subr.bf16.mxu0 0
  %4034 = vmatpush1.bf16.msra.mxu0 %v3980
  %4035 = vmatprep.subr.bf16.mxu0 0
  %4036 = vmatpush1.bf16.msra.mxu0 %v3981
  %4037 = vmatprep.subr.bf16.mxu0 0
  %4038 = vmatpush1.bf16.msra.mxu0 %v3982
  %4039 = vmatprep.subr.bf16.mxu0 0
  %4040 = vmatpush1.bf16.msra.mxu0 %v4007
  %4041 = vmatprep.mubr.bf16.mxu0 %v4001
  %4042 = vmatmul.mubr.bf16.gmra.mrb[0].mxu0 %v3902
  %v4043 = vpop.f32.mrb[0].mxu0
  %v4044 = vadd.f32 0.0, %v4043
  %v4045 = vpop.f32.mrb[0].mxu0
  %v4046 = vpop.f32.mrb[0].mxu0
  %v4047 = vadd.f32 0.0, %v4046
  %v4048 = vpop.f32.mrb[0].mxu0
  %4049 = vdwg.mxu0
  %v4050 = vpack.c.bf16 %v4047, %v4044
  %vm4051 = vcmask 310272
  %4052 = vst.msk [vmem:[#allocation4] sm:$0xff] %vm4051, %v4050
  %4054 = vrot.lane.b32.xlu0 %v4050, 127
  %v4055 = vpop.permute.xlu0 %4054
  %4057 = vst.msk [vmem:[#allocation4 + $0x8] sm:$0xff] %vm4051, %v4055
  %4058 = vrot.lane.b32.xlu0 %v4050, 126
  %v4059 = vpop.permute.xlu0 %4058
  %4061 = vst.msk [vmem:[#allocation4 + $0x10] sm:$0xff] %vm4051, %v4059
  %4062 = vrot.lane.b32.xlu0 %v4050, 123
  %v4063 = vpop.permute.xlu0 %4062
  %4065 = vst.msk [vmem:[#allocation4 + $0x18] sm:$0xff] %vm4051, %v4063
  %4066 = vrot.lane.b32.xlu0 %v4050, 122
  %v4067 = vpop.permute.xlu0 %4066
  %4069 = vst.msk [vmem:[#allocation4 + $0x20] sm:$0xff] %vm4051, %v4067
  %4070 = vrot.lane.b32.xlu0 %v4050, 121
  %v4071 = vpop.permute.xlu0 %4070
  %4073 = vst.msk [vmem:[#allocation4 + $0x28] sm:$0xff] %vm4051, %v4071
  %4074 = vrot.lane.b32.xlu0 %v4050, 118
  %v4075 = vpop.permute.xlu0 %4074
  %4077 = vst.msk [vmem:[#allocation4 + $0x30] sm:$0xff] %vm4051, %v4075
  %4078 = vrot.lane.b32.xlu0 %v4050, 117
  %v4079 = vpop.permute.xlu0 %4078
  %4081 = vst.msk [vmem:[#allocation4 + $0x38] sm:$0xff] %vm4051, %v4079
  %4082 = vrot.lane.b32.xlu0 %v4050, 116
  %v4083 = vpop.permute.xlu0 %4082
  %4085 = vst.msk [vmem:[#allocation4 + $0x40] sm:$0xff] %vm4051, %v4083
  %v4086 = vld [vmem:[%s9] sm:$0xff]
  %v4087 = vld [vmem:[%s9 + $0x8] sm:$0xff]
  %v4088 = vld [vmem:[%s9 + $0x10] sm:$0xff]
  %v4089 = vld [vmem:[%s9 + $0x18] sm:$0xff]
  %v4090 = vld [vmem:[#allocation4] sm:$0xff]
  %v4091 = vld [vmem:[#allocation4 + $0x8] sm:$0xff]
  %v4092 = vld [vmem:[#allocation4 + $0x10] sm:$0xff]
  %v4093 = vld [vmem:[#allocation4 + $0x18] sm:$0xff]
  %v4094 = vld [vmem:[#allocation4 + $0x20] sm:$0xff]
  %v4095 = vld [vmem:[#allocation4 + $0x28] sm:$0xff]
  %v4096 = vld [vmem:[#allocation4 + $0x30] sm:$0xff]
  %v4097 = vld [vmem:[#allocation4 + $0x38] sm:$0xff]
  %v4098 = vld [vmem:[#allocation4 + $0x40] sm:$0xff]
  %v4103 = vunpack.c.l.b16 %v4086
  %v4104 = vunpack.c.h.b16 %v4086
  %v4105 = vunpack.c.l.b16 %v4087
  %v4106 = vunpack.c.h.b16 %v4087
  %v4107 = vunpack.c.l.b16 %v4088
  %v4108 = vunpack.c.h.b16 %v4088
  %v4109 = vunpack.c.l.b16 %v4089
  %v4110 = vunpack.c.h.b16 %v4089
  %v4111 = vpack.c.b16 %v4105, %v4103
  %v4112 = vpack.c.b16 %v4106, %v4104
  %v4113 = vpack.c.b16 %v4109, %v4107
  %v4114 = vpack.c.b16 %v4110, %v4108
  %vm4117 = vcmask 130048
  %v4119 = vsel %vm4117, %v4112, 0
  %v4122 = vsel %vm4117, %v4114, 0
  %4124 = vmatprep.subr.bf16.mxu0 0
  %4125 = vmatpush1.bf16.msra.mxu0 %v4090
  %4126 = vmatprep.subr.bf16.mxu0 0
  %4127 = vmatpush1.bf16.msra.mxu0 %v4091
  %4128 = vmatprep.subr.bf16.mxu0 0
  %4129 = vmatpush1.bf16.msra.mxu0 %v4092
  %4130 = vmatprep.subr.bf16.mxu0 0
  %4131 = vmatpush1.bf16.msra.mxu0 %v4093
  %4132 = vmatprep.subr.bf16.mxu0 0
  %4133 = vmatpush1.bf16.msra.mxu0 %v4094
  %4134 = vmatprep.subr.bf16.mxu0 0
  %4135 = vmatpush1.bf16.msra.mxu0 %v4095
  %4136 = vmatprep.subr.bf16.mxu0 0
  %4137 = vmatpush1.bf16.msra.mxu0 %v4096
  %4138 = vmatprep.subr.bf16.mxu0 0
  %4139 = vmatpush1.bf16.msra.mxu0 %v4097
  %4140 = vmatprep.subr.bf16.mxu0 0
  %4141 = vmatpush1.bf16.msra.mxu0 %v4098
  %4142 = vmatprep.subr.bf16.mxu0 0
  %4143 = vmatpush1.bf16.msra.mxu0 0
  %4144 = vmatprep.subr.bf16.mxu0 0
  %4145 = vmatpush1.bf16.msra.mxu0 0
  %4146 = vmatprep.subr.bf16.mxu0 0
  %4147 = vmatpush1.bf16.msra.mxu0 0
  %4148 = vmatprep.subr.bf16.mxu0 0
  %4149 = vmatpush1.bf16.msra.mxu0 0
  %4150 = vmatprep.subr.bf16.mxu0 0
  %4151 = vmatpush1.bf16.msra.mxu0 0
  %4152 = vmatprep.subr.bf16.mxu0 0
  %4153 = vmatpush1.bf16.msra.mxu0 0
  %4154 = vmatprep.subr.bf16.mxu0 0
  %4155 = vmatpush1.bf16.msra.mxu0 0
  %4156 = vmatprep.mubr.bf16.mxu0 %v4119
  %4157 = vmatmul.mubr.bf16.gmra.mrb[0].mxu0 %v4111
  %v4158 = vpop.f32.mrb[0].mxu0
  %v4159 = vadd.f32 0.0, %v4158
  %v4160 = vpop.f32.mrb[0].mxu0
  %v4161 = vpop.f32.mrb[0].mxu0
  %v4162 = vadd.f32 0.0, %v4161
  %v4163 = vpop.f32.mrb[0].mxu0
  %4164 = vmatprep.mubr.bf16.mxu0 %v4122
  %4165 = vmatmul.mubr.bf16.gmra.mrb[0].mxu0 %v4113
  %v4166 = vpop.f32.mrb[0].mxu0
  %v4167 = vadd.f32 0.0, %v4166
  %v4168 = vpop.f32.mrb[0].mxu0
  %v4169 = vpop.f32.mrb[0].mxu0
  %v4170 = vadd.f32 0.0, %v4169
  %v4171 = vpop.f32.mrb[0].mxu0
  %4172 = vdwg.mxu0
  %v4173 = vld [vmem:[%s10] sm:$0xff]
  %v4174 = vld [vmem:[%s10 + $0x8] sm:$0xff]
  %v4175 = vld [vmem:[%s10 + $0x10] sm:$0xff]
  %v4176 = vld [vmem:[%s10 + $0x18] sm:$0xff]
  %v4177 = vld [vmem:[%s11] sm:$0x1]
  %v4179 = vlaneseq
  %v4180 = vshrl.u32 %v4179, 7
  %v4181 = vsub.s32 0, %v4180
  %v4182 = vrot.slane %v4177, %v4181
  %v4184 = vmul.f32 %v4159, %v4182
  %v4185 = vmul.f32 %v4162, %v4182
  %v4186 = vmul.f32 %v4167, %v4182
  %v4187 = vmul.f32 %v4170, %v4182
  %v4188 = vsel %vm4051, %v4184, 0.0
  %4189 = vadd.xlane.f32.xlu0 %v4188
  %v4190 = vpop.xlane.xlu0 %4189
  %v4191 = vsel %vm4051, %v4185, 0.0
  %4192 = vadd.xlane.f32.xlu0 %v4191
  %v4193 = vpop.xlane.xlu0 %4192
  %v4194 = vsel %vm4051, %v4186, 0.0
  %4195 = vadd.xlane.f32.xlu0 %v4194
  %v4196 = vpop.xlane.xlu0 %4195
  %v4197 = vsel %vm4051, %v4187, 0.0
  %4198 = vadd.xlane.f32.xlu0 %v4197
  %v4199 = vpop.xlane.xlu0 %4198
  %v4200 = vmul.f32 %v4190, 0.055555556
  %v4201 = vmul.f32 %v4193, 0.055555556
  %v4202 = vmul.f32 %v4196, 0.055555556
  %v4203 = vmul.f32 %v4199, 0.055555556
  %v4204 = vmul.f32 %v4184, %v4159
  %v4205 = vmul.f32 %v4185, %v4162
  %v4206 = vmul.f32 %v4186, %v4167
  %v4207 = vmul.f32 %v4187, %v4170
  %v4208 = vsel %vm4051, %v4204, 0.0
  %4209 = vadd.xlane.f32.xlu0 %v4208
  %v4210 = vpop.xlane.xlu0 %4209
  %v4211 = vsel %vm4051, %v4205, 0.0
  %4212 = vadd.xlane.f32.xlu0 %v4211
  %v4213 = vpop.xlane.xlu0 %4212
  %v4214 = vsel %vm4051, %v4206, 0.0
  %4215 = vadd.xlane.f32.xlu0 %v4214
  %v4216 = vpop.xlane.xlu0 %4215
  %v4217 = vsel %vm4051, %v4207, 0.0
  %4218 = vadd.xlane.f32.xlu0 %v4217
  %v4219 = vpop.xlane.xlu0 %4218
  %v4220 = vmul.f32 %v4210, 0.055555556
  %v4221 = vmul.f32 %v4213, 0.055555556
  %v4222 = vmul.f32 %v4216, 0.055555556
  %v4223 = vmul.f32 %v4219, 0.055555556
  %v4224 = vmul.f32 %v4200, %v4200
  %v4225 = vmul.f32 %v4201, %v4201
  %v4226 = vmul.f32 %v4202, %v4202
  %v4227 = vmul.f32 %v4203, %v4203
  %v4228 = vsub.f32 %v4220, %v4224
  %v4229 = vsub.f32 %v4221, %v4225
  %v4230 = vsub.f32 %v4222, %v4226
  %v4231 = vsub.f32 %v4223, %v4227
  %v4232 = vmax.f32 %v4228, 0.0
  %v4233 = vmax.f32 %v4229, 0.0
  %v4234 = vmax.f32 %v4230, 0.0
  %v4235 = vmax.f32 %v4231, 0.0
  %v4236 = vadd.f32 %v4232, 1e-05
  %v4237 = vadd.f32 %v4233, 1e-05
  %v4238 = vadd.f32 %v4234, 1e-05
  %v4239 = vadd.f32 %v4235, 1e-05
  %v4240 = vrsqrt.pop %v4236
  %v4241 = vrsqrt.pop %v4237
  %v4242 = vrsqrt.pop %v4238
  %v4243 = vrsqrt.pop %v4239
  %v4244 = vmul.f32 %v4173, %v4240
  %v4245 = vmul.f32 %v4174, %v4241
  %v4246 = vmul.f32 %v4175, %v4242
  %v4247 = vmul.f32 %v4176, %v4243
  %v4248 = vsub.f32 %v4159, %v4200
  %v4249 = vsub.f32 %v4162, %v4201
  %v4250 = vsub.f32 %v4167, %v4202
  %v4251 = vsub.f32 %v4170, %v4203
  %4253 = vset.pattern.permute.xlu0 0
  %4254 = vperm.xlu0 %4253, %v4244
  %v4255 = vpop.permute.xlu0 %4254
  %4258 = vset.pattern.permute.xlu0 0
  %4259 = vperm.xlu0 %4258, %v4245
  %v4260 = vpop.permute.xlu0 %4259
  %4263 = vset.pattern.permute.xlu0 0
  %4264 = vperm.xlu0 %4263, %v4246
  %v4265 = vpop.permute.xlu0 %4264
  %4268 = vset.pattern.permute.xlu0 0
  %4269 = vperm.xlu0 %4268, %v4247
  %v4270 = vpop.permute.xlu0 %4269
  %v4272 = vmul.f32 %v4248, %v4255
  %v4273 = vmul.f32 %v4249, %v4260
  %v4274 = vmul.f32 %v4250, %v4265
  %v4275 = vmul.f32 %v4251, %v4270
  %4277 = vset.pattern.permute.xlu0 1
  %4278 = vperm.xlu0 %4277, %v4173
  %v4279 = vpop.permute.xlu0 %4278
  %4282 = vset.pattern.permute.xlu0 1
  %4283 = vperm.xlu0 %4282, %v4174
  %v4284 = vpop.permute.xlu0 %4283
  %4287 = vset.pattern.permute.xlu0 1
  %4288 = vperm.xlu0 %4287, %v4175
  %v4289 = vpop.permute.xlu0 %4288
  %4292 = vset.pattern.permute.xlu0 1
  %4293 = vperm.xlu0 %4292, %v4176
  %v4294 = vpop.permute.xlu0 %4293
  %v4296 = vadd.f32 %v4272, %v4279
  %v4297 = vadd.f32 %v4273, %v4284
  %v4298 = vadd.f32 %v4274, %v4289
  %v4299 = vadd.f32 %v4275, %v4294
  %v4300 = vmax.f32 %v4296, 0.0
  %v4301 = vmax.f32 %v4297, 0.0
  %v4302 = vmax.f32 %v4298, 0.0
  %v4303 = vmax.f32 %v4299, 0.0
  %v4304 = vpack.c.bf16 %v4301, %v4300
  %v4305 = vpack.c.bf16 %v4303, %v4302
  %vm4306 = vcmask 211968
  %4307 = vst.msk [vmem:[#allocation5] sm:$0xff] %vm4306, %v4304
  %4308 = vst.msk [vmem:[#allocation5 + $0x8] sm:$0xff] %vm4306, %v4305
  %4311 = vrot.lane.b32.xlu0 %v4304, 127
  %v4312 = vpop.permute.xlu0 %4311
  %4313 = vrot.lane.b32.xlu0 %v4305, 127
  %v4314 = vpop.permute.xlu0 %4313
  %4317 = vst.msk [vmem:[#allocation5 + $0x10] sm:$0xff] %vm4306, %v4312
  %4318 = vst.msk [vmem:[#allocation5 + $0x18] sm:$0xff] %vm4306, %v4314
  %4319 = vrot.lane.b32.xlu0 %v4304, 126
  %v4320 = vpop.permute.xlu0 %4319
  %4321 = vrot.lane.b32.xlu0 %v4305, 126
  %v4322 = vpop.permute.xlu0 %4321
  %4325 = vst.msk [vmem:[#allocation5 + $0x20] sm:$0xff] %vm4306, %v4320
  %4326 = vst.msk [vmem:[#allocation5 + $0x28] sm:$0xff] %vm4306, %v4322
  %4327 = vrot.lane.b32.xlu0 %v4304, 123
  %v4328 = vpop.permute.xlu0 %4327
  %4329 = vrot.lane.b32.xlu0 %v4305, 123
  %v4330 = vpop.permute.xlu0 %4329
  %4333 = vst.msk [vmem:[#allocation5 + $0x30] sm:$0xff] %vm4306, %v4328
  %4334 = vst.msk [vmem:[#allocation5 + $0x38] sm:$0xff] %vm4306, %v4330
  %4335 = vrot.lane.b32.xlu0 %v4304, 122
  %v4336 = vpop.permute.xlu0 %4335
  %4337 = vrot.lane.b32.xlu0 %v4305, 122
  %v4338 = vpop.permute.xlu0 %4337
  %4341 = vst.msk [vmem:[#allocation5 + $0x40] sm:$0xff] %vm4306, %v4336
  %4342 = vst.msk [vmem:[#allocation5 + $0x48] sm:$0xff] %vm4306, %v4338
  %4343 = vrot.lane.b32.xlu0 %v4304, 121
  %v4344 = vpop.permute.xlu0 %4343
  %4345 = vrot.lane.b32.xlu0 %v4305, 121
  %v4346 = vpop.permute.xlu0 %4345
  %4349 = vst.msk [vmem:[#allocation5 + $0x50] sm:$0xff] %vm4306, %v4344
  %4350 = vst.msk [vmem:[#allocation5 + $0x58] sm:$0xff] %vm4306, %v4346
  %4351 = vrot.lane.b32.xlu0 %v4304, 118
  %v4352 = vpop.permute.xlu0 %4351
  %4353 = vrot.lane.b32.xlu0 %v4305, 118
  %v4354 = vpop.permute.xlu0 %4353
  %4357 = vst.msk [vmem:[#allocation5 + $0x60] sm:$0xff] %vm4306, %v4352
  %4358 = vst.msk [vmem:[#allocation5 + $0x68] sm:$0xff] %vm4306, %v4354
  %4359 = vrot.lane.b32.xlu0 %v4304, 117
  %v4360 = vpop.permute.xlu0 %4359
  %4361 = vrot.lane.b32.xlu0 %v4305, 117
  %v4362 = vpop.permute.xlu0 %4361
  %4365 = vst.msk [vmem:[#allocation5 + $0x70] sm:$0xff] %vm4306, %v4360
  %4366 = vst.msk [vmem:[#allocation5 + $0x78] sm:$0xff] %vm4306, %v4362
  %4367 = vrot.lane.b32.xlu0 %v4304, 116
  %v4368 = vpop.permute.xlu0 %4367
  %4369 = vrot.lane.b32.xlu0 %v4305, 116
  %v4370 = vpop.permute.xlu0 %4369
  %4373 = vst.msk [vmem:[#allocation5 + $0x80] sm:$0xff] %vm4306, %v4368
  %4374 = vst.msk [vmem:[#allocation5 + $0x88] sm:$0xff] %vm4306, %v4370
  %v4375 = vld [vmem:[#allocation5] sm:$0xff]
  %v4376 = vld [vmem:[#allocation5 + $0x8] sm:$0xff]
  %v4377 = vld [vmem:[#allocation5 + $0x10] sm:$0xff]
  %v4378 = vld [vmem:[#allocation5 + $0x18] sm:$0xff]
  %v4379 = vld [vmem:[#allocation5 + $0x20] sm:$0xff]
  %v4380 = vld [vmem:[#allocation5 + $0x28] sm:$0xff]
  %v4381 = vld [vmem:[#allocation5 + $0x30] sm:$0xff]
  %v4382 = vld [vmem:[#allocation5 + $0x38] sm:$0xff]
  %v4383 = vld [vmem:[#allocation5 + $0x40] sm:$0xff]
  %v4384 = vld [vmem:[#allocation5 + $0x48] sm:$0xff]
  %v4385 = vld [vmem:[#allocation5 + $0x50] sm:$0xff]
  %v4386 = vld [vmem:[#allocation5 + $0x58] sm:$0xff]
  %v4387 = vld [vmem:[#allocation5 + $0x60] sm:$0xff]
  %v4388 = vld [vmem:[#allocation5 + $0x68] sm:$0xff]
  %v4389 = vld [vmem:[#allocation5 + $0x70] sm:$0xff]
  %v4390 = vld [vmem:[#allocation5 + $0x78] sm:$0xff]
  %v4391 = vld [vmem:[#allocation5 + $0x80] sm:$0xff]
  %v4392 = vld [vmem:[#allocation5 + $0x88] sm:$0xff]
  %v4393 = vld [vmem:[%s14] sm:$0xf]
  %v4394 = vld [vmem:[%s14 + $0x4] sm:$0xf]
  %v4395 = vld [vmem:[%s14 + $0x8] sm:$0xf]
  %v4396 = vld [vmem:[%s14 + $0xc] sm:$0x1]
  %v4401 = vunpack.c.l.b16 %v4393
  %v4402 = vunpack.c.l.b16 %v4394
  %v4403 = vunpack.c.l.b16 %v4395
  %v4404 = vunpack.c.l.b16 %v4396
  %v4405 = vpack.c.b16 %v4402, %v4401
  %v4406 = vpack.c.b16 %v4404, %v4403
  %v4409 = vsel %vm4306, %v4375, 0
  %v4412 = vsel %vm4306, %v4376, 0
  %v4415 = vsel %vm4306, %v4377, 0
  %v4418 = vsel %vm4306, %v4378, 0
  %v4421 = vsel %vm4306, %v4379, 0
  %v4424 = vsel %vm4306, %v4380, 0
  %v4427 = vsel %vm4306, %v4381, 0
  %v4430 = vsel %vm4306, %v4382, 0
  %v4433 = vsel %vm4306, %v4383, 0
  %v4436 = vsel %vm4306, %v4384, 0
  %v4439 = vsel %vm4306, %v4385, 0
  %v4442 = vsel %vm4306, %v4386, 0
  %v4445 = vsel %vm4306, %v4387, 0
  %v4448 = vsel %vm4306, %v4388, 0
  %v4451 = vsel %vm4306, %v4389, 0
  %v4454 = vsel %vm4306, %v4390, 0
  %v4457 = vsel %vm4306, %v4391, 0
  %v4460 = vsel %vm4306, %v4392, 0
  %v4463 = vsel %vm4003, %v4406, 0
  %4465 = vmatprep.subr.bf16.mxu0 0
  %4466 = vmatpush1.bf16.msra.mxu0 %v4405
  %4467 = vmatprep.subr.bf16.mxu0 0
  %4468 = vmatpush1.bf16.msra.mxu0 %v4463
  %4469 = vmatprep.subr.bf16.mxu0 0
  %4470 = vmatpush1.bf16.msra.mxu0 0
  %4471 = vmatprep.subr.bf16.mxu0 0
  %4472 = vmatpush1.bf16.msra.mxu0 0
  %4473 = vmatprep.subr.bf16.mxu0 0
  %4474 = vmatpush1.bf16.msra.mxu0 0
  %4475 = vmatprep.subr.bf16.mxu0 0
  %4476 = vmatpush1.bf16.msra.mxu0 0
  %4477 = vmatprep.subr.bf16.mxu0 0
  %4478 = vmatpush1.bf16.msra.mxu0 0
  %4479 = vmatprep.subr.bf16.mxu0 0
  %4480 = vmatpush1.bf16.msra.mxu0 0
  %4481 = vmatprep.subr.bf16.mxu0 0
  %4482 = vmatpush1.bf16.msra.mxu0 0
  %4483 = vmatprep.subr.bf16.mxu0 0
  %4484 = vmatpush1.bf16.msra.mxu0 0
  %4485 = vmatprep.subr.bf16.mxu0 0
  %4486 = vmatpush1.bf16.msra.mxu0 0
  %4487 = vmatprep.subr.bf16.mxu0 0
  %4488 = vmatpush1.bf16.msra.mxu0 0
  %4489 = vmatprep.subr.bf16.mxu0 0
  %4490 = vmatpush1.bf16.msra.mxu0 0
  %4491 = vmatprep.subr.bf16.mxu0 0
  %4492 = vmatpush1.bf16.msra.mxu0 0
  %4493 = vmatprep.subr.bf16.mxu0 0
  %4494 = vmatpush1.bf16.msra.mxu0 0
  %4495 = vmatprep.subr.bf16.mxu0 0
  %4496 = vmatpush1.bf16.msra.mxu0 0
  %4497 = vmatprep.mubr.bf16.mxu0 0
  %4498 = vmatmul.mubr.bf16.gmra.mrb[0].mxu0 %v4409
  %v4499 = vpop.f32.mrb[0].mxu0
  %v4500 = vadd.f32 0.0, %v4499
  %v4501 = vpop.f32.mrb[0].mxu0
  %v4502 = vpop.f32.mrb[0].mxu0
  %v4503 = vadd.f32 0.0, %v4502
  %v4504 = vpop.f32.mrb[0].mxu0
  %4505 = vmatprep.mubr.bf16.mxu0 0
  %4506 = vmatmul.mubr.bf16.gmra.mrb[0].mxu0 %v4412
  %v4507 = vpop.f32.mrb[0].mxu0
  %v4508 = vadd.f32 0.0, %v4507
  %v4509 = vpop.f32.mrb[0].mxu0
  %v4510 = vpop.f32.mrb[0].mxu0
  %v4511 = vadd.f32 0.0, %v4510
  %v4512 = vpop.f32.mrb[0].mxu0
  %4513 = vmatprep.mubr.bf16.mxu0 0
  %4514 = vmatmul.mubr.bf16.gmra.mrb[0].mxu0 %v4415
  %v4515 = vpop.f32.mrb[0].mxu0
  %v4516 = vadd.f32 0.0, %v4515
  %v4517 = vpop.f32.mrb[0].mxu0
  %v4518 = vpop.f32.mrb[0].mxu0
  %v4519 = vadd.f32 0.0, %v4518
  %v4520 = vpop.f32.mrb[0].mxu0
  %4521 = vmatprep.mubr.bf16.mxu0 0
  %4522 = vmatmul.mubr.bf16.gmra.mrb[0].mxu0 %v4418
  %v4523 = vpop.f32.mrb[0].mxu0
  %v4524 = vadd.f32 0.0, %v4523
  %v4525 = vpop.f32.mrb[0].mxu0
  %v4526 = vpop.f32.mrb[0].mxu0
  %v4527 = vadd.f32 0.0, %v4526
  %v4528 = vpop.f32.mrb[0].mxu0
  %4529 = vmatprep.mubr.bf16.mxu0 0
  %4530 = vmatmul.mubr.bf16.gmra.mrb[0].mxu0 %v4421
  %v4531 = vpop.f32.mrb[0].mxu0
  %v4532 = vadd.f32 0.0, %v4531
  %v4533 = vpop.f32.mrb[0].mxu0
  %v4534 = vpop.f32.mrb[0].mxu0
  %v4535 = vadd.f32 0.0, %v4534
  %v4536 = vpop.f32.mrb[0].mxu0
  %4537 = vmatprep.mubr.bf16.mxu0 0
  %4538 = vmatmul.mubr.bf16.gmra.mrb[0].mxu0 %v4424
  %v4539 = vpop.f32.mrb[0].mxu0
  %v4540 = vadd.f32 0.0, %v4539
  %v4541 = vpop.f32.mrb[0].mxu0
  %v4542 = vpop.f32.mrb[0].mxu0
  %v4543 = vadd.f32 0.0, %v4542
  %v4544 = vpop.f32.mrb[0].mxu0
  %4545 = vmatprep.mubr.bf16.mxu0 0
  %4546 = vmatmul.mubr.bf16.gmra.mrb[0].mxu0 %v4427
  %v4547 = vpop.f32.mrb[0].mxu0
  %v4548 = vadd.f32 0.0, %v4547
  %v4549 = vpop.f32.mrb[0].mxu0
  %v4550 = vpop.f32.mrb[0].mxu0
  %v4551 = vadd.f32 0.0, %v4550
  %v4552 = vpop.f32.mrb[0].mxu0
  %4553 = vmatprep.mubr.bf16.mxu0 0
  %4554 = vmatmul.mubr.bf16.gmra.mrb[0].mxu0 %v4430
  %v4555 = vpop.f32.mrb[0].mxu0
  %v4556 = vadd.f32 0.0, %v4555
  %v4557 = vpop.f32.mrb[0].mxu0
  %v4558 = vpop.f32.mrb[0].mxu0
  %v4559 = vadd.f32 0.0, %v4558
  %v4560 = vpop.f32.mrb[0].mxu0
  %4561 = vmatprep.mubr.bf16.mxu0 0
  %4562 = vmatmul.mubr.bf16.gmra.mrb[0].mxu0 %v4433
  %v4563 = vpop.f32.mrb[0].mxu0
  %v4564 = vadd.f32 0.0, %v4563
  %v4565 = vpop.f32.mrb[0].mxu0
  %v4566 = vpop.f32.mrb[0].mxu0
  %v4567 = vadd.f32 0.0, %v4566
  %v4568 = vpop.f32.mrb[0].mxu0
  %4569 = vmatprep.mubr.bf16.mxu0 0
  %4570 = vmatmul.mubr.bf16.gmra.mrb[0].mxu0 %v4436
  %v4571 = vpop.f32.mrb[0].mxu0
  %v4572 = vadd.f32 0.0, %v4571
  %v4573 = vpop.f32.mrb[0].mxu0
  %v4574 = vpop.f32.mrb[0].mxu0
  %v4575 = vadd.f32 0.0, %v4574
  %v4576 = vpop.f32.mrb[0].mxu0
  %4577 = vmatprep.mubr.bf16.mxu0 0
  %4578 = vmatmul.mubr.bf16.gmra.mrb[0].mxu0 %v4439
  %v4579 = vpop.f32.mrb[0].mxu0
  %v4580 = vadd.f32 0.0, %v4579
  %v4581 = vpop.f32.mrb[0].mxu0
  %v4582 = vpop.f32.mrb[0].mxu0
  %v4583 = vadd.f32 0.0, %v4582
  %v4584 = vpop.f32.mrb[0].mxu0
  %4585 = vmatprep.mubr.bf16.mxu0 0
  %4586 = vmatmul.mubr.bf16.gmra.mrb[0].mxu0 %v4442
  %v4587 = vpop.f32.mrb[0].mxu0
  %v4588 = vadd.f32 0.0, %v4587
  %v4589 = vpop.f32.mrb[0].mxu0
  %v4590 = vpop.f32.mrb[0].mxu0
  %v4591 = vadd.f32 0.0, %v4590
  %v4592 = vpop.f32.mrb[0].mxu0
  %4593 = vmatprep.mubr.bf16.mxu0 0
  %4594 = vmatmul.mubr.bf16.gmra.mrb[0].mxu0 %v4445
  %v4595 = vpop.f32.mrb[0].mxu0
  %v4596 = vadd.f32 0.0, %v4595
  %v4597 = vpop.f32.mrb[0].mxu0
  %v4598 = vpop.f32.mrb[0].mxu0
  %v4599 = vadd.f32 0.0, %v4598
  %v4600 = vpop.f32.mrb[0].mxu0
  %4601 = vmatprep.mubr.bf16.mxu0 0
  %4602 = vmatmul.mubr.bf16.gmra.mrb[0].mxu0 %v4448
  %v4603 = vpop.f32.mrb[0].mxu0
  %v4604 = vadd.f32 0.0, %v4603
  %v4605 = vpop.f32.mrb[0].mxu0
  %v4606 = vpop.f32.mrb[0].mxu0
  %v4607 = vadd.f32 0.0, %v4606
  %v4608 = vpop.f32.mrb[0].mxu0
  %4609 = vmatprep.mubr.bf16.mxu0 0
  %4610 = vmatmul.mubr.bf16.gmra.mrb[0].mxu0 %v4451
  %v4611 = vpop.f32.mrb[0].mxu0
  %v4612 = vadd.f32 0.0, %v4611
  %v4613 = vpop.f32.mrb[0].mxu0
  %v4614 = vpop.f32.mrb[0].mxu0
  %v4615 = vadd.f32 0.0, %v4614
  %v4616 = vpop.f32.mrb[0].mxu0
  %4617 = vmatprep.mubr.bf16.mxu0 0
  %4618 = vmatmul.mubr.bf16.gmra.mrb[0].mxu0 %v4454
  %v4619 = vpop.f32.mrb[0].mxu0
  %v4620 = vadd.f32 0.0, %v4619
  %v4621 = vpop.f32.mrb[0].mxu0
  %v4622 = vpop.f32.mrb[0].mxu0
  %v4623 = vadd.f32 0.0, %v4622
  %v4624 = vpop.f32.mrb[0].mxu0
  %4625 = vmatprep.mubr.bf16.mxu0 0
  %4626 = vmatmul.mubr.bf16.gmra.mrb[0].mxu0 %v4457
  %v4627 = vpop.f32.mrb[0].mxu0
  %v4628 = vadd.f32 0.0, %v4627
  %v4629 = vpop.f32.mrb[0].mxu0
  %v4630 = vpop.f32.mrb[0].mxu0
  %v4631 = vadd.f32 0.0, %v4630
  %v4632 = vpop.f32.mrb[0].mxu0
  %4633 = vmatprep.mubr.bf16.mxu0 0
  %4634 = vmatmul.mubr.bf16.gmra.mrb[0].mxu0 %v4460
  %v4635 = vpop.f32.mrb[0].mxu0
  %v4636 = vadd.f32 0.0, %v4635
  %v4637 = vpop.f32.mrb[0].mxu0
  %v4638 = vpop.f32.mrb[0].mxu0
  %v4639 = vadd.f32 0.0, %v4638
  %v4640 = vpop.f32.mrb[0].mxu0
  %4641 = vdwg.mxu0
  %v4642 = vpack.c.bf16 %v4503, %v4500
  %v4643 = vpack.c.bf16 %v4511, %v4508
  %v4644 = vpack.c.bf16 %v4519, %v4516
  %v4645 = vpack.c.bf16 %v4527, %v4524
  %v4646 = vpack.c.bf16 %v4535, %v4532
  %v4647 = vpack.c.bf16 %v4543, %v4540
  %v4648 = vpack.c.bf16 %v4551, %v4548
  %v4649 = vpack.c.bf16 %v4559, %v4556
  %v4650 = vpack.c.bf16 %v4567, %v4564
  %v4651 = vpack.c.bf16 %v4575, %v4572
  %v4652 = vpack.c.bf16 %v4583, %v4580
  %v4653 = vpack.c.bf16 %v4591, %v4588
  %v4654 = vpack.c.bf16 %v4599, %v4596
  %v4655 = vpack.c.bf16 %v4607, %v4604
  %v4656 = vpack.c.bf16 %v4615, %v4612
  %v4657 = vpack.c.bf16 %v4623, %v4620
  %v4658 = vpack.c.bf16 %v4631, %v4628
  %v4659 = vpack.c.bf16 %v4639, %v4636
  %v4660 = vld [vmem:[%s12] sm:$0xff]
  %v4661 = vld [vmem:[%s12 + $0x8] sm:$0xf]
  %v4662 = vld [vmem:[%s12 + $0xc] sm:$0x11]
  %v4663 = vld [vmem:[%s12 + $0x14] sm:$0x1]
  %v4664 = vld [vmem:[%s13] sm:$0xff]
  %v4665 = vld [vmem:[%s13 + $0x8] sm:$0x3]
  %4667 = vset.pattern.permute.xlu0 0
  %4668 = vperm.xlu0 %4667, %v4664
  %v4669 = vpop.permute.xlu0 %4668
  %4672 = vset.pattern.permute.xlu0 0
  %4673 = vperm.xlu0 %4672, %v4665
  %v4674 = vpop.permute.xlu0 %4673
  %v4680 = vunpack.c.l.b16 %v4660
  %v4681 = vunpack.c.h.b16 %v4660
  %v4682 = vunpack.c.l.b16 %v4661
  %v4683 = vunpack.c.l.b16 %v4662
  %v4684 = vunpack.c.h.b16 %v4662
  %v4685 = vunpack.c.l.b16 %v4663
  %v4686 = vpack.c.b16 %v4683, %v4680
  %v4687 = vpack.c.b16 %v4684, %v4681
  %v4688 = vpack.c.b16 %v4685, %v4682
  %vm4691 = vcmask 261120
  %v4693 = vsel %vm4691, %v4688, 0
  %4695 = vmatprep.subr.bf16.mxu0 0
  %4696 = vmatpush1.bf16.msra.mxu0 %v4642
  %4697 = vmatprep.subr.bf16.mxu0 0
  %4698 = vmatpush1.bf16.msra.mxu0 %v4643
  %4699 = vmatprep.subr.bf16.mxu0 0
  %4700 = vmatpush1.bf16.msra.mxu0 %v4644
  %4701 = vmatprep.subr.bf16.mxu0 0
  %4702 = vmatpush1.bf16.msra.mxu0 %v4645
  %4703 = vmatprep.subr.bf16.mxu0 0
  %4704 = vmatpush1.bf16.msra.mxu0 %v4646
  %4705 = vmatprep.subr.bf16.mxu0 0
  %4706 = vmatpush1.bf16.msra.mxu0 %v4647
  %4707 = vmatprep.subr.bf16.mxu0 0
  %4708 = vmatpush1.bf16.msra.mxu0 %v4648
  %4709 = vmatprep.subr.bf16.mxu0 0
  %4710 = vmatpush1.bf16.msra.mxu0 %v4649
  %4711 = vmatprep.subr.bf16.mxu0 0
  %4712 = vmatpush1.bf16.msra.mxu0 %v4650
  %4713 = vmatprep.subr.bf16.mxu0 0
  %4714 = vmatpush1.bf16.msra.mxu0 %v4651
  %4715 = vmatprep.subr.bf16.mxu0 0
  %4716 = vmatpush1.bf16.msra.mxu0 %v4652
  %4717 = vmatprep.subr.bf16.mxu0 0
  %4718 = vmatpush1.bf16.msra.mxu0 %v4653
  %4719 = vmatprep.subr.bf16.mxu0 0
  %4720 = vmatpush1.bf16.msra.mxu0 %v4654
  %4721 = vmatprep.subr.bf16.mxu0 0
  %4722 = vmatpush1.bf16.msra.mxu0 %v4655
  %4723 = vmatprep.subr.bf16.mxu0 0
  %4724 = vmatpush1.bf16.msra.mxu0 %v4656
  %4725 = vmatprep.subr.bf16.mxu0 0
  %4726 = vmatpush1.bf16.msra.mxu0 %v4657
  %4727 = vmatprep.mubr.bf16.mxu0 %v4687
  %4728 = vmatmul.mubr.bf16.gmra.mrb[0].mxu0 %v4686
  %v4729 = vpop.f32.mrb[0].mxu0
  %v4730 = vadd.f32 %v4669, %v4729
  %v4731 = vpop.f32.mrb[0].mxu0
  %v4732 = vpop.f32.mrb[0].mxu0
  %v4733 = vadd.f32 %v4674, %v4732
  %v4734 = vpop.f32.mrb[0].mxu0
  %4735 = vdwg.mxu0
  %4736 = vmatprep.subr.bf16.mxu0 0
  %4737 = vmatpush1.bf16.msra.mxu0 %v4658
  %4738 = vmatprep.subr.bf16.mxu0 0
  %4739 = vmatpush1.bf16.msra.mxu0 %v4659
  %4740 = vmatprep.subr.bf16.mxu0 0
  %4741 = vmatpush1.bf16.msra.mxu0 0
  %4742 = vmatprep.subr.bf16.mxu0 0
  %4743 = vmatpush1.bf16.msra.mxu0 0
  %4744 = vmatprep.subr.bf16.mxu0 0
  %4745 = vmatpush1.bf16.msra.mxu0 0
  %4746 = vmatprep.subr.bf16.mxu0 0
  %4747 = vmatpush1.bf16.msra.mxu0 0
  %4748 = vmatprep.subr.bf16.mxu0 0
  %4749 = vmatpush1.bf16.msra.mxu0 0
  %4750 = vmatprep.subr.bf16.mxu0 0
  %4751 = vmatpush1.bf16.msra.mxu0 0
  %4752 = vmatprep.subr.bf16.mxu0 0
  %4753 = vmatpush1.bf16.msra.mxu0 0
  %4754 = vmatprep.subr.bf16.mxu0 0
  %4755 = vmatpush1.bf16.msra.mxu0 0
  %4756 = vmatprep.subr.bf16.mxu0 0
  %4757 = vmatpush1.bf16.msra.mxu0 0
  %4758 = vmatprep.subr.bf16.mxu0 0
  %4759 = vmatpush1.bf16.msra.mxu0 0
  %4760 = vmatprep.subr.bf16.mxu0 0
  %4761 = vmatpush1.bf16.msra.mxu0 0
  %4762 = vmatprep.subr.bf16.mxu0 0
  %4763 = vmatpush1.bf16.msra.mxu0 0
  %4764 = vmatprep.subr.bf16.mxu0 0
  %4765 = vmatpush1.bf16.msra.mxu0 0
  %4766 = vmatprep.subr.bf16.mxu0 0
  %4767 = vmatpush1.bf16.msra.mxu0 0
  %4768 = vmatprep.mubr.bf16.mxu0 0
  %4769 = vmatmul.mubr.bf16.gmra.mrb[0].mxu0 %v4693
  %v4770 = vpop.f32.mrb[0].mxu0
  %v4771 = vadd.f32 %v4730, %v4770
  %v4772 = vpop.f32.mrb[0].mxu0
  %v4773 = vpop.f32.mrb[0].mxu0
  %v4774 = vadd.f32 %v4733, %v4773
  %v4775 = vpop.f32.mrb[0].mxu0
  %4776 = vdwg.mxu0
  %vm4777 = vcmask 15360
  %4778 = vst.msk [vmem:[%s15] sm:$0xff] %vm4777, %v4771
  %vm4779 = vcmask 9216
  %4780 = vst.msk [vmem:[%s15 + $0x8] sm:$0x3] %vm4779, %v4774
  // Predicated region
  $region62: #{_lambda_.1} parent=0 // pred_check
    _
  $region63: #{_lambda_.1} parent=0 // pred_check_branch
    %4782 = sbr.rel (0) target = $region65
  $region64: #{_lambda_.1} parent=0 // pred_region
    _
  $region65: #{_lambda_.1} parent=0 // pred_fallthru
    _
  // Predicated region
  $region66: #{_lambda_.1} parent=0 // pred_check
    _
  $region67: #{_lambda_.1} parent=0 // pred_check_branch
    %4784 = sbr.rel (0) target = $region69
  $region68: #{_lambda_.1} parent=0 // pred_region
    _
  $region69: #{_lambda_.1} parent=0 // pred_fallthru
    _

</llo_original>
